<compile_context>
chip_gen: v7x
topology: tpu7x:2x2x1
jax: 0.10.0
libtpu: 0.0.40
codegen_flags: <defaults>
</compile_context>

<pallas_src>
import functools

import jax
import jax.numpy as jnp
from jax import lax
from jax.experimental import pallas as pl
from jax.experimental.pallas import tpu as pltpu

# ------------------------- config -------------------------
VOCAB = 64
VOCAB_PAD = 128            # lane-dense padded vocab for the LM-logit output
NSP_PAD = 128              # lane-dense padded width for the NSP-logit output
HIDDEN = 32
LAYERS = 2
HEADS = 4
HEAD_DIM = HIDDEN // HEADS
INTERMEDIATE = 64
MAX_POS = 32
TYPE_VOCAB = 2
LN_EPS = 1e-12
NEG = -1.0e9               # fill for padded logit columns; drops out of softmax / CE exactly

_VMEM = pl.BlockSpec(memory_space=pltpu.MemorySpace.VMEM)
_SMEM = pl.BlockSpec(memory_space=pltpu.MemorySpace.SMEM)

_PARAM_ORDER = (
    "emb_ln_g", "emb_ln_b",
    "wq", "wk", "wv", "bq", "bk", "bv",
    "wo", "ao_b", "attn_ln_g", "attn_ln_b",
    "ff_w1", "ff_b1", "ff_w2", "ff_b2", "ffn_ln_g", "ffn_ln_b",
    "pool_w", "pool_b", "mlm_w", "mlm_b", "mlm_ln_g", "mlm_ln_b",
    "wemb_pad", "dec_b_pad", "nsp_w_pad", "nsp_b_pad",
)


# ------------------------- the fused Pallas kernel -------------------------
def _bert_fused_kernel(
    # data inputs
    x_ref, mask2_ref, lm_lab_ref, nsp_lab_ref,
    # parameters (see _PARAM_ORDER)
    emb_g, emb_b,
    wq, wk, wv, bq, bk, bv,
    wo, ao_b, aln_g, aln_b,
    ff1_w, ff1_b, ff2_w, ff2_b, fln_g, fln_b,
    pool_w, pool_b, mlm_w, mlm_b, mln_g, mln_b,
    wemb, dec_b, nsp_w, nsp_b,
    # outputs
    lm_out, nsp_out, loss_out,
    *, batch, seq,
):
    B, S = batch, seq
    BS = B * S
    scale = 1.0 / (HEAD_DIM ** 0.5)

    def ln(x, g, b):
        mu = jnp.mean(x, axis=-1, keepdims=True)
        xc = x - mu
        var = jnp.mean(xc * xc, axis=-1, keepdims=True)
        return xc * lax.rsqrt(var + LN_EPS) * g + b

    def bf(x):  # single explicit bf16 cast point (weights are already bf16)
        return x.astype(jnp.bfloat16)

    def mm(a_bf, w_bf):  # bf16 MXU operands, f32 accumulate
        return jnp.dot(a_bf, w_bf, preferred_element_type=jnp.float32)

    def mm_tb(a_bf, w_bf):  # a @ w^T without materializing a transpose
        return lax.dot_general(a_bf, w_bf,
                               dimension_numbers=(((1,), (1,)), ((), ())),
                               preferred_element_type=jnp.float32)

    def gelu(x):
        # TODO(synk): tanh-approximate GELU (EUP-friendly, per perf review); HF BERT uses erf GELU.
        return 0.5 * x * (1.0 + jnp.tanh(0.7978845608028654 * (x + 0.044715 * x * x * x)))

    def softmax_rows(s):
        s = s - jnp.max(s, axis=-1, keepdims=True)
        p = jnp.exp(s)
        return p / jnp.sum(p, axis=-1, keepdims=True)   # exact division (matches reference)

    def ce_sums(logits, labels):
        """CrossEntropy(ignore_index=-1): returns (sum_loss, num_valid)."""
        m = jnp.max(logits, axis=-1, keepdims=True)
        lse = jnp.log(jnp.sum(jnp.exp(logits - m), axis=-1, keepdims=True)) + m
        col = lax.broadcasted_iota(jnp.int32, logits.shape, 1)
        picked = jnp.sum(jnp.where(col == labels, logits, 0.0), axis=-1, keepdims=True)
        valid = labels != -1
        per_row = jnp.where(valid, lse - picked, 0.0)
        return jnp.sum(per_row), jnp.sum(valid.astype(jnp.float32))

    # ---- embeddings LayerNorm (gathered embedding sum is passed in) ----
    h = ln(x_ref[...], emb_g[...], emb_b[...])              # (BS, H) f32
    h_bf = bf(h)                                            # cast once, reused by all matmuls
    mask2 = mask2_ref[...]                                  # (BS, BS) padding + block-diag mask

    # ---- encoder layers (fully unrolled, everything VMEM / register resident) ----
    for l in range(LAYERS):
        attn = jnp.zeros((BS, HIDDEN), jnp.float32)
        for hd in range(HEADS):
            # per-head projections straight from per-head weights: no activation lane slicing
            q = mm(h_bf, wq[l, hd]) + bq[l, hd]             # (BS, Dh) f32
            k = mm(h_bf, wk[l, hd]) + bk[l, hd]
            v = mm(h_bf, wv[l, hd]) + bv[l, hd]
            s = mm_tb(bf(q), bf(k)) * scale + mask2         # (BS, BS): all batches at once
            p = softmax_rows(s)
            ctx = mm(bf(p), bf(v))                          # (BS, Dh)
            attn = attn + mm(bf(ctx), wo[l, hd])            # head-merge fused into out-projection
        attn = attn + ao_b[l]
        h = ln(attn + h, aln_g[l], aln_b[l])                # residual + LN
        h_bf = bf(h)
        ff = gelu(mm(h_bf, ff1_w[l]) + ff1_b[l])            # FFN up + gelu
        ff = mm(bf(ff), ff2_w[l]) + ff2_b[l]                # FFN down
        h = ln(ff + h, fln_g[l], fln_b[l])                  # residual + LN
        h_bf = bf(h)

    # ---- pooler + NSP head (CLS rows picked via static sublane slices) ----
    cls = jnp.concatenate([h[b * S:b * S + 1, :] for b in range(B)], axis=0)   # (B, H)
    pooled = jnp.tanh(mm(bf(cls), pool_w[...]) + pool_b[...])
    nsp_scores = mm(bf(pooled), nsp_w[...]) + nsp_b[...]    # (B, NSP_PAD) lane-dense
    nsp_out[...] = nsp_scores

    # ---- MLM head: transform -> LN -> tied decoder (padded word_emb, untransposed) ----
    t = gelu(mm(h_bf, mlm_w[...]) + mlm_b[...])
    t = ln(t, mln_g[...], mln_b[...])
    logits = mm_tb(bf(t), wemb[...]) + dec_b[...]           # (BS, VOCAB_PAD) lane-dense
    lm_out[...] = logits

    # ---- fused CrossEntropy reductions (ignore_index=-1), scalar writes last ----
    lm_sum, lm_cnt = ce_sums(logits, lm_lab_ref[...])
    nsp_sum, nsp_cnt = ce_sums(nsp_scores, nsp_lab_ref[...])
    loss_out[0] = lm_sum
    loss_out[1] = lm_cnt
    loss_out[2] = nsp_sum
    loss_out[3] = nsp_cnt


def _fused_forward(params, x_emb, mask2, lm_labels, nsp_labels, B, S):
    BS = B * S
    kernel = functools.partial(_bert_fused_kernel, batch=B, seq=S)
    n_in = 4 + len(_PARAM_ORDER)
    # TODO(synk): at production sizes, grid over layers ("arbitrary") / batch ("parallel") with
    # streamed bf16 weight BlockSpecs to use both v7x TensorCores and stay under VMEM limits;
    # at this toy size a single ungridded call avoids all per-step overhead.
    return pl.pallas_call(
        kernel,
        out_shape=(
            jax.ShapeDtypeStruct((BS, VOCAB_PAD), jnp.float32),   # LM logits (lane-dense)
            jax.ShapeDtypeStruct((B, NSP_PAD), jnp.float32),      # NSP logits (lane-dense)
            jax.ShapeDtypeStruct((4,), jnp.float32),              # [lm_sum, lm_cnt, nsp_sum, nsp_cnt]
        ),
        in_specs=[_VMEM] * n_in,
        out_specs=(_VMEM, _VMEM, _SMEM),
    )(x_emb, mask2, lm_labels, nsp_labels, *[params[k] for k in _PARAM_ORDER])


# ------------------------- parameters (pre-packed / pre-cast for the fused kernel) -------------------------
def init_params(key):
    keys = iter(jax.random.split(key, 64))

    def normal(shape, std=0.02):
        return std * jax.random.normal(next(keys), shape, dtype=jnp.float32)

    ones = lambda s: jnp.ones(s, jnp.float32)
    zeros = lambda s: jnp.zeros(s, jnp.float32)
    bf = lambda x: x.astype(jnp.bfloat16)

    word_emb = normal((VOCAB, HIDDEN))
    nsp_w = normal((HIDDEN, 2))

    # tied MLM decoder + NSP head, padded to 128 lanes (pad cols forced to NEG via the bias)
    wemb_pad = jnp.zeros((VOCAB_PAD, HIDDEN), jnp.float32).at[:VOCAB].set(word_emb)
    dec_b_pad = jnp.full((1, VOCAB_PAD), NEG, jnp.float32).at[:, :VOCAB].set(0.0)
    nsp_w_pad = jnp.zeros((HIDDEN, NSP_PAD), jnp.float32).at[:, :2].set(nsp_w)
    nsp_b_pad = jnp.full((1, NSP_PAD), NEG, jnp.float32).at[:, :2].set(0.0)

    return {
        # f32 embedding tables (wrapper-side gathers)
        "word_emb": word_emb,
        "pos_emb": normal((MAX_POS, HIDDEN)),
        "type_emb": normal((TYPE_VOCAB, HIDDEN)),
        "emb_ln_g": ones((1, HIDDEN)), "emb_ln_b": zeros((1, HIDDEN)),
        # attention weights pre-split per head (head on its own leading axis) and pre-cast to bf16
        "wq": bf(normal((LAYERS, HEADS, HIDDEN, HEAD_DIM))),
        "wk": bf(normal((LAYERS, HEADS, HIDDEN, HEAD_DIM))),
        "wv": bf(normal((LAYERS, HEADS, HIDDEN, HEAD_DIM))),
        "bq": zeros((LAYERS, HEADS, 1, HEAD_DIM)),
        "bk": zeros((LAYERS, HEADS, 1, HEAD_DIM)),
        "bv": zeros((LAYERS, HEADS, 1, HEAD_DIM)),
        "wo": bf(normal((LAYERS, HEADS, HEAD_DIM, HIDDEN))),
        "ao_b": zeros((LAYERS, 1, HIDDEN)),
        "attn_ln_g": ones((LAYERS, 1, HIDDEN)), "attn_ln_b": zeros((LAYERS, 1, HIDDEN)),
        "ff_w1": bf(normal((LAYERS, HIDDEN, INTERMEDIATE))), "ff_b1": zeros((LAYERS, 1, INTERMEDIATE)),
        "ff_w2": bf(normal((LAYERS, INTERMEDIATE, HIDDEN))), "ff_b2": zeros((LAYERS, 1, HIDDEN)),
        "ffn_ln_g": ones((LAYERS, 1, HIDDEN)), "ffn_ln_b": zeros((LAYERS, 1, HIDDEN)),
        # heads
        "pool_w": bf(normal((HIDDEN, HIDDEN))), "pool_b": zeros((1, HIDDEN)),
        "mlm_w": bf(normal((HIDDEN, HIDDEN))), "mlm_b": zeros((1, HIDDEN)),
        "mlm_ln_g": ones((1, HIDDEN)), "mlm_ln_b": zeros((1, HIDDEN)),
        "wemb_pad": bf(wemb_pad), "dec_b_pad": dec_b_pad,
        "nsp_w_pad": bf(nsp_w_pad), "nsp_b_pad": nsp_b_pad,
    }


# ------------------------- DialogEncoder-style forward -------------------------
def dialog_encoder_forward(params, input_ids, sep_indices=None, sep_len=None,
                           token_type_ids=None, attention_mask=None,
                           masked_lm_labels=None, next_sentence_label=None,
                           head_mask=None, output_nsp_scores=False,
                           output_lm_scores=False):
    B, S = input_ids.shape
    BS = B * S
    if token_type_ids is None:
        token_type_ids = jnp.zeros_like(input_ids)
    if attention_mask is None:
        attention_mask = jnp.ones_like(input_ids)
    # TODO(synk): sep_indices/sep_len dialog-turn segment embeddings, dropout (model in .train())
    # and head_mask have no clean static Pallas equivalent; standard BERT embeddings are used.

    # Embedding gathers are glue; everything downstream runs in one fused Pallas kernel.
    x = (jnp.take(params["word_emb"], input_ids, axis=0)
         + params["pos_emb"][:S][None, :, :]
         + jnp.take(params["type_emb"], token_type_ids, axis=0)).astype(jnp.float32)
    x = x.reshape(BS, HIDDEN)

    # Combined additive attention mask: per-token padding + cross-batch block-diagonal,
    # so the kernel runs all batches through one (BS, BS) score matrix per head.
    ext = (1.0 - attention_mask.astype(jnp.float32)) * -10000.0      # (B, S)
    ext_flat = ext.reshape(BS)
    bidx = jnp.arange(BS, dtype=jnp.int32) // S
    same_batch = bidx[:, None] == bidx[None, :]
    mask2 = jnp.where(same_batch, ext_flat[None, :], -10000.0)       # (BS, BS)

    if masked_lm_labels is not None:
        lm_lab = masked_lm_labels.reshape(BS, 1).astype(jnp.int32)
    else:
        lm_lab = jnp.full((BS, 1), -1, jnp.int32)
    if next_sentence_label is not None:
        nsp_lab = next_sentence_label.reshape(B, 1).astype(jnp.int32)
    else:
        nsp_lab = jnp.full((B, 1), -1, jnp.int32)

    lm_pad, nsp_pad, sums = _fused_forward(params, x, mask2, lm_lab, nsp_lab, B, S)
    lm_scores = lm_pad[:, :VOCAB].reshape(B, S, VOCAB)
    nsp_scores = nsp_pad[:, :2]

    lm_loss = sums[0] / sums[1] if masked_lm_labels is not None else None
    nsp_loss = sums[2] / sums[3] if next_sentence_label is not None else None
    loss = (lm_loss + nsp_loss) if (lm_loss is not None and nsp_loss is not None) else None

    out = (loss, lm_loss, nsp_loss)
    if output_nsp_scores:
        out = out + (nsp_scores,)
    if output_lm_scores:
        out = out + (lm_scores,)
    return out


# ------------------------- demo -------------------------
if __name__ == "__main__":
    key = jax.random.PRNGKey(0)
    pkey, dkey = jax.random.split(key)
    params = init_params(pkey)

    B, S = 2, 8
    k1, k2, k3, k4 = jax.random.split(dkey, 4)
    input_ids = jax.random.randint(k1, (B, S), 0, VOCAB, dtype=jnp.int32)
    token_type_ids = jax.random.randint(k2, (B, S), 0, TYPE_VOCAB, dtype=jnp.int32)
    attention_mask = jnp.ones((B, S), jnp.int32)
    masked_lm_labels = jnp.where(
        jax.random.uniform(k3, (B, S)) < 0.25,
        jax.random.randint(k4, (B, S), 0, VOCAB, dtype=jnp.int32),
        -1)
    masked_lm_labels = masked_lm_labels.at[0, 0].set(input_ids[0, 0])  # ensure >=1 valid label
    next_sentence_label = jnp.array([0, 1], jnp.int32)

    loss, lm_loss, nsp_loss, nsp_scores, lm_scores = dialog_encoder_forward(
        params, input_ids,
        token_type_ids=token_type_ids,
        attention_mask=attention_mask,
        masked_lm_labels=masked_lm_labels,
        next_sentence_label=next_sentence_label,
        output_nsp_scores=True,
        output_lm_scores=True)

    jax.block_until_ready((loss, lm_loss, nsp_loss, nsp_scores, lm_scores))
    assert lm_scores.shape == (B, S, VOCAB) and nsp_scores.shape == (B, 2)
    assert loss.shape == () and bool(jnp.isfinite(loss))
    print("KERNEL_OK")
</pallas_src>

<mosaic_0001>
module attributes {stable_mosaic.version = 11 : i64} {
  func.func @_bert_fused_kernel(%arg0: memref<16x32xf32, #tpu.memory_space<vmem>>, %arg1: memref<16x16xf32, #tpu.memory_space<vmem>>, %arg2: memref<16x1xi32, #tpu.memory_space<vmem>>, %arg3: memref<2x1xi32, #tpu.memory_space<vmem>>, %arg4: memref<1x32xf32, #tpu.memory_space<vmem>>, %arg5: memref<1x32xf32, #tpu.memory_space<vmem>>, %arg6: memref<2x4x32x8xbf16, #tpu.memory_space<vmem>>, %arg7: memref<2x4x32x8xbf16, #tpu.memory_space<vmem>>, %arg8: memref<2x4x32x8xbf16, #tpu.memory_space<vmem>>, %arg9: memref<2x4x1x8xf32, #tpu.memory_space<vmem>>, %arg10: memref<2x4x1x8xf32, #tpu.memory_space<vmem>>, %arg11: memref<2x4x1x8xf32, #tpu.memory_space<vmem>>, %arg12: memref<2x4x8x32xbf16, #tpu.memory_space<vmem>>, %arg13: memref<2x1x32xf32, #tpu.memory_space<vmem>>, %arg14: memref<2x1x32xf32, #tpu.memory_space<vmem>>, %arg15: memref<2x1x32xf32, #tpu.memory_space<vmem>>, %arg16: memref<2x32x64xbf16, #tpu.memory_space<vmem>>, %arg17: memref<2x1x64xf32, #tpu.memory_space<vmem>>, %arg18: memref<2x64x32xbf16, #tpu.memory_space<vmem>>, %arg19: memref<2x1x32xf32, #tpu.memory_space<vmem>>, %arg20: memref<2x1x32xf32, #tpu.memory_space<vmem>>, %arg21: memref<2x1x32xf32, #tpu.memory_space<vmem>>, %arg22: memref<32x32xbf16, #tpu.memory_space<vmem>>, %arg23: memref<1x32xf32, #tpu.memory_space<vmem>>, %arg24: memref<32x32xbf16, #tpu.memory_space<vmem>>, %arg25: memref<1x32xf32, #tpu.memory_space<vmem>>, %arg26: memref<1x32xf32, #tpu.memory_space<vmem>>, %arg27: memref<1x32xf32, #tpu.memory_space<vmem>>, %arg28: memref<128x32xbf16, #tpu.memory_space<vmem>>, %arg29: memref<1x128xf32, #tpu.memory_space<vmem>>, %arg30: memref<32x128xbf16, #tpu.memory_space<vmem>>, %arg31: memref<1x128xf32, #tpu.memory_space<vmem>>, %arg32: memref<16x128xf32, #tpu.memory_space<vmem>>, %arg33: memref<2x128xf32, #tpu.memory_space<vmem>>, %arg34: memref<4xf32, #tpu.memory_space<smem>>) attributes {dimension_semantics = [], scalar_prefetch = 0 : i64, scratch_operands = 0 : i64, tpu.core_type = #tpu.core_type<tc>} {
    %c0 = arith.constant 0 : index
    %c0_0 = arith.constant 0 : index
    %0 = vector.load %arg0[%c0, %c0_0] : memref<16x32xf32, #tpu.memory_space<vmem>>, vector<16x32xf32>
    %c0_1 = arith.constant 0 : index
    %c0_2 = arith.constant 0 : index
    %1 = vector.load %arg4[%c0_1, %c0_2] : memref<1x32xf32, #tpu.memory_space<vmem>>, vector<1x32xf32>
    %c0_3 = arith.constant 0 : index
    %c0_4 = arith.constant 0 : index
    %2 = vector.load %arg5[%c0_3, %c0_4] : memref<1x32xf32, #tpu.memory_space<vmem>>, vector<1x32xf32>
    %cst = arith.constant dense<0.000000e+00> : vector<16xf32>
    %3 = vector.multi_reduction <add>, %0, %cst [1] : vector<16x32xf32> to vector<16xf32>
    %4 = vector.shape_cast %3 : vector<16xf32> to vector<16x1xf32>
    %cst_5 = arith.constant 3.200000e+01 : f32
    %5 = vector.broadcast %cst_5 : f32 to vector<16x1xf32>
    %6 = arith.divf %4, %5 : vector<16x1xf32>
    %7 = vector.broadcast %6 : vector<16x1xf32> to vector<16x32xf32>
    %8 = arith.subf %0, %7 : vector<16x32xf32>
    %9 = arith.mulf %8, %8 : vector<16x32xf32>
    %cst_6 = arith.constant dense<0.000000e+00> : vector<16xf32>
    %10 = vector.multi_reduction <add>, %9, %cst_6 [1] : vector<16x32xf32> to vector<16xf32>
    %11 = vector.shape_cast %10 : vector<16xf32> to vector<16x1xf32>
    %cst_7 = arith.constant 3.200000e+01 : f32
    %12 = vector.broadcast %cst_7 : f32 to vector<16x1xf32>
    %13 = arith.divf %11, %12 : vector<16x1xf32>
    %cst_8 = arith.constant 9.99999996E-13 : f32
    %14 = vector.broadcast %cst_8 : f32 to vector<16x1xf32>
    %15 = arith.addf %13, %14 : vector<16x1xf32>
    %16 = math.rsqrt %15 : vector<16x1xf32>
    %17 = vector.broadcast %16 : vector<16x1xf32> to vector<16x32xf32>
    %18 = arith.mulf %8, %17 : vector<16x32xf32>
    %19 = vector.broadcast %1 : vector<1x32xf32> to vector<16x32xf32>
    %20 = arith.mulf %18, %19 : vector<16x32xf32>
    %21 = vector.broadcast %2 : vector<1x32xf32> to vector<16x32xf32>
    %22 = arith.addf %20, %21 : vector<16x32xf32>
    %23 = arith.truncf %22 : vector<16x32xf32> to vector<16x32xbf16>
    %c0_9 = arith.constant 0 : index
    %c0_10 = arith.constant 0 : index
    %24 = vector.load %arg1[%c0_9, %c0_10] : memref<16x16xf32, #tpu.memory_space<vmem>>, vector<16x16xf32>
    %cst_11 = arith.constant 0.000000e+00 : f32
    %25 = vector.broadcast %cst_11 : f32 to vector<16x32xf32>
    %c0_12 = arith.constant 0 : index
    %c0_13 = arith.constant 0 : index
    %c0_14 = arith.constant 0 : index
    %c0_15 = arith.constant 0 : index
    %26 = vector.load %arg6[%c0_12, %c0_13, %c0_14, %c0_15] : memref<2x4x32x8xbf16, #tpu.memory_space<vmem>>, vector<1x1x32x8xbf16>
    %27 = vector.shape_cast %26 : vector<1x1x32x8xbf16> to vector<32x8xbf16>
    %cst_16 = arith.constant dense<0.000000e+00> : vector<16x8xf32>
    %28 = tpu.matmul %23, %27, %cst_16 {dimension_numbers = #tpu.dot_dimension_numbers<[1], [0], [0], [1], [0, 0, 1, 1], [], []>} : vector<16x32xbf16>, vector<32x8xbf16>, vector<16x8xf32> -> vector<16x8xf32>
    %c0_17 = arith.constant 0 : index
    %c0_18 = arith.constant 0 : index
    %c0_19 = arith.constant 0 : index
    %c0_20 = arith.constant 0 : index
    %29 = vector.load %arg9[%c0_17, %c0_18, %c0_19, %c0_20] : memref<2x4x1x8xf32, #tpu.memory_space<vmem>>, vector<1x1x1x8xf32>
    %30 = vector.shape_cast %29 : vector<1x1x1x8xf32> to vector<1x8xf32>
    %31 = vector.broadcast %30 : vector<1x8xf32> to vector<16x8xf32>
    %32 = arith.addf %28, %31 : vector<16x8xf32>
    %c0_21 = arith.constant 0 : index
    %c0_22 = arith.constant 0 : index
    %c0_23 = arith.constant 0 : index
    %c0_24 = arith.constant 0 : index
    %33 = vector.load %arg7[%c0_21, %c0_22, %c0_23, %c0_24] : memref<2x4x32x8xbf16, #tpu.memory_space<vmem>>, vector<1x1x32x8xbf16>
    %34 = vector.shape_cast %33 : vector<1x1x32x8xbf16> to vector<32x8xbf16>
    %cst_25 = arith.constant dense<0.000000e+00> : vector<16x8xf32>
    %35 = tpu.matmul %23, %34, %cst_25 {dimension_numbers = #tpu.dot_dimension_numbers<[1], [0], [0], [1], [0, 0, 1, 1], [], []>} : vector<16x32xbf16>, vector<32x8xbf16>, vector<16x8xf32> -> vector<16x8xf32>
    %c0_26 = arith.constant 0 : index
    %c0_27 = arith.constant 0 : index
    %c0_28 = arith.constant 0 : index
    %c0_29 = arith.constant 0 : index
    %36 = vector.load %arg10[%c0_26, %c0_27, %c0_28, %c0_29] : memref<2x4x1x8xf32, #tpu.memory_space<vmem>>, vector<1x1x1x8xf32>
    %37 = vector.shape_cast %36 : vector<1x1x1x8xf32> to vector<1x8xf32>
    %38 = vector.broadcast %37 : vector<1x8xf32> to vector<16x8xf32>
    %39 = arith.addf %35, %38 : vector<16x8xf32>
    %c0_30 = arith.constant 0 : index
    %c0_31 = arith.constant 0 : index
    %c0_32 = arith.constant 0 : index
    %c0_33 = arith.constant 0 : index
    %40 = vector.load %arg8[%c0_30, %c0_31, %c0_32, %c0_33] : memref<2x4x32x8xbf16, #tpu.memory_space<vmem>>, vector<1x1x32x8xbf16>
    %41 = vector.shape_cast %40 : vector<1x1x32x8xbf16> to vector<32x8xbf16>
    %cst_34 = arith.constant dense<0.000000e+00> : vector<16x8xf32>
    %42 = tpu.matmul %23, %41, %cst_34 {dimension_numbers = #tpu.dot_dimension_numbers<[1], [0], [0], [1], [0, 0, 1, 1], [], []>} : vector<16x32xbf16>, vector<32x8xbf16>, vector<16x8xf32> -> vector<16x8xf32>
    %c0_35 = arith.constant 0 : index
    %c0_36 = arith.constant 0 : index
    %c0_37 = arith.constant 0 : index
    %c0_38 = arith.constant 0 : index
    %43 = vector.load %arg11[%c0_35, %c0_36, %c0_37, %c0_38] : memref<2x4x1x8xf32, #tpu.memory_space<vmem>>, vector<1x1x1x8xf32>
    %44 = vector.shape_cast %43 : vector<1x1x1x8xf32> to vector<1x8xf32>
    %45 = vector.broadcast %44 : vector<1x8xf32> to vector<16x8xf32>
    %46 = arith.addf %42, %45 : vector<16x8xf32>
    %47 = arith.truncf %32 : vector<16x8xf32> to vector<16x8xbf16>
    %48 = arith.truncf %39 : vector<16x8xf32> to vector<16x8xbf16>
    %cst_39 = arith.constant dense<0.000000e+00> : vector<16x16xf32>
    %49 = tpu.matmul %47, %48, %cst_39 {dimension_numbers = #tpu.dot_dimension_numbers<[1], [1], [0], [0], [0, 0, 1, 0], [], []>} : vector<16x8xbf16>, vector<16x8xbf16>, vector<16x16xf32> -> vector<16x16xf32>
    %cst_40 = arith.constant 0.353553385 : f32
    %50 = vector.broadcast %cst_40 : f32 to vector<16x16xf32>
    %51 = arith.mulf %49, %50 : vector<16x16xf32>
    %52 = arith.addf %51, %24 : vector<16x16xf32>
    %cst_41 = arith.constant dense<0xFF800000> : vector<16xf32>
    %53 = vector.multi_reduction <maximumf>, %52, %cst_41 [1] : vector<16x16xf32> to vector<16xf32>
    %54 = vector.shape_cast %53 : vector<16xf32> to vector<16x1xf32>
    %55 = vector.broadcast %54 : vector<16x1xf32> to vector<16x16xf32>
    %56 = arith.subf %52, %55 : vector<16x16xf32>
    %57 = math.exp %56 : vector<16x16xf32>
    %cst_42 = arith.constant dense<0.000000e+00> : vector<16xf32>
    %58 = vector.multi_reduction <add>, %57, %cst_42 [1] : vector<16x16xf32> to vector<16xf32>
    %59 = vector.shape_cast %58 : vector<16xf32> to vector<16x1xf32>
    %60 = vector.broadcast %59 : vector<16x1xf32> to vector<16x16xf32>
    %61 = arith.divf %57, %60 : vector<16x16xf32>
    %62 = arith.truncf %61 : vector<16x16xf32> to vector<16x16xbf16>
    %63 = arith.truncf %46 : vector<16x8xf32> to vector<16x8xbf16>
    %cst_43 = arith.constant dense<0.000000e+00> : vector<16x8xf32>
    %64 = tpu.matmul %62, %63, %cst_43 {dimension_numbers = #tpu.dot_dimension_numbers<[1], [0], [0], [1], [0, 0, 1, 1], [], []>} : vector<16x16xbf16>, vector<16x8xbf16>, vector<16x8xf32> -> vector<16x8xf32>
    %65 = arith.truncf %64 : vector<16x8xf32> to vector<16x8xbf16>
    %c0_44 = arith.constant 0 : index
    %c0_45 = arith.constant 0 : index
    %c0_46 = arith.constant 0 : index
    %c0_47 = arith.constant 0 : index
    %66 = vector.load %arg12[%c0_44, %c0_45, %c0_46, %c0_47] : memref<2x4x8x32xbf16, #tpu.memory_space<vmem>>, vector<1x1x8x32xbf16>
    %67 = vector.shape_cast %66 : vector<1x1x8x32xbf16> to vector<8x32xbf16>
    %cst_48 = arith.constant dense<0.000000e+00> : vector<16x32xf32>
    %68 = tpu.matmul %65, %67, %cst_48 {dimension_numbers = #tpu.dot_dimension_numbers<[1], [0], [0], [1], [0, 0, 1, 1], [], []>} : vector<16x8xbf16>, vector<8x32xbf16>, vector<16x32xf32> -> vector<16x32xf32>
    %69 = arith.addf %25, %68 : vector<16x32xf32>
    %c0_49 = arith.constant 0 : index
    %c1 = arith.constant 1 : index
    %c0_50 = arith.constant 0 : index
    %c0_51 = arith.constant 0 : index
    %70 = vector.load %arg6[%c0_49, %c1, %c0_50, %c0_51] : memref<2x4x32x8xbf16, #tpu.memory_space<vmem>>, vector<1x1x32x8xbf16>
    %71 = vector.shape_cast %70 : vector<1x1x32x8xbf16> to vector<32x8xbf16>
    %cst_52 = arith.constant dense<0.000000e+00> : vector<16x8xf32>
    %72 = tpu.matmul %23, %71, %cst_52 {dimension_numbers = #tpu.dot_dimension_numbers<[1], [0], [0], [1], [0, 0, 1, 1], [], []>} : vector<16x32xbf16>, vector<32x8xbf16>, vector<16x8xf32> -> vector<16x8xf32>
    %c0_53 = arith.constant 0 : index
    %c1_54 = arith.constant 1 : index
    %c0_55 = arith.constant 0 : index
    %c0_56 = arith.constant 0 : index
    %73 = vector.load %arg9[%c0_53, %c1_54, %c0_55, %c0_56] : memref<2x4x1x8xf32, #tpu.memory_space<vmem>>, vector<1x1x1x8xf32>
    %74 = vector.shape_cast %73 : vector<1x1x1x8xf32> to vector<1x8xf32>
    %75 = vector.broadcast %74 : vector<1x8xf32> to vector<16x8xf32>
    %76 = arith.addf %72, %75 : vector<16x8xf32>
    %c0_57 = arith.constant 0 : index
    %c1_58 = arith.constant 1 : index
    %c0_59 = arith.constant 0 : index
    %c0_60 = arith.constant 0 : index
    %77 = vector.load %arg7[%c0_57, %c1_58, %c0_59, %c0_60] : memref<2x4x32x8xbf16, #tpu.memory_space<vmem>>, vector<1x1x32x8xbf16>
    %78 = vector.shape_cast %77 : vector<1x1x32x8xbf16> to vector<32x8xbf16>
    %cst_61 = arith.constant dense<0.000000e+00> : vector<16x8xf32>
    %79 = tpu.matmul %23, %78, %cst_61 {dimension_numbers = #tpu.dot_dimension_numbers<[1], [0], [0], [1], [0, 0, 1, 1], [], []>} : vector<16x32xbf16>, vector<32x8xbf16>, vector<16x8xf32> -> vector<16x8xf32>
    %c0_62 = arith.constant 0 : index
    %c1_63 = arith.constant 1 : index
    %c0_64 = arith.constant 0 : index
    %c0_65 = arith.constant 0 : index
    %80 = vector.load %arg10[%c0_62, %c1_63, %c0_64, %c0_65] : memref<2x4x1x8xf32, #tpu.memory_space<vmem>>, vector<1x1x1x8xf32>
    %81 = vector.shape_cast %80 : vector<1x1x1x8xf32> to vector<1x8xf32>
    %82 = vector.broadcast %81 : vector<1x8xf32> to vector<16x8xf32>
    %83 = arith.addf %79, %82 : vector<16x8xf32>
    %c0_66 = arith.constant 0 : index
    %c1_67 = arith.constant 1 : index
    %c0_68 = arith.constant 0 : index
    %c0_69 = arith.constant 0 : index
    %84 = vector.load %arg8[%c0_66, %c1_67, %c0_68, %c0_69] : memref<2x4x32x8xbf16, #tpu.memory_space<vmem>>, vector<1x1x32x8xbf16>
    %85 = vector.shape_cast %84 : vector<1x1x32x8xbf16> to vector<32x8xbf16>
    %cst_70 = arith.constant dense<0.000000e+00> : vector<16x8xf32>
    %86 = tpu.matmul %23, %85, %cst_70 {dimension_numbers = #tpu.dot_dimension_numbers<[1], [0], [0], [1], [0, 0, 1, 1], [], []>} : vector<16x32xbf16>, vector<32x8xbf16>, vector<16x8xf32> -> vector<16x8xf32>
    %c0_71 = arith.constant 0 : index
    %c1_72 = arith.constant 1 : index
    %c0_73 = arith.constant 0 : index
    %c0_74 = arith.constant 0 : index
    %87 = vector.load %arg11[%c0_71, %c1_72, %c0_73, %c0_74] : memref<2x4x1x8xf32, #tpu.memory_space<vmem>>, vector<1x1x1x8xf32>
    %88 = vector.shape_cast %87 : vector<1x1x1x8xf32> to vector<1x8xf32>
    %89 = vector.broadcast %88 : vector<1x8xf32> to vector<16x8xf32>
    %90 = arith.addf %86, %89 : vector<16x8xf32>
    %91 = arith.truncf %76 : vector<16x8xf32> to vector<16x8xbf16>
    %92 = arith.truncf %83 : vector<16x8xf32> to vector<16x8xbf16>
    %cst_75 = arith.constant dense<0.000000e+00> : vector<16x16xf32>
    %93 = tpu.matmul %91, %92, %cst_75 {dimension_numbers = #tpu.dot_dimension_numbers<[1], [1], [0], [0], [0, 0, 1, 0], [], []>} : vector<16x8xbf16>, vector<16x8xbf16>, vector<16x16xf32> -> vector<16x16xf32>
    %cst_76 = arith.constant 0.353553385 : f32
    %94 = vector.broadcast %cst_76 : f32 to vector<16x16xf32>
    %95 = arith.mulf %93, %94 : vector<16x16xf32>
    %96 = arith.addf %95, %24 : vector<16x16xf32>
    %cst_77 = arith.constant dense<0xFF800000> : vector<16xf32>
    %97 = vector.multi_reduction <maximumf>, %96, %cst_77 [1] : vector<16x16xf32> to vector<16xf32>
    %98 = vector.shape_cast %97 : vector<16xf32> to vector<16x1xf32>
    %99 = vector.broadcast %98 : vector<16x1xf32> to vector<16x16xf32>
    %100 = arith.subf %96, %99 : vector<16x16xf32>
    %101 = math.exp %100 : vector<16x16xf32>
    %cst_78 = arith.constant dense<0.000000e+00> : vector<16xf32>
    %102 = vector.multi_reduction <add>, %101, %cst_78 [1] : vector<16x16xf32> to vector<16xf32>
    %103 = vector.shape_cast %102 : vector<16xf32> to vector<16x1xf32>
    %104 = vector.broadcast %103 : vector<16x1xf32> to vector<16x16xf32>
    %105 = arith.divf %101, %104 : vector<16x16xf32>
    %106 = arith.truncf %105 : vector<16x16xf32> to vector<16x16xbf16>
    %107 = arith.truncf %90 : vector<16x8xf32> to vector<16x8xbf16>
    %cst_79 = arith.constant dense<0.000000e+00> : vector<16x8xf32>
    %108 = tpu.matmul %106, %107, %cst_79 {dimension_numbers = #tpu.dot_dimension_numbers<[1], [0], [0], [1], [0, 0, 1, 1], [], []>} : vector<16x16xbf16>, vector<16x8xbf16>, vector<16x8xf32> -> vector<16x8xf32>
    %109 = arith.truncf %108 : vector<16x8xf32> to vector<16x8xbf16>
    %c0_80 = arith.constant 0 : index
    %c1_81 = arith.constant 1 : index
    %c0_82 = arith.constant 0 : index
    %c0_83 = arith.constant 0 : index
    %110 = vector.load %arg12[%c0_80, %c1_81, %c0_82, %c0_83] : memref<2x4x8x32xbf16, #tpu.memory_space<vmem>>, vector<1x1x8x32xbf16>
    %111 = vector.shape_cast %110 : vector<1x1x8x32xbf16> to vector<8x32xbf16>
    %cst_84 = arith.constant dense<0.000000e+00> : vector<16x32xf32>
    %112 = tpu.matmul %109, %111, %cst_84 {dimension_numbers = #tpu.dot_dimension_numbers<[1], [0], [0], [1], [0, 0, 1, 1], [], []>} : vector<16x8xbf16>, vector<8x32xbf16>, vector<16x32xf32> -> vector<16x32xf32>
    %113 = arith.addf %69, %112 : vector<16x32xf32>
    %c0_85 = arith.constant 0 : index
    %c2 = arith.constant 2 : index
    %c0_86 = arith.constant 0 : index
    %c0_87 = arith.constant 0 : index
    %114 = vector.load %arg6[%c0_85, %c2, %c0_86, %c0_87] : memref<2x4x32x8xbf16, #tpu.memory_space<vmem>>, vector<1x1x32x8xbf16>
    %115 = vector.shape_cast %114 : vector<1x1x32x8xbf16> to vector<32x8xbf16>
    %cst_88 = arith.constant dense<0.000000e+00> : vector<16x8xf32>
    %116 = tpu.matmul %23, %115, %cst_88 {dimension_numbers = #tpu.dot_dimension_numbers<[1], [0], [0], [1], [0, 0, 1, 1], [], []>} : vector<16x32xbf16>, vector<32x8xbf16>, vector<16x8xf32> -> vector<16x8xf32>
    %c0_89 = arith.constant 0 : index
    %c2_90 = arith.constant 2 : index
    %c0_91 = arith.constant 0 : index
    %c0_92 = arith.constant 0 : index
    %117 = vector.load %arg9[%c0_89, %c2_90, %c0_91, %c0_92] : memref<2x4x1x8xf32, #tpu.memory_space<vmem>>, vector<1x1x1x8xf32>
    %118 = vector.shape_cast %117 : vector<1x1x1x8xf32> to vector<1x8xf32>
    %119 = vector.broadcast %118 : vector<1x8xf32> to vector<16x8xf32>
    %120 = arith.addf %116, %119 : vector<16x8xf32>
    %c0_93 = arith.constant 0 : index
    %c2_94 = arith.constant 2 : index
    %c0_95 = arith.constant 0 : index
    %c0_96 = arith.constant 0 : index
    %121 = vector.load %arg7[%c0_93, %c2_94, %c0_95, %c0_96] : memref<2x4x32x8xbf16, #tpu.memory_space<vmem>>, vector<1x1x32x8xbf16>
    %122 = vector.shape_cast %121 : vector<1x1x32x8xbf16> to vector<32x8xbf16>
    %cst_97 = arith.constant dense<0.000000e+00> : vector<16x8xf32>
    %123 = tpu.matmul %23, %122, %cst_97 {dimension_numbers = #tpu.dot_dimension_numbers<[1], [0], [0], [1], [0, 0, 1, 1], [], []>} : vector<16x32xbf16>, vector<32x8xbf16>, vector<16x8xf32> -> vector<16x8xf32>
    %c0_98 = arith.constant 0 : index
    %c2_99 = arith.constant 2 : index
    %c0_100 = arith.constant 0 : index
    %c0_101 = arith.constant 0 : index
    %124 = vector.load %arg10[%c0_98, %c2_99, %c0_100, %c0_101] : memref<2x4x1x8xf32, #tpu.memory_space<vmem>>, vector<1x1x1x8xf32>
    %125 = vector.shape_cast %124 : vector<1x1x1x8xf32> to vector<1x8xf32>
    %126 = vector.broadcast %125 : vector<1x8xf32> to vector<16x8xf32>
    %127 = arith.addf %123, %126 : vector<16x8xf32>
    %c0_102 = arith.constant 0 : index
    %c2_103 = arith.constant 2 : index
    %c0_104 = arith.constant 0 : index
    %c0_105 = arith.constant 0 : index
    %128 = vector.load %arg8[%c0_102, %c2_103, %c0_104, %c0_105] : memref<2x4x32x8xbf16, #tpu.memory_space<vmem>>, vector<1x1x32x8xbf16>
    %129 = vector.shape_cast %128 : vector<1x1x32x8xbf16> to vector<32x8xbf16>
    %cst_106 = arith.constant dense<0.000000e+00> : vector<16x8xf32>
    %130 = tpu.matmul %23, %129, %cst_106 {dimension_numbers = #tpu.dot_dimension_numbers<[1], [0], [0], [1], [0, 0, 1, 1], [], []>} : vector<16x32xbf16>, vector<32x8xbf16>, vector<16x8xf32> -> vector<16x8xf32>
    %c0_107 = arith.constant 0 : index
    %c2_108 = arith.constant 2 : index
    %c0_109 = arith.constant 0 : index
    %c0_110 = arith.constant 0 : index
    %131 = vector.load %arg11[%c0_107, %c2_108, %c0_109, %c0_110] : memref<2x4x1x8xf32, #tpu.memory_space<vmem>>, vector<1x1x1x8xf32>
    %132 = vector.shape_cast %131 : vector<1x1x1x8xf32> to vector<1x8xf32>
    %133 = vector.broadcast %132 : vector<1x8xf32> to vector<16x8xf32>
    %134 = arith.addf %130, %133 : vector<16x8xf32>
    %135 = arith.truncf %120 : vector<16x8xf32> to vector<16x8xbf16>
    %136 = arith.truncf %127 : vector<16x8xf32> to vector<16x8xbf16>
    %cst_111 = arith.constant dense<0.000000e+00> : vector<16x16xf32>
    %137 = tpu.matmul %135, %136, %cst_111 {dimension_numbers = #tpu.dot_dimension_numbers<[1], [1], [0], [0], [0, 0, 1, 0], [], []>} : vector<16x8xbf16>, vector<16x8xbf16>, vector<16x16xf32> -> vector<16x16xf32>
    %cst_112 = arith.constant 0.353553385 : f32
    %138 = vector.broadcast %cst_112 : f32 to vector<16x16xf32>
    %139 = arith.mulf %137, %138 : vector<16x16xf32>
    %140 = arith.addf %139, %24 : vector<16x16xf32>
    %cst_113 = arith.constant dense<0xFF800000> : vector<16xf32>
    %141 = vector.multi_reduction <maximumf>, %140, %cst_113 [1] : vector<16x16xf32> to vector<16xf32>
    %142 = vector.shape_cast %141 : vector<16xf32> to vector<16x1xf32>
    %143 = vector.broadcast %142 : vector<16x1xf32> to vector<16x16xf32>
    %144 = arith.subf %140, %143 : vector<16x16xf32>
    %145 = math.exp %144 : vector<16x16xf32>
    %cst_114 = arith.constant dense<0.000000e+00> : vector<16xf32>
    %146 = vector.multi_reduction <add>, %145, %cst_114 [1] : vector<16x16xf32> to vector<16xf32>
    %147 = vector.shape_cast %146 : vector<16xf32> to vector<16x1xf32>
    %148 = vector.broadcast %147 : vector<16x1xf32> to vector<16x16xf32>
    %149 = arith.divf %145, %148 : vector<16x16xf32>
    %150 = arith.truncf %149 : vector<16x16xf32> to vector<16x16xbf16>
    %151 = arith.truncf %134 : vector<16x8xf32> to vector<16x8xbf16>
    %cst_115 = arith.constant dense<0.000000e+00> : vector<16x8xf32>
    %152 = tpu.matmul %150, %151, %cst_115 {dimension_numbers = #tpu.dot_dimension_numbers<[1], [0], [0], [1], [0, 0, 1, 1], [], []>} : vector<16x16xbf16>, vector<16x8xbf16>, vector<16x8xf32> -> vector<16x8xf32>
    %153 = arith.truncf %152 : vector<16x8xf32> to vector<16x8xbf16>
    %c0_116 = arith.constant 0 : index
    %c2_117 = arith.constant 2 : index
    %c0_118 = arith.constant 0 : index
    %c0_119 = arith.constant 0 : index
    %154 = vector.load %arg12[%c0_116, %c2_117, %c0_118, %c0_119] : memref<2x4x8x32xbf16, #tpu.memory_space<vmem>>, vector<1x1x8x32xbf16>
    %155 = vector.shape_cast %154 : vector<1x1x8x32xbf16> to vector<8x32xbf16>
    %cst_120 = arith.constant dense<0.000000e+00> : vector<16x32xf32>
    %156 = tpu.matmul %153, %155, %cst_120 {dimension_numbers = #tpu.dot_dimension_numbers<[1], [0], [0], [1], [0, 0, 1, 1], [], []>} : vector<16x8xbf16>, vector<8x32xbf16>, vector<16x32xf32> -> vector<16x32xf32>
    %157 = arith.addf %113, %156 : vector<16x32xf32>
    %c0_121 = arith.constant 0 : index
    %c3 = arith.constant 3 : index
    %c0_122 = arith.constant 0 : index
    %c0_123 = arith.constant 0 : index
    %158 = vector.load %arg6[%c0_121, %c3, %c0_122, %c0_123] : memref<2x4x32x8xbf16, #tpu.memory_space<vmem>>, vector<1x1x32x8xbf16>
    %159 = vector.shape_cast %158 : vector<1x1x32x8xbf16> to vector<32x8xbf16>
    %cst_124 = arith.constant dense<0.000000e+00> : vector<16x8xf32>
    %160 = tpu.matmul %23, %159, %cst_124 {dimension_numbers = #tpu.dot_dimension_numbers<[1], [0], [0], [1], [0, 0, 1, 1], [], []>} : vector<16x32xbf16>, vector<32x8xbf16>, vector<16x8xf32> -> vector<16x8xf32>
    %c0_125 = arith.constant 0 : index
    %c3_126 = arith.constant 3 : index
    %c0_127 = arith.constant 0 : index
    %c0_128 = arith.constant 0 : index
    %161 = vector.load %arg9[%c0_125, %c3_126, %c0_127, %c0_128] : memref<2x4x1x8xf32, #tpu.memory_space<vmem>>, vector<1x1x1x8xf32>
    %162 = vector.shape_cast %161 : vector<1x1x1x8xf32> to vector<1x8xf32>
    %163 = vector.broadcast %162 : vector<1x8xf32> to vector<16x8xf32>
    %164 = arith.addf %160, %163 : vector<16x8xf32>
    %c0_129 = arith.constant 0 : index
    %c3_130 = arith.constant 3 : index
    %c0_131 = arith.constant 0 : index
    %c0_132 = arith.constant 0 : index
    %165 = vector.load %arg7[%c0_129, %c3_130, %c0_131, %c0_132] : memref<2x4x32x8xbf16, #tpu.memory_space<vmem>>, vector<1x1x32x8xbf16>
    %166 = vector.shape_cast %165 : vector<1x1x32x8xbf16> to vector<32x8xbf16>
    %cst_133 = arith.constant dense<0.000000e+00> : vector<16x8xf32>
    %167 = tpu.matmul %23, %166, %cst_133 {dimension_numbers = #tpu.dot_dimension_numbers<[1], [0], [0], [1], [0, 0, 1, 1], [], []>} : vector<16x32xbf16>, vector<32x8xbf16>, vector<16x8xf32> -> vector<16x8xf32>
    %c0_134 = arith.constant 0 : index
    %c3_135 = arith.constant 3 : index
    %c0_136 = arith.constant 0 : index
    %c0_137 = arith.constant 0 : index
    %168 = vector.load %arg10[%c0_134, %c3_135, %c0_136, %c0_137] : memref<2x4x1x8xf32, #tpu.memory_space<vmem>>, vector<1x1x1x8xf32>
    %169 = vector.shape_cast %168 : vector<1x1x1x8xf32> to vector<1x8xf32>
    %170 = vector.broadcast %169 : vector<1x8xf32> to vector<16x8xf32>
    %171 = arith.addf %167, %170 : vector<16x8xf32>
    %c0_138 = arith.constant 0 : index
    %c3_139 = arith.constant 3 : index
    %c0_140 = arith.constant 0 : index
    %c0_141 = arith.constant 0 : index
    %172 = vector.load %arg8[%c0_138, %c3_139, %c0_140, %c0_141] : memref<2x4x32x8xbf16, #tpu.memory_space<vmem>>, vector<1x1x32x8xbf16>
    %173 = vector.shape_cast %172 : vector<1x1x32x8xbf16> to vector<32x8xbf16>
    %cst_142 = arith.constant dense<0.000000e+00> : vector<16x8xf32>
    %174 = tpu.matmul %23, %173, %cst_142 {dimension_numbers = #tpu.dot_dimension_numbers<[1], [0], [0], [1], [0, 0, 1, 1], [], []>} : vector<16x32xbf16>, vector<32x8xbf16>, vector<16x8xf32> -> vector<16x8xf32>
    %c0_143 = arith.constant 0 : index
    %c3_144 = arith.constant 3 : index
    %c0_145 = arith.constant 0 : index
    %c0_146 = arith.constant 0 : index
    %175 = vector.load %arg11[%c0_143, %c3_144, %c0_145, %c0_146] : memref<2x4x1x8xf32, #tpu.memory_space<vmem>>, vector<1x1x1x8xf32>
    %176 = vector.shape_cast %175 : vector<1x1x1x8xf32> to vector<1x8xf32>
    %177 = vector.broadcast %176 : vector<1x8xf32> to vector<16x8xf32>
    %178 = arith.addf %174, %177 : vector<16x8xf32>
    %179 = arith.truncf %164 : vector<16x8xf32> to vector<16x8xbf16>
    %180 = arith.truncf %171 : vector<16x8xf32> to vector<16x8xbf16>
    %cst_147 = arith.constant dense<0.000000e+00> : vector<16x16xf32>
    %181 = tpu.matmul %179, %180, %cst_147 {dimension_numbers = #tpu.dot_dimension_numbers<[1], [1], [0], [0], [0, 0, 1, 0], [], []>} : vector<16x8xbf16>, vector<16x8xbf16>, vector<16x16xf32> -> vector<16x16xf32>
    %cst_148 = arith.constant 0.353553385 : f32
    %182 = vector.broadcast %cst_148 : f32 to vector<16x16xf32>
    %183 = arith.mulf %181, %182 : vector<16x16xf32>
    %184 = arith.addf %183, %24 : vector<16x16xf32>
    %cst_149 = arith.constant dense<0xFF800000> : vector<16xf32>
    %185 = vector.multi_reduction <maximumf>, %184, %cst_149 [1] : vector<16x16xf32> to vector<16xf32>
    %186 = vector.shape_cast %185 : vector<16xf32> to vector<16x1xf32>
    %187 = vector.broadcast %186 : vector<16x1xf32> to vector<16x16xf32>
    %188 = arith.subf %184, %187 : vector<16x16xf32>
    %189 = math.exp %188 : vector<16x16xf32>
    %cst_150 = arith.constant dense<0.000000e+00> : vector<16xf32>
    %190 = vector.multi_reduction <add>, %189, %cst_150 [1] : vector<16x16xf32> to vector<16xf32>
    %191 = vector.shape_cast %190 : vector<16xf32> to vector<16x1xf32>
    %192 = vector.broadcast %191 : vector<16x1xf32> to vector<16x16xf32>
    %193 = arith.divf %189, %192 : vector<16x16xf32>
    %194 = arith.truncf %193 : vector<16x16xf32> to vector<16x16xbf16>
    %195 = arith.truncf %178 : vector<16x8xf32> to vector<16x8xbf16>
    %cst_151 = arith.constant dense<0.000000e+00> : vector<16x8xf32>
    %196 = tpu.matmul %194, %195, %cst_151 {dimension_numbers = #tpu.dot_dimension_numbers<[1], [0], [0], [1], [0, 0, 1, 1], [], []>} : vector<16x16xbf16>, vector<16x8xbf16>, vector<16x8xf32> -> vector<16x8xf32>
    %197 = arith.truncf %196 : vector<16x8xf32> to vector<16x8xbf16>
    %c0_152 = arith.constant 0 : index
    %c3_153 = arith.constant 3 : index
    %c0_154 = arith.constant 0 : index
    %c0_155 = arith.constant 0 : index
    %198 = vector.load %arg12[%c0_152, %c3_153, %c0_154, %c0_155] : memref<2x4x8x32xbf16, #tpu.memory_space<vmem>>, vector<1x1x8x32xbf16>
    %199 = vector.shape_cast %198 : vector<1x1x8x32xbf16> to vector<8x32xbf16>
    %cst_156 = arith.constant dense<0.000000e+00> : vector<16x32xf32>
    %200 = tpu.matmul %197, %199, %cst_156 {dimension_numbers = #tpu.dot_dimension_numbers<[1], [0], [0], [1], [0, 0, 1, 1], [], []>} : vector<16x8xbf16>, vector<8x32xbf16>, vector<16x32xf32> -> vector<16x32xf32>
    %201 = arith.addf %157, %200 : vector<16x32xf32>
    %c0_157 = arith.constant 0 : index
    %c0_158 = arith.constant 0 : index
    %c0_159 = arith.constant 0 : index
    %202 = vector.load %arg13[%c0_157, %c0_158, %c0_159] : memref<2x1x32xf32, #tpu.memory_space<vmem>>, vector<1x1x32xf32>
    %203 = vector.shape_cast %202 : vector<1x1x32xf32> to vector<1x32xf32>
    %204 = vector.broadcast %203 : vector<1x32xf32> to vector<16x32xf32>
    %205 = arith.addf %201, %204 : vector<16x32xf32>
    %206 = arith.addf %205, %22 : vector<16x32xf32>
    %c0_160 = arith.constant 0 : index
    %c0_161 = arith.constant 0 : index
    %c0_162 = arith.constant 0 : index
    %207 = vector.load %arg14[%c0_160, %c0_161, %c0_162] : memref<2x1x32xf32, #tpu.memory_space<vmem>>, vector<1x1x32xf32>
    %208 = vector.shape_cast %207 : vector<1x1x32xf32> to vector<1x32xf32>
    %c0_163 = arith.constant 0 : index
    %c0_164 = arith.constant 0 : index
    %c0_165 = arith.constant 0 : index
    %209 = vector.load %arg15[%c0_163, %c0_164, %c0_165] : memref<2x1x32xf32, #tpu.memory_space<vmem>>, vector<1x1x32xf32>
    %210 = vector.shape_cast %209 : vector<1x1x32xf32> to vector<1x32xf32>
    %cst_166 = arith.constant dense<0.000000e+00> : vector<16xf32>
    %211 = vector.multi_reduction <add>, %206, %cst_166 [1] : vector<16x32xf32> to vector<16xf32>
    %212 = vector.shape_cast %211 : vector<16xf32> to vector<16x1xf32>
    %cst_167 = arith.constant 3.200000e+01 : f32
    %213 = vector.broadcast %cst_167 : f32 to vector<16x1xf32>
    %214 = arith.divf %212, %213 : vector<16x1xf32>
    %215 = vector.broadcast %214 : vector<16x1xf32> to vector<16x32xf32>
    %216 = arith.subf %206, %215 : vector<16x32xf32>
    %217 = arith.mulf %216, %216 : vector<16x32xf32>
    %cst_168 = arith.constant dense<0.000000e+00> : vector<16xf32>
    %218 = vector.multi_reduction <add>, %217, %cst_168 [1] : vector<16x32xf32> to vector<16xf32>
    %219 = vector.shape_cast %218 : vector<16xf32> to vector<16x1xf32>
    %cst_169 = arith.constant 3.200000e+01 : f32
    %220 = vector.broadcast %cst_169 : f32 to vector<16x1xf32>
    %221 = arith.divf %219, %220 : vector<16x1xf32>
    %cst_170 = arith.constant 9.99999996E-13 : f32
    %222 = vector.broadcast %cst_170 : f32 to vector<16x1xf32>
    %223 = arith.addf %221, %222 : vector<16x1xf32>
    %224 = math.rsqrt %223 : vector<16x1xf32>
    %225 = vector.broadcast %224 : vector<16x1xf32> to vector<16x32xf32>
    %226 = arith.mulf %216, %225 : vector<16x32xf32>
    %227 = vector.broadcast %208 : vector<1x32xf32> to vector<16x32xf32>
    %228 = arith.mulf %226, %227 : vector<16x32xf32>
    %229 = vector.broadcast %210 : vector<1x32xf32> to vector<16x32xf32>
    %230 = arith.addf %228, %229 : vector<16x32xf32>
    %231 = arith.truncf %230 : vector<16x32xf32> to vector<16x32xbf16>
    %c0_171 = arith.constant 0 : index
    %c0_172 = arith.constant 0 : index
    %c0_173 = arith.constant 0 : index
    %232 = vector.load %arg16[%c0_171, %c0_172, %c0_173] : memref<2x32x64xbf16, #tpu.memory_space<vmem>>, vector<1x32x64xbf16>
    %233 = vector.shape_cast %232 : vector<1x32x64xbf16> to vector<32x64xbf16>
    %cst_174 = arith.constant dense<0.000000e+00> : vector<16x64xf32>
    %234 = tpu.matmul %231, %233, %cst_174 {dimension_numbers = #tpu.dot_dimension_numbers<[1], [0], [0], [1], [0, 0, 1, 1], [], []>} : vector<16x32xbf16>, vector<32x64xbf16>, vector<16x64xf32> -> vector<16x64xf32>
    %c0_175 = arith.constant 0 : index
    %c0_176 = arith.constant 0 : index
    %c0_177 = arith.constant 0 : index
    %235 = vector.load %arg17[%c0_175, %c0_176, %c0_177] : memref<2x1x64xf32, #tpu.memory_space<vmem>>, vector<1x1x64xf32>
    %236 = vector.shape_cast %235 : vector<1x1x64xf32> to vector<1x64xf32>
    %237 = vector.broadcast %236 : vector<1x64xf32> to vector<16x64xf32>
    %238 = arith.addf %234, %237 : vector<16x64xf32>
    %cst_178 = arith.constant 5.000000e-01 : f32
    %239 = vector.broadcast %cst_178 : f32 to vector<16x64xf32>
    %240 = arith.mulf %239, %238 : vector<16x64xf32>
    %cst_179 = arith.constant 4.471500e-02 : f32
    %241 = vector.broadcast %cst_179 : f32 to vector<16x64xf32>
    %242 = arith.mulf %241, %238 : vector<16x64xf32>
    %243 = arith.mulf %242, %238 : vector<16x64xf32>
    %244 = arith.mulf %243, %238 : vector<16x64xf32>
    %245 = arith.addf %238, %244 : vector<16x64xf32>
    %cst_180 = arith.constant 0.797884583 : f32
    %246 = vector.broadcast %cst_180 : f32 to vector<16x64xf32>
    %247 = arith.mulf %246, %245 : vector<16x64xf32>
    %248 = math.tanh %247 : vector<16x64xf32>
    %cst_181 = arith.constant 1.000000e+00 : f32
    %249 = vector.broadcast %cst_181 : f32 to vector<16x64xf32>
    %250 = arith.addf %249, %248 : vector<16x64xf32>
    %251 = arith.mulf %240, %250 : vector<16x64xf32>
    %252 = arith.truncf %251 : vector<16x64xf32> to vector<16x64xbf16>
    %c0_182 = arith.constant 0 : index
    %c0_183 = arith.constant 0 : index
    %c0_184 = arith.constant 0 : index
    %253 = vector.load %arg18[%c0_182, %c0_183, %c0_184] : memref<2x64x32xbf16, #tpu.memory_space<vmem>>, vector<1x64x32xbf16>
    %254 = vector.shape_cast %253 : vector<1x64x32xbf16> to vector<64x32xbf16>
    %cst_185 = arith.constant dense<0.000000e+00> : vector<16x32xf32>
    %255 = tpu.matmul %252, %254, %cst_185 {dimension_numbers = #tpu.dot_dimension_numbers<[1], [0], [0], [1], [0, 0, 1, 1], [], []>} : vector<16x64xbf16>, vector<64x32xbf16>, vector<16x32xf32> -> vector<16x32xf32>
    %c0_186 = arith.constant 0 : index
    %c0_187 = arith.constant 0 : index
    %c0_188 = arith.constant 0 : index
    %256 = vector.load %arg19[%c0_186, %c0_187, %c0_188] : memref<2x1x32xf32, #tpu.memory_space<vmem>>, vector<1x1x32xf32>
    %257 = vector.shape_cast %256 : vector<1x1x32xf32> to vector<1x32xf32>
    %258 = vector.broadcast %257 : vector<1x32xf32> to vector<16x32xf32>
    %259 = arith.addf %255, %258 : vector<16x32xf32>
    %260 = arith.addf %259, %230 : vector<16x32xf32>
    %c0_189 = arith.constant 0 : index
    %c0_190 = arith.constant 0 : index
    %c0_191 = arith.constant 0 : index
    %261 = vector.load %arg20[%c0_189, %c0_190, %c0_191] : memref<2x1x32xf32, #tpu.memory_space<vmem>>, vector<1x1x32xf32>
    %262 = vector.shape_cast %261 : vector<1x1x32xf32> to vector<1x32xf32>
    %c0_192 = arith.constant 0 : index
    %c0_193 = arith.constant 0 : index
    %c0_194 = arith.constant 0 : index
    %263 = vector.load %arg21[%c0_192, %c0_193, %c0_194] : memref<2x1x32xf32, #tpu.memory_space<vmem>>, vector<1x1x32xf32>
    %264 = vector.shape_cast %263 : vector<1x1x32xf32> to vector<1x32xf32>
    %cst_195 = arith.constant dense<0.000000e+00> : vector<16xf32>
    %265 = vector.multi_reduction <add>, %260, %cst_195 [1] : vector<16x32xf32> to vector<16xf32>
    %266 = vector.shape_cast %265 : vector<16xf32> to vector<16x1xf32>
    %cst_196 = arith.constant 3.200000e+01 : f32
    %267 = vector.broadcast %cst_196 : f32 to vector<16x1xf32>
    %268 = arith.divf %266, %267 : vector<16x1xf32>
    %269 = vector.broadcast %268 : vector<16x1xf32> to vector<16x32xf32>
    %270 = arith.subf %260, %269 : vector<16x32xf32>
    %271 = arith.mulf %270, %270 : vector<16x32xf32>
    %cst_197 = arith.constant dense<0.000000e+00> : vector<16xf32>
    %272 = vector.multi_reduction <add>, %271, %cst_197 [1] : vector<16x32xf32> to vector<16xf32>
    %273 = vector.shape_cast %272 : vector<16xf32> to vector<16x1xf32>
    %cst_198 = arith.constant 3.200000e+01 : f32
    %274 = vector.broadcast %cst_198 : f32 to vector<16x1xf32>
    %275 = arith.divf %273, %274 : vector<16x1xf32>
    %cst_199 = arith.constant 9.99999996E-13 : f32
    %276 = vector.broadcast %cst_199 : f32 to vector<16x1xf32>
    %277 = arith.addf %275, %276 : vector<16x1xf32>
    %278 = math.rsqrt %277 : vector<16x1xf32>
    %279 = vector.broadcast %278 : vector<16x1xf32> to vector<16x32xf32>
    %280 = arith.mulf %270, %279 : vector<16x32xf32>
    %281 = vector.broadcast %262 : vector<1x32xf32> to vector<16x32xf32>
    %282 = arith.mulf %280, %281 : vector<16x32xf32>
    %283 = vector.broadcast %264 : vector<1x32xf32> to vector<16x32xf32>
    %284 = arith.addf %282, %283 : vector<16x32xf32>
    %285 = arith.truncf %284 : vector<16x32xf32> to vector<16x32xbf16>
    %cst_200 = arith.constant 0.000000e+00 : f32
    %286 = vector.broadcast %cst_200 : f32 to vector<16x32xf32>
    %c1_201 = arith.constant 1 : index
    %c0_202 = arith.constant 0 : index
    %c0_203 = arith.constant 0 : index
    %c0_204 = arith.constant 0 : index
    %287 = vector.load %arg6[%c1_201, %c0_202, %c0_203, %c0_204] : memref<2x4x32x8xbf16, #tpu.memory_space<vmem>>, vector<1x1x32x8xbf16>
    %288 = vector.shape_cast %287 : vector<1x1x32x8xbf16> to vector<32x8xbf16>
    %cst_205 = arith.constant dense<0.000000e+00> : vector<16x8xf32>
    %289 = tpu.matmul %285, %288, %cst_205 {dimension_numbers = #tpu.dot_dimension_numbers<[1], [0], [0], [1], [0, 0, 1, 1], [], []>} : vector<16x32xbf16>, vector<32x8xbf16>, vector<16x8xf32> -> vector<16x8xf32>
    %c1_206 = arith.constant 1 : index
    %c0_207 = arith.constant 0 : index
    %c0_208 = arith.constant 0 : index
    %c0_209 = arith.constant 0 : index
    %290 = vector.load %arg9[%c1_206, %c0_207, %c0_208, %c0_209] : memref<2x4x1x8xf32, #tpu.memory_space<vmem>>, vector<1x1x1x8xf32>
    %291 = vector.shape_cast %290 : vector<1x1x1x8xf32> to vector<1x8xf32>
    %292 = vector.broadcast %291 : vector<1x8xf32> to vector<16x8xf32>
    %293 = arith.addf %289, %292 : vector<16x8xf32>
    %c1_210 = arith.constant 1 : index
    %c0_211 = arith.constant 0 : index
    %c0_212 = arith.constant 0 : index
    %c0_213 = arith.constant 0 : index
    %294 = vector.load %arg7[%c1_210, %c0_211, %c0_212, %c0_213] : memref<2x4x32x8xbf16, #tpu.memory_space<vmem>>, vector<1x1x32x8xbf16>
    %295 = vector.shape_cast %294 : vector<1x1x32x8xbf16> to vector<32x8xbf16>
    %cst_214 = arith.constant dense<0.000000e+00> : vector<16x8xf32>
    %296 = tpu.matmul %285, %295, %cst_214 {dimension_numbers = #tpu.dot_dimension_numbers<[1], [0], [0], [1], [0, 0, 1, 1], [], []>} : vector<16x32xbf16>, vector<32x8xbf16>, vector<16x8xf32> -> vector<16x8xf32>
    %c1_215 = arith.constant 1 : index
    %c0_216 = arith.constant 0 : index
    %c0_217 = arith.constant 0 : index
    %c0_218 = arith.constant 0 : index
    %297 = vector.load %arg10[%c1_215, %c0_216, %c0_217, %c0_218] : memref<2x4x1x8xf32, #tpu.memory_space<vmem>>, vector<1x1x1x8xf32>
    %298 = vector.shape_cast %297 : vector<1x1x1x8xf32> to vector<1x8xf32>
    %299 = vector.broadcast %298 : vector<1x8xf32> to vector<16x8xf32>
    %300 = arith.addf %296, %299 : vector<16x8xf32>
    %c1_219 = arith.constant 1 : index
    %c0_220 = arith.constant 0 : index
    %c0_221 = arith.constant 0 : index
    %c0_222 = arith.constant 0 : index
    %301 = vector.load %arg8[%c1_219, %c0_220, %c0_221, %c0_222] : memref<2x4x32x8xbf16, #tpu.memory_space<vmem>>, vector<1x1x32x8xbf16>
    %302 = vector.shape_cast %301 : vector<1x1x32x8xbf16> to vector<32x8xbf16>
    %cst_223 = arith.constant dense<0.000000e+00> : vector<16x8xf32>
    %303 = tpu.matmul %285, %302, %cst_223 {dimension_numbers = #tpu.dot_dimension_numbers<[1], [0], [0], [1], [0, 0, 1, 1], [], []>} : vector<16x32xbf16>, vector<32x8xbf16>, vector<16x8xf32> -> vector<16x8xf32>
    %c1_224 = arith.constant 1 : index
    %c0_225 = arith.constant 0 : index
    %c0_226 = arith.constant 0 : index
    %c0_227 = arith.constant 0 : index
    %304 = vector.load %arg11[%c1_224, %c0_225, %c0_226, %c0_227] : memref<2x4x1x8xf32, #tpu.memory_space<vmem>>, vector<1x1x1x8xf32>
    %305 = vector.shape_cast %304 : vector<1x1x1x8xf32> to vector<1x8xf32>
    %306 = vector.broadcast %305 : vector<1x8xf32> to vector<16x8xf32>
    %307 = arith.addf %303, %306 : vector<16x8xf32>
    %308 = arith.truncf %293 : vector<16x8xf32> to vector<16x8xbf16>
    %309 = arith.truncf %300 : vector<16x8xf32> to vector<16x8xbf16>
    %cst_228 = arith.constant dense<0.000000e+00> : vector<16x16xf32>
    %310 = tpu.matmul %308, %309, %cst_228 {dimension_numbers = #tpu.dot_dimension_numbers<[1], [1], [0], [0], [0, 0, 1, 0], [], []>} : vector<16x8xbf16>, vector<16x8xbf16>, vector<16x16xf32> -> vector<16x16xf32>
    %cst_229 = arith.constant 0.353553385 : f32
    %311 = vector.broadcast %cst_229 : f32 to vector<16x16xf32>
    %312 = arith.mulf %310, %311 : vector<16x16xf32>
    %313 = arith.addf %312, %24 : vector<16x16xf32>
    %cst_230 = arith.constant dense<0xFF800000> : vector<16xf32>
    %314 = vector.multi_reduction <maximumf>, %313, %cst_230 [1] : vector<16x16xf32> to vector<16xf32>
    %315 = vector.shape_cast %314 : vector<16xf32> to vector<16x1xf32>
    %316 = vector.broadcast %315 : vector<16x1xf32> to vector<16x16xf32>
    %317 = arith.subf %313, %316 : vector<16x16xf32>
    %318 = math.exp %317 : vector<16x16xf32>
    %cst_231 = arith.constant dense<0.000000e+00> : vector<16xf32>
    %319 = vector.multi_reduction <add>, %318, %cst_231 [1] : vector<16x16xf32> to vector<16xf32>
    %320 = vector.shape_cast %319 : vector<16xf32> to vector<16x1xf32>
    %321 = vector.broadcast %320 : vector<16x1xf32> to vector<16x16xf32>
    %322 = arith.divf %318, %321 : vector<16x16xf32>
    %323 = arith.truncf %322 : vector<16x16xf32> to vector<16x16xbf16>
    %324 = arith.truncf %307 : vector<16x8xf32> to vector<16x8xbf16>
    %cst_232 = arith.constant dense<0.000000e+00> : vector<16x8xf32>
    %325 = tpu.matmul %323, %324, %cst_232 {dimension_numbers = #tpu.dot_dimension_numbers<[1], [0], [0], [1], [0, 0, 1, 1], [], []>} : vector<16x16xbf16>, vector<16x8xbf16>, vector<16x8xf32> -> vector<16x8xf32>
    %326 = arith.truncf %325 : vector<16x8xf32> to vector<16x8xbf16>
    %c1_233 = arith.constant 1 : index
    %c0_234 = arith.constant 0 : index
    %c0_235 = arith.constant 0 : index
    %c0_236 = arith.constant 0 : index
    %327 = vector.load %arg12[%c1_233, %c0_234, %c0_235, %c0_236] : memref<2x4x8x32xbf16, #tpu.memory_space<vmem>>, vector<1x1x8x32xbf16>
    %328 = vector.shape_cast %327 : vector<1x1x8x32xbf16> to vector<8x32xbf16>
    %cst_237 = arith.constant dense<0.000000e+00> : vector<16x32xf32>
    %329 = tpu.matmul %326, %328, %cst_237 {dimension_numbers = #tpu.dot_dimension_numbers<[1], [0], [0], [1], [0, 0, 1, 1], [], []>} : vector<16x8xbf16>, vector<8x32xbf16>, vector<16x32xf32> -> vector<16x32xf32>
    %330 = arith.addf %286, %329 : vector<16x32xf32>
    %c1_238 = arith.constant 1 : index
    %c1_239 = arith.constant 1 : index
    %c0_240 = arith.constant 0 : index
    %c0_241 = arith.constant 0 : index
    %331 = vector.load %arg6[%c1_238, %c1_239, %c0_240, %c0_241] : memref<2x4x32x8xbf16, #tpu.memory_space<vmem>>, vector<1x1x32x8xbf16>
    %332 = vector.shape_cast %331 : vector<1x1x32x8xbf16> to vector<32x8xbf16>
    %cst_242 = arith.constant dense<0.000000e+00> : vector<16x8xf32>
    %333 = tpu.matmul %285, %332, %cst_242 {dimension_numbers = #tpu.dot_dimension_numbers<[1], [0], [0], [1], [0, 0, 1, 1], [], []>} : vector<16x32xbf16>, vector<32x8xbf16>, vector<16x8xf32> -> vector<16x8xf32>
    %c1_243 = arith.constant 1 : index
    %c1_244 = arith.constant 1 : index
    %c0_245 = arith.constant 0 : index
    %c0_246 = arith.constant 0 : index
    %334 = vector.load %arg9[%c1_243, %c1_244, %c0_245, %c0_246] : memref<2x4x1x8xf32, #tpu.memory_space<vmem>>, vector<1x1x1x8xf32>
    %335 = vector.shape_cast %334 : vector<1x1x1x8xf32> to vector<1x8xf32>
    %336 = vector.broadcast %335 : vector<1x8xf32> to vector<16x8xf32>
    %337 = arith.addf %333, %336 : vector<16x8xf32>
    %c1_247 = arith.constant 1 : index
    %c1_248 = arith.constant 1 : index
    %c0_249 = arith.constant 0 : index
    %c0_250 = arith.constant 0 : index
    %338 = vector.load %arg7[%c1_247, %c1_248, %c0_249, %c0_250] : memref<2x4x32x8xbf16, #tpu.memory_space<vmem>>, vector<1x1x32x8xbf16>
    %339 = vector.shape_cast %338 : vector<1x1x32x8xbf16> to vector<32x8xbf16>
    %cst_251 = arith.constant dense<0.000000e+00> : vector<16x8xf32>
    %340 = tpu.matmul %285, %339, %cst_251 {dimension_numbers = #tpu.dot_dimension_numbers<[1], [0], [0], [1], [0, 0, 1, 1], [], []>} : vector<16x32xbf16>, vector<32x8xbf16>, vector<16x8xf32> -> vector<16x8xf32>
    %c1_252 = arith.constant 1 : index
    %c1_253 = arith.constant 1 : index
    %c0_254 = arith.constant 0 : index
    %c0_255 = arith.constant 0 : index
    %341 = vector.load %arg10[%c1_252, %c1_253, %c0_254, %c0_255] : memref<2x4x1x8xf32, #tpu.memory_space<vmem>>, vector<1x1x1x8xf32>
    %342 = vector.shape_cast %341 : vector<1x1x1x8xf32> to vector<1x8xf32>
    %343 = vector.broadcast %342 : vector<1x8xf32> to vector<16x8xf32>
    %344 = arith.addf %340, %343 : vector<16x8xf32>
    %c1_256 = arith.constant 1 : index
    %c1_257 = arith.constant 1 : index
    %c0_258 = arith.constant 0 : index
    %c0_259 = arith.constant 0 : index
    %345 = vector.load %arg8[%c1_256, %c1_257, %c0_258, %c0_259] : memref<2x4x32x8xbf16, #tpu.memory_space<vmem>>, vector<1x1x32x8xbf16>
    %346 = vector.shape_cast %345 : vector<1x1x32x8xbf16> to vector<32x8xbf16>
    %cst_260 = arith.constant dense<0.000000e+00> : vector<16x8xf32>
    %347 = tpu.matmul %285, %346, %cst_260 {dimension_numbers = #tpu.dot_dimension_numbers<[1], [0], [0], [1], [0, 0, 1, 1], [], []>} : vector<16x32xbf16>, vector<32x8xbf16>, vector<16x8xf32> -> vector<16x8xf32>
    %c1_261 = arith.constant 1 : index
    %c1_262 = arith.constant 1 : index
    %c0_263 = arith.constant 0 : index
    %c0_264 = arith.constant 0 : index
    %348 = vector.load %arg11[%c1_261, %c1_262, %c0_263, %c0_264] : memref<2x4x1x8xf32, #tpu.memory_space<vmem>>, vector<1x1x1x8xf32>
    %349 = vector.shape_cast %348 : vector<1x1x1x8xf32> to vector<1x8xf32>
    %350 = vector.broadcast %349 : vector<1x8xf32> to vector<16x8xf32>
    %351 = arith.addf %347, %350 : vector<16x8xf32>
    %352 = arith.truncf %337 : vector<16x8xf32> to vector<16x8xbf16>
    %353 = arith.truncf %344 : vector<16x8xf32> to vector<16x8xbf16>
    %cst_265 = arith.constant dense<0.000000e+00> : vector<16x16xf32>
    %354 = tpu.matmul %352, %353, %cst_265 {dimension_numbers = #tpu.dot_dimension_numbers<[1], [1], [0], [0], [0, 0, 1, 0], [], []>} : vector<16x8xbf16>, vector<16x8xbf16>, vector<16x16xf32> -> vector<16x16xf32>
    %cst_266 = arith.constant 0.353553385 : f32
    %355 = vector.broadcast %cst_266 : f32 to vector<16x16xf32>
    %356 = arith.mulf %354, %355 : vector<16x16xf32>
    %357 = arith.addf %356, %24 : vector<16x16xf32>
    %cst_267 = arith.constant dense<0xFF800000> : vector<16xf32>
    %358 = vector.multi_reduction <maximumf>, %357, %cst_267 [1] : vector<16x16xf32> to vector<16xf32>
    %359 = vector.shape_cast %358 : vector<16xf32> to vector<16x1xf32>
    %360 = vector.broadcast %359 : vector<16x1xf32> to vector<16x16xf32>
    %361 = arith.subf %357, %360 : vector<16x16xf32>
    %362 = math.exp %361 : vector<16x16xf32>
    %cst_268 = arith.constant dense<0.000000e+00> : vector<16xf32>
    %363 = vector.multi_reduction <add>, %362, %cst_268 [1] : vector<16x16xf32> to vector<16xf32>
    %364 = vector.shape_cast %363 : vector<16xf32> to vector<16x1xf32>
    %365 = vector.broadcast %364 : vector<16x1xf32> to vector<16x16xf32>
    %366 = arith.divf %362, %365 : vector<16x16xf32>
    %367 = arith.truncf %366 : vector<16x16xf32> to vector<16x16xbf16>
    %368 = arith.truncf %351 : vector<16x8xf32> to vector<16x8xbf16>
    %cst_269 = arith.constant dense<0.000000e+00> : vector<16x8xf32>
    %369 = tpu.matmul %367, %368, %cst_269 {dimension_numbers = #tpu.dot_dimension_numbers<[1], [0], [0], [1], [0, 0, 1, 1], [], []>} : vector<16x16xbf16>, vector<16x8xbf16>, vector<16x8xf32> -> vector<16x8xf32>
    %370 = arith.truncf %369 : vector<16x8xf32> to vector<16x8xbf16>
    %c1_270 = arith.constant 1 : index
    %c1_271 = arith.constant 1 : index
    %c0_272 = arith.constant 0 : index
    %c0_273 = arith.constant 0 : index
    %371 = vector.load %arg12[%c1_270, %c1_271, %c0_272, %c0_273] : memref<2x4x8x32xbf16, #tpu.memory_space<vmem>>, vector<1x1x8x32xbf16>
    %372 = vector.shape_cast %371 : vector<1x1x8x32xbf16> to vector<8x32xbf16>
    %cst_274 = arith.constant dense<0.000000e+00> : vector<16x32xf32>
    %373 = tpu.matmul %370, %372, %cst_274 {dimension_numbers = #tpu.dot_dimension_numbers<[1], [0], [0], [1], [0, 0, 1, 1], [], []>} : vector<16x8xbf16>, vector<8x32xbf16>, vector<16x32xf32> -> vector<16x32xf32>
    %374 = arith.addf %330, %373 : vector<16x32xf32>
    %c1_275 = arith.constant 1 : index
    %c2_276 = arith.constant 2 : index
    %c0_277 = arith.constant 0 : index
    %c0_278 = arith.constant 0 : index
    %375 = vector.load %arg6[%c1_275, %c2_276, %c0_277, %c0_278] : memref<2x4x32x8xbf16, #tpu.memory_space<vmem>>, vector<1x1x32x8xbf16>
    %376 = vector.shape_cast %375 : vector<1x1x32x8xbf16> to vector<32x8xbf16>
    %cst_279 = arith.constant dense<0.000000e+00> : vector<16x8xf32>
    %377 = tpu.matmul %285, %376, %cst_279 {dimension_numbers = #tpu.dot_dimension_numbers<[1], [0], [0], [1], [0, 0, 1, 1], [], []>} : vector<16x32xbf16>, vector<32x8xbf16>, vector<16x8xf32> -> vector<16x8xf32>
    %c1_280 = arith.constant 1 : index
    %c2_281 = arith.constant 2 : index
    %c0_282 = arith.constant 0 : index
    %c0_283 = arith.constant 0 : index
    %378 = vector.load %arg9[%c1_280, %c2_281, %c0_282, %c0_283] : memref<2x4x1x8xf32, #tpu.memory_space<vmem>>, vector<1x1x1x8xf32>
    %379 = vector.shape_cast %378 : vector<1x1x1x8xf32> to vector<1x8xf32>
    %380 = vector.broadcast %379 : vector<1x8xf32> to vector<16x8xf32>
    %381 = arith.addf %377, %380 : vector<16x8xf32>
    %c1_284 = arith.constant 1 : index
    %c2_285 = arith.constant 2 : index
    %c0_286 = arith.constant 0 : index
    %c0_287 = arith.constant 0 : index
    %382 = vector.load %arg7[%c1_284, %c2_285, %c0_286, %c0_287] : memref<2x4x32x8xbf16, #tpu.memory_space<vmem>>, vector<1x1x32x8xbf16>
    %383 = vector.shape_cast %382 : vector<1x1x32x8xbf16> to vector<32x8xbf16>
    %cst_288 = arith.constant dense<0.000000e+00> : vector<16x8xf32>
    %384 = tpu.matmul %285, %383, %cst_288 {dimension_numbers = #tpu.dot_dimension_numbers<[1], [0], [0], [1], [0, 0, 1, 1], [], []>} : vector<16x32xbf16>, vector<32x8xbf16>, vector<16x8xf32> -> vector<16x8xf32>
    %c1_289 = arith.constant 1 : index
    %c2_290 = arith.constant 2 : index
    %c0_291 = arith.constant 0 : index
    %c0_292 = arith.constant 0 : index
    %385 = vector.load %arg10[%c1_289, %c2_290, %c0_291, %c0_292] : memref<2x4x1x8xf32, #tpu.memory_space<vmem>>, vector<1x1x1x8xf32>
    %386 = vector.shape_cast %385 : vector<1x1x1x8xf32> to vector<1x8xf32>
    %387 = vector.broadcast %386 : vector<1x8xf32> to vector<16x8xf32>
    %388 = arith.addf %384, %387 : vector<16x8xf32>
    %c1_293 = arith.constant 1 : index
    %c2_294 = arith.constant 2 : index
    %c0_295 = arith.constant 0 : index
    %c0_296 = arith.constant 0 : index
    %389 = vector.load %arg8[%c1_293, %c2_294, %c0_295, %c0_296] : memref<2x4x32x8xbf16, #tpu.memory_space<vmem>>, vector<1x1x32x8xbf16>
    %390 = vector.shape_cast %389 : vector<1x1x32x8xbf16> to vector<32x8xbf16>
    %cst_297 = arith.constant dense<0.000000e+00> : vector<16x8xf32>
    %391 = tpu.matmul %285, %390, %cst_297 {dimension_numbers = #tpu.dot_dimension_numbers<[1], [0], [0], [1], [0, 0, 1, 1], [], []>} : vector<16x32xbf16>, vector<32x8xbf16>, vector<16x8xf32> -> vector<16x8xf32>
    %c1_298 = arith.constant 1 : index
    %c2_299 = arith.constant 2 : index
    %c0_300 = arith.constant 0 : index
    %c0_301 = arith.constant 0 : index
    %392 = vector.load %arg11[%c1_298, %c2_299, %c0_300, %c0_301] : memref<2x4x1x8xf32, #tpu.memory_space<vmem>>, vector<1x1x1x8xf32>
    %393 = vector.shape_cast %392 : vector<1x1x1x8xf32> to vector<1x8xf32>
    %394 = vector.broadcast %393 : vector<1x8xf32> to vector<16x8xf32>
    %395 = arith.addf %391, %394 : vector<16x8xf32>
    %396 = arith.truncf %381 : vector<16x8xf32> to vector<16x8xbf16>
    %397 = arith.truncf %388 : vector<16x8xf32> to vector<16x8xbf16>
    %cst_302 = arith.constant dense<0.000000e+00> : vector<16x16xf32>
    %398 = tpu.matmul %396, %397, %cst_302 {dimension_numbers = #tpu.dot_dimension_numbers<[1], [1], [0], [0], [0, 0, 1, 0], [], []>} : vector<16x8xbf16>, vector<16x8xbf16>, vector<16x16xf32> -> vector<16x16xf32>
    %cst_303 = arith.constant 0.353553385 : f32
    %399 = vector.broadcast %cst_303 : f32 to vector<16x16xf32>
    %400 = arith.mulf %398, %399 : vector<16x16xf32>
    %401 = arith.addf %400, %24 : vector<16x16xf32>
    %cst_304 = arith.constant dense<0xFF800000> : vector<16xf32>
    %402 = vector.multi_reduction <maximumf>, %401, %cst_304 [1] : vector<16x16xf32> to vector<16xf32>
    %403 = vector.shape_cast %402 : vector<16xf32> to vector<16x1xf32>
    %404 = vector.broadcast %403 : vector<16x1xf32> to vector<16x16xf32>
    %405 = arith.subf %401, %404 : vector<16x16xf32>
    %406 = math.exp %405 : vector<16x16xf32>
    %cst_305 = arith.constant dense<0.000000e+00> : vector<16xf32>
    %407 = vector.multi_reduction <add>, %406, %cst_305 [1] : vector<16x16xf32> to vector<16xf32>
    %408 = vector.shape_cast %407 : vector<16xf32> to vector<16x1xf32>
    %409 = vector.broadcast %408 : vector<16x1xf32> to vector<16x16xf32>
    %410 = arith.divf %406, %409 : vector<16x16xf32>
    %411 = arith.truncf %410 : vector<16x16xf32> to vector<16x16xbf16>
    %412 = arith.truncf %395 : vector<16x8xf32> to vector<16x8xbf16>
    %cst_306 = arith.constant dense<0.000000e+00> : vector<16x8xf32>
    %413 = tpu.matmul %411, %412, %cst_306 {dimension_numbers = #tpu.dot_dimension_numbers<[1], [0], [0], [1], [0, 0, 1, 1], [], []>} : vector<16x16xbf16>, vector<16x8xbf16>, vector<16x8xf32> -> vector<16x8xf32>
    %414 = arith.truncf %413 : vector<16x8xf32> to vector<16x8xbf16>
    %c1_307 = arith.constant 1 : index
    %c2_308 = arith.constant 2 : index
    %c0_309 = arith.constant 0 : index
    %c0_310 = arith.constant 0 : index
    %415 = vector.load %arg12[%c1_307, %c2_308, %c0_309, %c0_310] : memref<2x4x8x32xbf16, #tpu.memory_space<vmem>>, vector<1x1x8x32xbf16>
    %416 = vector.shape_cast %415 : vector<1x1x8x32xbf16> to vector<8x32xbf16>
    %cst_311 = arith.constant dense<0.000000e+00> : vector<16x32xf32>
    %417 = tpu.matmul %414, %416, %cst_311 {dimension_numbers = #tpu.dot_dimension_numbers<[1], [0], [0], [1], [0, 0, 1, 1], [], []>} : vector<16x8xbf16>, vector<8x32xbf16>, vector<16x32xf32> -> vector<16x32xf32>
    %418 = arith.addf %374, %417 : vector<16x32xf32>
    %c1_312 = arith.constant 1 : index
    %c3_313 = arith.constant 3 : index
    %c0_314 = arith.constant 0 : index
    %c0_315 = arith.constant 0 : index
    %419 = vector.load %arg6[%c1_312, %c3_313, %c0_314, %c0_315] : memref<2x4x32x8xbf16, #tpu.memory_space<vmem>>, vector<1x1x32x8xbf16>
    %420 = vector.shape_cast %419 : vector<1x1x32x8xbf16> to vector<32x8xbf16>
    %cst_316 = arith.constant dense<0.000000e+00> : vector<16x8xf32>
    %421 = tpu.matmul %285, %420, %cst_316 {dimension_numbers = #tpu.dot_dimension_numbers<[1], [0], [0], [1], [0, 0, 1, 1], [], []>} : vector<16x32xbf16>, vector<32x8xbf16>, vector<16x8xf32> -> vector<16x8xf32>
    %c1_317 = arith.constant 1 : index
    %c3_318 = arith.constant 3 : index
    %c0_319 = arith.constant 0 : index
    %c0_320 = arith.constant 0 : index
    %422 = vector.load %arg9[%c1_317, %c3_318, %c0_319, %c0_320] : memref<2x4x1x8xf32, #tpu.memory_space<vmem>>, vector<1x1x1x8xf32>
    %423 = vector.shape_cast %422 : vector<1x1x1x8xf32> to vector<1x8xf32>
    %424 = vector.broadcast %423 : vector<1x8xf32> to vector<16x8xf32>
    %425 = arith.addf %421, %424 : vector<16x8xf32>
    %c1_321 = arith.constant 1 : index
    %c3_322 = arith.constant 3 : index
    %c0_323 = arith.constant 0 : index
    %c0_324 = arith.constant 0 : index
    %426 = vector.load %arg7[%c1_321, %c3_322, %c0_323, %c0_324] : memref<2x4x32x8xbf16, #tpu.memory_space<vmem>>, vector<1x1x32x8xbf16>
    %427 = vector.shape_cast %426 : vector<1x1x32x8xbf16> to vector<32x8xbf16>
    %cst_325 = arith.constant dense<0.000000e+00> : vector<16x8xf32>
    %428 = tpu.matmul %285, %427, %cst_325 {dimension_numbers = #tpu.dot_dimension_numbers<[1], [0], [0], [1], [0, 0, 1, 1], [], []>} : vector<16x32xbf16>, vector<32x8xbf16>, vector<16x8xf32> -> vector<16x8xf32>
    %c1_326 = arith.constant 1 : index
    %c3_327 = arith.constant 3 : index
    %c0_328 = arith.constant 0 : index
    %c0_329 = arith.constant 0 : index
    %429 = vector.load %arg10[%c1_326, %c3_327, %c0_328, %c0_329] : memref<2x4x1x8xf32, #tpu.memory_space<vmem>>, vector<1x1x1x8xf32>
    %430 = vector.shape_cast %429 : vector<1x1x1x8xf32> to vector<1x8xf32>
    %431 = vector.broadcast %430 : vector<1x8xf32> to vector<16x8xf32>
    %432 = arith.addf %428, %431 : vector<16x8xf32>
    %c1_330 = arith.constant 1 : index
    %c3_331 = arith.constant 3 : index
    %c0_332 = arith.constant 0 : index
    %c0_333 = arith.constant 0 : index
    %433 = vector.load %arg8[%c1_330, %c3_331, %c0_332, %c0_333] : memref<2x4x32x8xbf16, #tpu.memory_space<vmem>>, vector<1x1x32x8xbf16>
    %434 = vector.shape_cast %433 : vector<1x1x32x8xbf16> to vector<32x8xbf16>
    %cst_334 = arith.constant dense<0.000000e+00> : vector<16x8xf32>
    %435 = tpu.matmul %285, %434, %cst_334 {dimension_numbers = #tpu.dot_dimension_numbers<[1], [0], [0], [1], [0, 0, 1, 1], [], []>} : vector<16x32xbf16>, vector<32x8xbf16>, vector<16x8xf32> -> vector<16x8xf32>
    %c1_335 = arith.constant 1 : index
    %c3_336 = arith.constant 3 : index
    %c0_337 = arith.constant 0 : index
    %c0_338 = arith.constant 0 : index
    %436 = vector.load %arg11[%c1_335, %c3_336, %c0_337, %c0_338] : memref<2x4x1x8xf32, #tpu.memory_space<vmem>>, vector<1x1x1x8xf32>
    %437 = vector.shape_cast %436 : vector<1x1x1x8xf32> to vector<1x8xf32>
    %438 = vector.broadcast %437 : vector<1x8xf32> to vector<16x8xf32>
    %439 = arith.addf %435, %438 : vector<16x8xf32>
    %440 = arith.truncf %425 : vector<16x8xf32> to vector<16x8xbf16>
    %441 = arith.truncf %432 : vector<16x8xf32> to vector<16x8xbf16>
    %cst_339 = arith.constant dense<0.000000e+00> : vector<16x16xf32>
    %442 = tpu.matmul %440, %441, %cst_339 {dimension_numbers = #tpu.dot_dimension_numbers<[1], [1], [0], [0], [0, 0, 1, 0], [], []>} : vector<16x8xbf16>, vector<16x8xbf16>, vector<16x16xf32> -> vector<16x16xf32>
    %cst_340 = arith.constant 0.353553385 : f32
    %443 = vector.broadcast %cst_340 : f32 to vector<16x16xf32>
    %444 = arith.mulf %442, %443 : vector<16x16xf32>
    %445 = arith.addf %444, %24 : vector<16x16xf32>
    %cst_341 = arith.constant dense<0xFF800000> : vector<16xf32>
    %446 = vector.multi_reduction <maximumf>, %445, %cst_341 [1] : vector<16x16xf32> to vector<16xf32>
    %447 = vector.shape_cast %446 : vector<16xf32> to vector<16x1xf32>
    %448 = vector.broadcast %447 : vector<16x1xf32> to vector<16x16xf32>
    %449 = arith.subf %445, %448 : vector<16x16xf32>
    %450 = math.exp %449 : vector<16x16xf32>
    %cst_342 = arith.constant dense<0.000000e+00> : vector<16xf32>
    %451 = vector.multi_reduction <add>, %450, %cst_342 [1] : vector<16x16xf32> to vector<16xf32>
    %452 = vector.shape_cast %451 : vector<16xf32> to vector<16x1xf32>
    %453 = vector.broadcast %452 : vector<16x1xf32> to vector<16x16xf32>
    %454 = arith.divf %450, %453 : vector<16x16xf32>
    %455 = arith.truncf %454 : vector<16x16xf32> to vector<16x16xbf16>
    %456 = arith.truncf %439 : vector<16x8xf32> to vector<16x8xbf16>
    %cst_343 = arith.constant dense<0.000000e+00> : vector<16x8xf32>
    %457 = tpu.matmul %455, %456, %cst_343 {dimension_numbers = #tpu.dot_dimension_numbers<[1], [0], [0], [1], [0, 0, 1, 1], [], []>} : vector<16x16xbf16>, vector<16x8xbf16>, vector<16x8xf32> -> vector<16x8xf32>
    %458 = arith.truncf %457 : vector<16x8xf32> to vector<16x8xbf16>
    %c1_344 = arith.constant 1 : index
    %c3_345 = arith.constant 3 : index
    %c0_346 = arith.constant 0 : index
    %c0_347 = arith.constant 0 : index
    %459 = vector.load %arg12[%c1_344, %c3_345, %c0_346, %c0_347] : memref<2x4x8x32xbf16, #tpu.memory_space<vmem>>, vector<1x1x8x32xbf16>
    %460 = vector.shape_cast %459 : vector<1x1x8x32xbf16> to vector<8x32xbf16>
    %cst_348 = arith.constant dense<0.000000e+00> : vector<16x32xf32>
    %461 = tpu.matmul %458, %460, %cst_348 {dimension_numbers = #tpu.dot_dimension_numbers<[1], [0], [0], [1], [0, 0, 1, 1], [], []>} : vector<16x8xbf16>, vector<8x32xbf16>, vector<16x32xf32> -> vector<16x32xf32>
    %462 = arith.addf %418, %461 : vector<16x32xf32>
    %c1_349 = arith.constant 1 : index
    %c0_350 = arith.constant 0 : index
    %c0_351 = arith.constant 0 : index
    %463 = vector.load %arg13[%c1_349, %c0_350, %c0_351] : memref<2x1x32xf32, #tpu.memory_space<vmem>>, vector<1x1x32xf32>
    %464 = vector.shape_cast %463 : vector<1x1x32xf32> to vector<1x32xf32>
    %465 = vector.broadcast %464 : vector<1x32xf32> to vector<16x32xf32>
    %466 = arith.addf %462, %465 : vector<16x32xf32>
    %467 = arith.addf %466, %284 : vector<16x32xf32>
    %c1_352 = arith.constant 1 : index
    %c0_353 = arith.constant 0 : index
    %c0_354 = arith.constant 0 : index
    %468 = vector.load %arg14[%c1_352, %c0_353, %c0_354] : memref<2x1x32xf32, #tpu.memory_space<vmem>>, vector<1x1x32xf32>
    %469 = vector.shape_cast %468 : vector<1x1x32xf32> to vector<1x32xf32>
    %c1_355 = arith.constant 1 : index
    %c0_356 = arith.constant 0 : index
    %c0_357 = arith.constant 0 : index
    %470 = vector.load %arg15[%c1_355, %c0_356, %c0_357] : memref<2x1x32xf32, #tpu.memory_space<vmem>>, vector<1x1x32xf32>
    %471 = vector.shape_cast %470 : vector<1x1x32xf32> to vector<1x32xf32>
    %cst_358 = arith.constant dense<0.000000e+00> : vector<16xf32>
    %472 = vector.multi_reduction <add>, %467, %cst_358 [1] : vector<16x32xf32> to vector<16xf32>
    %473 = vector.shape_cast %472 : vector<16xf32> to vector<16x1xf32>
    %cst_359 = arith.constant 3.200000e+01 : f32
    %474 = vector.broadcast %cst_359 : f32 to vector<16x1xf32>
    %475 = arith.divf %473, %474 : vector<16x1xf32>
    %476 = vector.broadcast %475 : vector<16x1xf32> to vector<16x32xf32>
    %477 = arith.subf %467, %476 : vector<16x32xf32>
    %478 = arith.mulf %477, %477 : vector<16x32xf32>
    %cst_360 = arith.constant dense<0.000000e+00> : vector<16xf32>
    %479 = vector.multi_reduction <add>, %478, %cst_360 [1] : vector<16x32xf32> to vector<16xf32>
    %480 = vector.shape_cast %479 : vector<16xf32> to vector<16x1xf32>
    %cst_361 = arith.constant 3.200000e+01 : f32
    %481 = vector.broadcast %cst_361 : f32 to vector<16x1xf32>
    %482 = arith.divf %480, %481 : vector<16x1xf32>
    %cst_362 = arith.constant 9.99999996E-13 : f32
    %483 = vector.broadcast %cst_362 : f32 to vector<16x1xf32>
    %484 = arith.addf %482, %483 : vector<16x1xf32>
    %485 = math.rsqrt %484 : vector<16x1xf32>
    %486 = vector.broadcast %485 : vector<16x1xf32> to vector<16x32xf32>
    %487 = arith.mulf %477, %486 : vector<16x32xf32>
    %488 = vector.broadcast %469 : vector<1x32xf32> to vector<16x32xf32>
    %489 = arith.mulf %487, %488 : vector<16x32xf32>
    %490 = vector.broadcast %471 : vector<1x32xf32> to vector<16x32xf32>
    %491 = arith.addf %489, %490 : vector<16x32xf32>
    %492 = arith.truncf %491 : vector<16x32xf32> to vector<16x32xbf16>
    %c1_363 = arith.constant 1 : index
    %c0_364 = arith.constant 0 : index
    %c0_365 = arith.constant 0 : index
    %493 = vector.load %arg16[%c1_363, %c0_364, %c0_365] : memref<2x32x64xbf16, #tpu.memory_space<vmem>>, vector<1x32x64xbf16>
    %494 = vector.shape_cast %493 : vector<1x32x64xbf16> to vector<32x64xbf16>
    %cst_366 = arith.constant dense<0.000000e+00> : vector<16x64xf32>
    %495 = tpu.matmul %492, %494, %cst_366 {dimension_numbers = #tpu.dot_dimension_numbers<[1], [0], [0], [1], [0, 0, 1, 1], [], []>} : vector<16x32xbf16>, vector<32x64xbf16>, vector<16x64xf32> -> vector<16x64xf32>
    %c1_367 = arith.constant 1 : index
    %c0_368 = arith.constant 0 : index
    %c0_369 = arith.constant 0 : index
    %496 = vector.load %arg17[%c1_367, %c0_368, %c0_369] : memref<2x1x64xf32, #tpu.memory_space<vmem>>, vector<1x1x64xf32>
    %497 = vector.shape_cast %496 : vector<1x1x64xf32> to vector<1x64xf32>
    %498 = vector.broadcast %497 : vector<1x64xf32> to vector<16x64xf32>
    %499 = arith.addf %495, %498 : vector<16x64xf32>
    %cst_370 = arith.constant 5.000000e-01 : f32
    %500 = vector.broadcast %cst_370 : f32 to vector<16x64xf32>
    %501 = arith.mulf %500, %499 : vector<16x64xf32>
    %cst_371 = arith.constant 4.471500e-02 : f32
    %502 = vector.broadcast %cst_371 : f32 to vector<16x64xf32>
    %503 = arith.mulf %502, %499 : vector<16x64xf32>
    %504 = arith.mulf %503, %499 : vector<16x64xf32>
    %505 = arith.mulf %504, %499 : vector<16x64xf32>
    %506 = arith.addf %499, %505 : vector<16x64xf32>
    %cst_372 = arith.constant 0.797884583 : f32
    %507 = vector.broadcast %cst_372 : f32 to vector<16x64xf32>
    %508 = arith.mulf %507, %506 : vector<16x64xf32>
    %509 = math.tanh %508 : vector<16x64xf32>
    %cst_373 = arith.constant 1.000000e+00 : f32
    %510 = vector.broadcast %cst_373 : f32 to vector<16x64xf32>
    %511 = arith.addf %510, %509 : vector<16x64xf32>
    %512 = arith.mulf %501, %511 : vector<16x64xf32>
    %513 = arith.truncf %512 : vector<16x64xf32> to vector<16x64xbf16>
    %c1_374 = arith.constant 1 : index
    %c0_375 = arith.constant 0 : index
    %c0_376 = arith.constant 0 : index
    %514 = vector.load %arg18[%c1_374, %c0_375, %c0_376] : memref<2x64x32xbf16, #tpu.memory_space<vmem>>, vector<1x64x32xbf16>
    %515 = vector.shape_cast %514 : vector<1x64x32xbf16> to vector<64x32xbf16>
    %cst_377 = arith.constant dense<0.000000e+00> : vector<16x32xf32>
    %516 = tpu.matmul %513, %515, %cst_377 {dimension_numbers = #tpu.dot_dimension_numbers<[1], [0], [0], [1], [0, 0, 1, 1], [], []>} : vector<16x64xbf16>, vector<64x32xbf16>, vector<16x32xf32> -> vector<16x32xf32>
    %c1_378 = arith.constant 1 : index
    %c0_379 = arith.constant 0 : index
    %c0_380 = arith.constant 0 : index
    %517 = vector.load %arg19[%c1_378, %c0_379, %c0_380] : memref<2x1x32xf32, #tpu.memory_space<vmem>>, vector<1x1x32xf32>
    %518 = vector.shape_cast %517 : vector<1x1x32xf32> to vector<1x32xf32>
    %519 = vector.broadcast %518 : vector<1x32xf32> to vector<16x32xf32>
    %520 = arith.addf %516, %519 : vector<16x32xf32>
    %521 = arith.addf %520, %491 : vector<16x32xf32>
    %c1_381 = arith.constant 1 : index
    %c0_382 = arith.constant 0 : index
    %c0_383 = arith.constant 0 : index
    %522 = vector.load %arg20[%c1_381, %c0_382, %c0_383] : memref<2x1x32xf32, #tpu.memory_space<vmem>>, vector<1x1x32xf32>
    %523 = vector.shape_cast %522 : vector<1x1x32xf32> to vector<1x32xf32>
    %c1_384 = arith.constant 1 : index
    %c0_385 = arith.constant 0 : index
    %c0_386 = arith.constant 0 : index
    %524 = vector.load %arg21[%c1_384, %c0_385, %c0_386] : memref<2x1x32xf32, #tpu.memory_space<vmem>>, vector<1x1x32xf32>
    %525 = vector.shape_cast %524 : vector<1x1x32xf32> to vector<1x32xf32>
    %cst_387 = arith.constant dense<0.000000e+00> : vector<16xf32>
    %526 = vector.multi_reduction <add>, %521, %cst_387 [1] : vector<16x32xf32> to vector<16xf32>
    %527 = vector.shape_cast %526 : vector<16xf32> to vector<16x1xf32>
    %cst_388 = arith.constant 3.200000e+01 : f32
    %528 = vector.broadcast %cst_388 : f32 to vector<16x1xf32>
    %529 = arith.divf %527, %528 : vector<16x1xf32>
    %530 = vector.broadcast %529 : vector<16x1xf32> to vector<16x32xf32>
    %531 = arith.subf %521, %530 : vector<16x32xf32>
    %532 = arith.mulf %531, %531 : vector<16x32xf32>
    %cst_389 = arith.constant dense<0.000000e+00> : vector<16xf32>
    %533 = vector.multi_reduction <add>, %532, %cst_389 [1] : vector<16x32xf32> to vector<16xf32>
    %534 = vector.shape_cast %533 : vector<16xf32> to vector<16x1xf32>
    %cst_390 = arith.constant 3.200000e+01 : f32
    %535 = vector.broadcast %cst_390 : f32 to vector<16x1xf32>
    %536 = arith.divf %534, %535 : vector<16x1xf32>
    %cst_391 = arith.constant 9.99999996E-13 : f32
    %537 = vector.broadcast %cst_391 : f32 to vector<16x1xf32>
    %538 = arith.addf %536, %537 : vector<16x1xf32>
    %539 = math.rsqrt %538 : vector<16x1xf32>
    %540 = vector.broadcast %539 : vector<16x1xf32> to vector<16x32xf32>
    %541 = arith.mulf %531, %540 : vector<16x32xf32>
    %542 = vector.broadcast %523 : vector<1x32xf32> to vector<16x32xf32>
    %543 = arith.mulf %541, %542 : vector<16x32xf32>
    %544 = vector.broadcast %525 : vector<1x32xf32> to vector<16x32xf32>
    %545 = arith.addf %543, %544 : vector<16x32xf32>
    %546 = arith.truncf %545 : vector<16x32xf32> to vector<16x32xbf16>
    %547 = vector.extract_strided_slice %545 {offsets = [0, 0], sizes = [1, 32], strides = [1, 1]} : vector<16x32xf32> to vector<1x32xf32>
    %548 = vector.extract_strided_slice %545 {offsets = [8, 0], sizes = [1, 32], strides = [1, 1]} : vector<16x32xf32> to vector<1x32xf32>
    %549 = tpu.concatenate %547, %548 in 0 : vector<1x32xf32>, vector<1x32xf32> -> vector<2x32xf32>
    %550 = arith.truncf %549 : vector<2x32xf32> to vector<2x32xbf16>
    %c0_392 = arith.constant 0 : index
    %c0_393 = arith.constant 0 : index
    %551 = vector.load %arg22[%c0_392, %c0_393] : memref<32x32xbf16, #tpu.memory_space<vmem>>, vector<32x32xbf16>
    %cst_394 = arith.constant dense<0.000000e+00> : vector<2x32xf32>
    %552 = tpu.matmul %550, %551, %cst_394 {dimension_numbers = #tpu.dot_dimension_numbers<[1], [0], [0], [1], [0, 0, 1, 1], [], []>} : vector<2x32xbf16>, vector<32x32xbf16>, vector<2x32xf32> -> vector<2x32xf32>
    %c0_395 = arith.constant 0 : index
    %c0_396 = arith.constant 0 : index
    %553 = vector.load %arg23[%c0_395, %c0_396] : memref<1x32xf32, #tpu.memory_space<vmem>>, vector<1x32xf32>
    %554 = vector.broadcast %553 : vector<1x32xf32> to vector<2x32xf32>
    %555 = arith.addf %552, %554 : vector<2x32xf32>
    %556 = math.tanh %555 : vector<2x32xf32>
    %557 = arith.truncf %556 : vector<2x32xf32> to vector<2x32xbf16>
    %c0_397 = arith.constant 0 : index
    %c0_398 = arith.constant 0 : index
    %558 = vector.load %arg30[%c0_397, %c0_398] : memref<32x128xbf16, #tpu.memory_space<vmem>>, vector<32x128xbf16>
    %cst_399 = arith.constant dense<0.000000e+00> : vector<2x128xf32>
    %559 = tpu.matmul %557, %558, %cst_399 {dimension_numbers = #tpu.dot_dimension_numbers<[1], [0], [0], [1], [0, 0, 1, 1], [], []>} : vector<2x32xbf16>, vector<32x128xbf16>, vector<2x128xf32> -> vector<2x128xf32>
    %c0_400 = arith.constant 0 : index
    %c0_401 = arith.constant 0 : index
    %560 = vector.load %arg31[%c0_400, %c0_401] : memref<1x128xf32, #tpu.memory_space<vmem>>, vector<1x128xf32>
    %561 = vector.broadcast %560 : vector<1x128xf32> to vector<2x128xf32>
    %562 = arith.addf %559, %561 : vector<2x128xf32>
    %c0_402 = arith.constant 0 : index
    %c0_403 = arith.constant 0 : index
    %563 = vector.load %arg33[%c0_402, %c0_403] : memref<2x128xf32, #tpu.memory_space<vmem>>, vector<2x128xf32>
    tpu.vector_store %arg33[%c0_402, %c0_403], %562 {strides = array<i32>} : memref<2x128xf32, #tpu.memory_space<vmem>>, vector<2x128xf32>,
    %c0_404 = arith.constant 0 : index
    %c0_405 = arith.constant 0 : index
    %564 = vector.load %arg24[%c0_404, %c0_405] : memref<32x32xbf16, #tpu.memory_space<vmem>>, vector<32x32xbf16>
    %cst_406 = arith.constant dense<0.000000e+00> : vector<16x32xf32>
    %565 = tpu.matmul %546, %564, %cst_406 {dimension_numbers = #tpu.dot_dimension_numbers<[1], [0], [0], [1], [0, 0, 1, 1], [], []>} : vector<16x32xbf16>, vector<32x32xbf16>, vector<16x32xf32> -> vector<16x32xf32>
    %c0_407 = arith.constant 0 : index
    %c0_408 = arith.constant 0 : index
    %566 = vector.load %arg25[%c0_407, %c0_408] : memref<1x32xf32, #tpu.memory_space<vmem>>, vector<1x32xf32>
    %567 = vector.broadcast %566 : vector<1x32xf32> to vector<16x32xf32>
    %568 = arith.addf %565, %567 : vector<16x32xf32>
    %cst_409 = arith.constant 5.000000e-01 : f32
    %569 = vector.broadcast %cst_409 : f32 to vector<16x32xf32>
    %570 = arith.mulf %569, %568 : vector<16x32xf32>
    %cst_410 = arith.constant 4.471500e-02 : f32
    %571 = vector.broadcast %cst_410 : f32 to vector<16x32xf32>
    %572 = arith.mulf %571, %568 : vector<16x32xf32>
    %573 = arith.mulf %572, %568 : vector<16x32xf32>
    %574 = arith.mulf %573, %568 : vector<16x32xf32>
    %575 = arith.addf %568, %574 : vector<16x32xf32>
    %cst_411 = arith.constant 0.797884583 : f32
    %576 = vector.broadcast %cst_411 : f32 to vector<16x32xf32>
    %577 = arith.mulf %576, %575 : vector<16x32xf32>
    %578 = math.tanh %577 : vector<16x32xf32>
    %cst_412 = arith.constant 1.000000e+00 : f32
    %579 = vector.broadcast %cst_412 : f32 to vector<16x32xf32>
    %580 = arith.addf %579, %578 : vector<16x32xf32>
    %581 = arith.mulf %570, %580 : vector<16x32xf32>
    %c0_413 = arith.constant 0 : index
    %c0_414 = arith.constant 0 : index
    %582 = vector.load %arg26[%c0_413, %c0_414] : memref<1x32xf32, #tpu.memory_space<vmem>>, vector<1x32xf32>
    %c0_415 = arith.constant 0 : index
    %c0_416 = arith.constant 0 : index
    %583 = vector.load %arg27[%c0_415, %c0_416] : memref<1x32xf32, #tpu.memory_space<vmem>>, vector<1x32xf32>
    %cst_417 = arith.constant dense<0.000000e+00> : vector<16xf32>
    %584 = vector.multi_reduction <add>, %581, %cst_417 [1] : vector<16x32xf32> to vector<16xf32>
    %585 = vector.shape_cast %584 : vector<16xf32> to vector<16x1xf32>
    %cst_418 = arith.constant 3.200000e+01 : f32
    %586 = vector.broadcast %cst_418 : f32 to vector<16x1xf32>
    %587 = arith.divf %585, %586 : vector<16x1xf32>
    %588 = vector.broadcast %587 : vector<16x1xf32> to vector<16x32xf32>
    %589 = arith.subf %581, %588 : vector<16x32xf32>
    %590 = arith.mulf %589, %589 : vector<16x32xf32>
    %cst_419 = arith.constant dense<0.000000e+00> : vector<16xf32>
    %591 = vector.multi_reduction <add>, %590, %cst_419 [1] : vector<16x32xf32> to vector<16xf32>
    %592 = vector.shape_cast %591 : vector<16xf32> to vector<16x1xf32>
    %cst_420 = arith.constant 3.200000e+01 : f32
    %593 = vector.broadcast %cst_420 : f32 to vector<16x1xf32>
    %594 = arith.divf %592, %593 : vector<16x1xf32>
    %cst_421 = arith.constant 9.99999996E-13 : f32
    %595 = vector.broadcast %cst_421 : f32 to vector<16x1xf32>
    %596 = arith.addf %594, %595 : vector<16x1xf32>
    %597 = math.rsqrt %596 : vector<16x1xf32>
    %598 = vector.broadcast %597 : vector<16x1xf32> to vector<16x32xf32>
    %599 = arith.mulf %589, %598 : vector<16x32xf32>
    %600 = vector.broadcast %582 : vector<1x32xf32> to vector<16x32xf32>
    %601 = arith.mulf %599, %600 : vector<16x32xf32>
    %602 = vector.broadcast %583 : vector<1x32xf32> to vector<16x32xf32>
    %603 = arith.addf %601, %602 : vector<16x32xf32>
    %604 = arith.truncf %603 : vector<16x32xf32> to vector<16x32xbf16>
    %c0_422 = arith.constant 0 : index
    %c0_423 = arith.constant 0 : index
    %605 = vector.load %arg28[%c0_422, %c0_423] : memref<128x32xbf16, #tpu.memory_space<vmem>>, vector<128x32xbf16>
    %cst_424 = arith.constant dense<0.000000e+00> : vector<16x128xf32>
    %606 = tpu.matmul %604, %605, %cst_424 {dimension_numbers = #tpu.dot_dimension_numbers<[1], [1], [0], [0], [0, 0, 1, 0], [], []>} : vector<16x32xbf16>, vector<128x32xbf16>, vector<16x128xf32> -> vector<16x128xf32>
    %c0_425 = arith.constant 0 : index
    %c0_426 = arith.constant 0 : index
    %607 = vector.load %arg29[%c0_425, %c0_426] : memref<1x128xf32, #tpu.memory_space<vmem>>, vector<1x128xf32>
    %608 = vector.broadcast %607 : vector<1x128xf32> to vector<16x128xf32>
    %609 = arith.addf %606, %608 : vector<16x128xf32>
    %c0_427 = arith.constant 0 : index
    %c0_428 = arith.constant 0 : index
    %610 = vector.load %arg32[%c0_427, %c0_428] : memref<16x128xf32, #tpu.memory_space<vmem>>, vector<16x128xf32>
    tpu.vector_store %arg32[%c0_427, %c0_428], %609 {strides = array<i32>} : memref<16x128xf32, #tpu.memory_space<vmem>>, vector<16x128xf32>,
    %c0_429 = arith.constant 0 : index
    %c0_430 = arith.constant 0 : index
    %611 = vector.load %arg2[%c0_429, %c0_430] : memref<16x1xi32, #tpu.memory_space<vmem>>, vector<16x1xi32>
    %cst_431 = arith.constant dense<0xFF800000> : vector<16xf32>
    %612 = vector.multi_reduction <maximumf>, %609, %cst_431 [1] : vector<16x128xf32> to vector<16xf32>
    %613 = vector.shape_cast %612 : vector<16xf32> to vector<16x1xf32>
    %614 = vector.broadcast %613 : vector<16x1xf32> to vector<16x128xf32>
    %615 = arith.subf %609, %614 : vector<16x128xf32>
    %616 = math.exp %615 : vector<16x128xf32>
    %cst_432 = arith.constant dense<0.000000e+00> : vector<16xf32>
    %617 = vector.multi_reduction <add>, %616, %cst_432 [1] : vector<16x128xf32> to vector<16xf32>
    %618 = vector.shape_cast %617 : vector<16xf32> to vector<16x1xf32>
    %619 = math.log %618 : vector<16x1xf32>
    %620 = arith.addf %619, %613 : vector<16x1xf32>
    %621 = tpu.iota {dimensions = array<i32: 1>} : vector<16x128xi32>
    %622 = vector.broadcast %611 : vector<16x1xi32> to vector<16x128xi32>
    %623 = arith.cmpi eq, %621, %622 : vector<16x128xi32>
    %cst_433 = arith.constant 0.000000e+00 : f32
    %624 = vector.broadcast %cst_433 : f32 to vector<16x128xf32>
    %625 = arith.select %623, %609, %624 : vector<16x128xi1>, vector<16x128xf32>
    %cst_434 = arith.constant dense<0.000000e+00> : vector<16xf32>
    %626 = vector.multi_reduction <add>, %625, %cst_434 [1] : vector<16x128xf32> to vector<16xf32>
    %627 = vector.shape_cast %626 : vector<16xf32> to vector<16x1xf32>
    %c-1_i32 = arith.constant -1 : i32
    %628 = vector.broadcast %c-1_i32 : i32 to vector<16x1xi32>
    %629 = arith.cmpi ne, %611, %628 : vector<16x1xi32>
    %630 = arith.subf %620, %627 : vector<16x1xf32>
    %cst_435 = arith.constant 0.000000e+00 : f32
    %631 = vector.broadcast %cst_435 : f32 to vector<16x1xf32>
    %632 = arith.select %629, %630, %631 : vector<16x1xi1>, vector<16x1xf32>
    %633 = vector.shape_cast %632 : vector<16x1xf32> to vector<1x16x1xf32>
    %cst_436 = arith.constant dense<0.000000e+00> : vector<1xf32>
    %634 = vector.multi_reduction <add>, %633, %cst_436 [1, 2] : vector<1x16x1xf32> to vector<1xf32>
    %635 = vector.shape_cast %634 : vector<1xf32> to vector<1x1x1xf32>
    %636 = vector.extract %635[0, 0, 0] : f32 from vector<1x1x1xf32>
    %637 = arith.extui %629 : vector<16x1xi1> to vector<16x1xi32>
    %638 = arith.sitofp %637 : vector<16x1xi32> to vector<16x1xf32>
    %639 = vector.shape_cast %638 : vector<16x1xf32> to vector<1x16x1xf32>
    %cst_437 = arith.constant dense<0.000000e+00> : vector<1xf32>
    %640 = vector.multi_reduction <add>, %639, %cst_437 [1, 2] : vector<1x16x1xf32> to vector<1xf32>
    %641 = vector.shape_cast %640 : vector<1xf32> to vector<1x1x1xf32>
    %642 = vector.extract %641[0, 0, 0] : f32 from vector<1x1x1xf32>
    %c0_438 = arith.constant 0 : index
    %c0_439 = arith.constant 0 : index
    %643 = vector.load %arg3[%c0_438, %c0_439] : memref<2x1xi32, #tpu.memory_space<vmem>>, vector<2x1xi32>
    %cst_440 = arith.constant dense<0xFF800000> : vector<2xf32>
    %644 = vector.multi_reduction <maximumf>, %562, %cst_440 [1] : vector<2x128xf32> to vector<2xf32>
    %645 = vector.shape_cast %644 : vector<2xf32> to vector<2x1xf32>
    %646 = vector.broadcast %645 : vector<2x1xf32> to vector<2x128xf32>
    %647 = arith.subf %562, %646 : vector<2x128xf32>
    %648 = math.exp %647 : vector<2x128xf32>
    %cst_441 = arith.constant dense<0.000000e+00> : vector<2xf32>
    %649 = vector.multi_reduction <add>, %648, %cst_441 [1] : vector<2x128xf32> to vector<2xf32>
    %650 = vector.shape_cast %649 : vector<2xf32> to vector<2x1xf32>
    %651 = math.log %650 : vector<2x1xf32>
    %652 = arith.addf %651, %645 : vector<2x1xf32>
    %653 = tpu.iota {dimensions = array<i32: 1>} : vector<2x128xi32>
    %654 = vector.broadcast %643 : vector<2x1xi32> to vector<2x128xi32>
    %655 = arith.cmpi eq, %653, %654 : vector<2x128xi32>
    %cst_442 = arith.constant 0.000000e+00 : f32
    %656 = vector.broadcast %cst_442 : f32 to vector<2x128xf32>
    %657 = arith.select %655, %562, %656 : vector<2x128xi1>, vector<2x128xf32>
    %cst_443 = arith.constant dense<0.000000e+00> : vector<2xf32>
    %658 = vector.multi_reduction <add>, %657, %cst_443 [1] : vector<2x128xf32> to vector<2xf32>
    %659 = vector.shape_cast %658 : vector<2xf32> to vector<2x1xf32>
    %c-1_i32_444 = arith.constant -1 : i32
    %660 = vector.broadcast %c-1_i32_444 : i32 to vector<2x1xi32>
    %661 = arith.cmpi ne, %643, %660 : vector<2x1xi32>
    %662 = arith.subf %652, %659 : vector<2x1xf32>
    %cst_445 = arith.constant 0.000000e+00 : f32
    %663 = vector.broadcast %cst_445 : f32 to vector<2x1xf32>
    %664 = arith.select %661, %662, %663 : vector<2x1xi1>, vector<2x1xf32>
    %665 = vector.shape_cast %664 : vector<2x1xf32> to vector<1x2x1xf32>
    %cst_446 = arith.constant dense<0.000000e+00> : vector<1xf32>
    %666 = vector.multi_reduction <add>, %665, %cst_446 [1, 2] : vector<1x2x1xf32> to vector<1xf32>
    %667 = vector.shape_cast %666 : vector<1xf32> to vector<1x1x1xf32>
    %668 = vector.extract %667[0, 0, 0] : f32 from vector<1x1x1xf32>
    %669 = arith.extui %661 : vector<2x1xi1> to vector<2x1xi32>
    %670 = arith.sitofp %669 : vector<2x1xi32> to vector<2x1xf32>
    %671 = vector.shape_cast %670 : vector<2x1xf32> to vector<1x2x1xf32>
    %cst_447 = arith.constant dense<0.000000e+00> : vector<1xf32>
    %672 = vector.multi_reduction <add>, %671, %cst_447 [1, 2] : vector<1x2x1xf32> to vector<1xf32>
    %673 = vector.shape_cast %672 : vector<1xf32> to vector<1x1x1xf32>
    %674 = vector.extract %673[0, 0, 0] : f32 from vector<1x1x1xf32>
    %c0_448 = arith.constant 0 : index
    %675 = memref.load %arg34[%c0_448] : memref<4xf32, #tpu.memory_space<smem>>
    memref.store %636, %arg34[%c0_448] : memref<4xf32, #tpu.memory_space<smem>>
    %c1_449 = arith.constant 1 : index
    %676 = memref.load %arg34[%c1_449] : memref<4xf32, #tpu.memory_space<smem>>
    memref.store %642, %arg34[%c1_449] : memref<4xf32, #tpu.memory_space<smem>>
    %c2_450 = arith.constant 2 : index
    %677 = memref.load %arg34[%c2_450] : memref<4xf32, #tpu.memory_space<smem>>
    memref.store %668, %arg34[%c2_450] : memref<4xf32, #tpu.memory_space<smem>>
    %c3_451 = arith.constant 3 : index
    %678 = memref.load %arg34[%c3_451] : memref<4xf32, #tpu.memory_space<smem>>
    memref.store %674, %arg34[%c3_451] : memref<4xf32, #tpu.memory_space<smem>>
    return
  }
}

</mosaic_0001>

<llo_original>
// kernel: tpu_custom_call.1
$region0: #{tpu_custom_call.1}
  #allocation0 [shape = 'u32[]', space=smem, size = 0x4, offset = 0x4, fixed_abs, tag = 'smem constant byte address 0x4 - core index']
  #allocation1 [shape = 'u32[144,128]{1,0:T(1,128)}', space=vmem, size = 0x12000, scoped, tag = 'internal scratch']
  %s0 = inlined_call_operand.smem [shape: u32[35], index: -1, kind: input, shape index: {}]
  %s1 = sld [smem:[%s0]]
  %s2 = scalar_lea.smem %s0, 1
  %s3 = sld [smem:[%s2]]
  %s4 = scalar_lea.smem %s0, 2
  %s5 = sld [smem:[%s4]]
  %s6 = scalar_lea.smem %s0, 3
  %s7 = sld [smem:[%s6]]
  %s8 = scalar_lea.smem %s0, 4
  %s9 = sld [smem:[%s8]]
  %s10 = scalar_lea.smem %s0, 5
  %s11 = sld [smem:[%s10]]
  %s12 = scalar_lea.smem %s0, 6
  %s13 = sld [smem:[%s12]]
  %s14 = scalar_lea.smem %s0, 7
  %s15 = sld [smem:[%s14]]
  %s16 = scalar_lea.smem %s0, 8
  %s17 = sld [smem:[%s16]]
  %s18 = scalar_lea.smem %s0, 9
  %s19 = sld [smem:[%s18]]
  %s20 = scalar_lea.smem %s0, 10
  %s21 = sld [smem:[%s20]]
  %s22 = scalar_lea.smem %s0, 11
  %s23 = sld [smem:[%s22]]
  %s24 = scalar_lea.smem %s0, 12
  %s25 = sld [smem:[%s24]]
  %s26 = scalar_lea.smem %s0, 13
  %s27 = sld [smem:[%s26]]
  %s28 = scalar_lea.smem %s0, 14
  %s29 = sld [smem:[%s28]]
  %s30 = scalar_lea.smem %s0, 15
  %s31 = sld [smem:[%s30]]
  %s32 = scalar_lea.smem %s0, 16
  %s33 = sld [smem:[%s32]]
  %s34 = scalar_lea.smem %s0, 17
  %s35 = sld [smem:[%s34]]
  %s36 = scalar_lea.smem %s0, 18
  %s37 = sld [smem:[%s36]]
  %s38 = scalar_lea.smem %s0, 19
  %s39 = sld [smem:[%s38]]
  %s40 = scalar_lea.smem %s0, 20
  %s41 = sld [smem:[%s40]]
  %s42 = scalar_lea.smem %s0, 21
  %s43 = sld [smem:[%s42]]
  %s44 = scalar_lea.smem %s0, 22
  %s45 = sld [smem:[%s44]]
  %s46 = scalar_lea.smem %s0, 23
  %s47 = sld [smem:[%s46]]
  %s48 = scalar_lea.smem %s0, 24
  %s49 = sld [smem:[%s48]]
  %s50 = scalar_lea.smem %s0, 25
  %s51 = sld [smem:[%s50]]
  %s52 = scalar_lea.smem %s0, 26
  %s53 = sld [smem:[%s52]]
  %s54 = scalar_lea.smem %s0, 27
  %s55 = sld [smem:[%s54]]
  %s56 = scalar_lea.smem %s0, 28
  %s57 = sld [smem:[%s56]]
  %s58 = scalar_lea.smem %s0, 29
  %s59 = sld [smem:[%s58]]
  %s60 = scalar_lea.smem %s0, 30
  %s61 = sld [smem:[%s60]]
  %s62 = scalar_lea.smem %s0, 31
  %s63 = sld [smem:[%s62]]
  %s64 = scalar_lea.smem %s0, 32
  %s65 = sld [smem:[%s64]]
  %s66 = scalar_lea.smem %s0, 33
  %s67 = sld [smem:[%s66]]
  %s68 = scalar_lea.smem %s0, 34
  %s69 = sld [smem:[%s68]]
  %70 = xla_tuple %s65, %s67, %s69
  %s71 = sld [smem:[#allocation0]]
  $region154: #{tpu_custom_call.1} parent=0
    _
  %s73 = ssub.s32 1, %s71
  %s74 = scalar_select 0, %s73, %s71
  $region1: #{tpu_custom_call.1} parent=0
    #allocation2 [shape = 'u8[8192]{0}', space=vmem, size = 0x2000, scoped, tag = 'output window, operand 0, single buffered']
    #allocation3 [shape = 's32[1]{0}', space=sflag, size = 0x4, scoped, tag = 'scoped memory for tpu_custom_call.1']
    #allocation4 [shape = 's32[1]{0}', space=sflag, size = 0x4, scoped, tag = 'scoped memory for tpu_custom_call.1']
    #allocation5 [shape = 'u8[1024]{0}', space=vmem, size = 0x400, scoped, tag = 'output window, operand 1, single buffered']
    #allocation6 [shape = 's32[1]{0}', space=sflag, size = 0x4, scoped, tag = 'scoped memory for tpu_custom_call.1']
    #allocation7 [shape = 'u8[512]{0}', space=smem, size = 0x200, scoped, tag = 'output window, operand 2, single buffered']
    %75 = vsyncpa [#allocation3], 0
    %76 = vsyncpa [#allocation6], 0
    %77 = vsyncpa [#allocation4], 0
    // Predicated region
    $region2: #{tpu_custom_call.1} parent=1 // pred_check
      _
    $region3: #{tpu_custom_call.1} parent=1 // pred_check_branch
      %79 = sbr.rel (0) target = $region5
    $region4: #{tpu_custom_call.1} parent=1 // pred_region
      _
    $region5: #{tpu_custom_call.1} parent=1 // pred_fallthru
      _
    // Predicated region
    $region6: #{tpu_custom_call.1} parent=1 // pred_check
      _
    $region7: #{tpu_custom_call.1} parent=1 // pred_check_branch
      %81 = sbr.rel (0) target = $region9
    $region8: #{tpu_custom_call.1} parent=1 // pred_region
      _
    $region9: #{tpu_custom_call.1} parent=1 // pred_fallthru
      _
    // Predicated region
    $region10: #{tpu_custom_call.1} parent=1 // pred_check
      _
    $region11: #{tpu_custom_call.1} parent=1 // pred_check_branch
      %83 = sbr.rel (0) target = $region13
    $region12: #{tpu_custom_call.1} parent=1 // pred_region
      _
    $region13: #{tpu_custom_call.1} parent=1 // pred_fallthru
      _
    // Predicated region
    $region14: #{tpu_custom_call.1} parent=1 // pred_check
      _
    $region15: #{tpu_custom_call.1} parent=1 // pred_check_branch
      %85 = sbr.rel (0) target = $region17
    $region16: #{tpu_custom_call.1} parent=1 // pred_region
      _
    $region17: #{tpu_custom_call.1} parent=1 // pred_fallthru
      _
    // Predicated region
    $region18: #{tpu_custom_call.1} parent=1 // pred_check
      _
    $region19: #{tpu_custom_call.1} parent=1 // pred_check_branch
      %87 = sbr.rel (0) target = $region21
    $region20: #{tpu_custom_call.1} parent=1 // pred_region
      _
    $region21: #{tpu_custom_call.1} parent=1 // pred_fallthru
      _
    // Predicated region
    $region22: #{tpu_custom_call.1} parent=1 // pred_check
      _
    $region23: #{tpu_custom_call.1} parent=1 // pred_check_branch
      %89 = sbr.rel (0) target = $region25
    $region24: #{tpu_custom_call.1} parent=1 // pred_region
      _
    $region25: #{tpu_custom_call.1} parent=1 // pred_fallthru
      _
    // Predicated region
    $region26: #{tpu_custom_call.1} parent=1 // pred_check
      _
    $region27: #{tpu_custom_call.1} parent=1 // pred_check_branch
      %91 = sbr.rel (0) target = $region29
    $region28: #{tpu_custom_call.1} parent=1 // pred_region
      _
    $region29: #{tpu_custom_call.1} parent=1 // pred_fallthru
      _
    // Predicated region
    $region30: #{tpu_custom_call.1} parent=1 // pred_check
      _
    $region31: #{tpu_custom_call.1} parent=1 // pred_check_branch
      %93 = sbr.rel (0) target = $region33
    $region32: #{tpu_custom_call.1} parent=1 // pred_region
      _
    $region33: #{tpu_custom_call.1} parent=1 // pred_fallthru
      _
    // Predicated region
    $region34: #{tpu_custom_call.1} parent=1 // pred_check
      _
    $region35: #{tpu_custom_call.1} parent=1 // pred_check_branch
      %95 = sbr.rel (0) target = $region37
    $region36: #{tpu_custom_call.1} parent=1 // pred_region
      _
    $region37: #{tpu_custom_call.1} parent=1 // pred_fallthru
      _
    // Predicated region
    $region38: #{tpu_custom_call.1} parent=1 // pred_check
      _
    $region39: #{tpu_custom_call.1} parent=1 // pred_check_branch
      %97 = sbr.rel (0) target = $region41
    $region40: #{tpu_custom_call.1} parent=1 // pred_region
      _
    $region41: #{tpu_custom_call.1} parent=1 // pred_fallthru
      _
    // Predicated region
    $region42: #{tpu_custom_call.1} parent=1 // pred_check
      _
    $region43: #{tpu_custom_call.1} parent=1 // pred_check_branch
      %99 = sbr.rel (0) target = $region45
    $region44: #{tpu_custom_call.1} parent=1 // pred_region
      _
    $region45: #{tpu_custom_call.1} parent=1 // pred_fallthru
      _
    // Predicated region
    $region46: #{tpu_custom_call.1} parent=1 // pred_check
      _
    $region47: #{tpu_custom_call.1} parent=1 // pred_check_branch
      %101 = sbr.rel (0) target = $region49
    $region48: #{tpu_custom_call.1} parent=1 // pred_region
      _
    $region49: #{tpu_custom_call.1} parent=1 // pred_fallthru
      _
    // Predicated region
    $region50: #{tpu_custom_call.1} parent=1 // pred_check
      _
    $region51: #{tpu_custom_call.1} parent=1 // pred_check_branch
      %103 = sbr.rel (0) target = $region53
    $region52: #{tpu_custom_call.1} parent=1 // pred_region
      _
    $region53: #{tpu_custom_call.1} parent=1 // pred_fallthru
      _
    // Predicated region
    $region54: #{tpu_custom_call.1} parent=1 // pred_check
      _
    $region55: #{tpu_custom_call.1} parent=1 // pred_check_branch
      %105 = sbr.rel (0) target = $region57
    $region56: #{tpu_custom_call.1} parent=1 // pred_region
      _
    $region57: #{tpu_custom_call.1} parent=1 // pred_fallthru
      _
    // Predicated region
    $region58: #{tpu_custom_call.1} parent=1 // pred_check
      _
    $region59: #{tpu_custom_call.1} parent=1 // pred_check_branch
      %107 = sbr.rel (0) target = $region61
    $region60: #{tpu_custom_call.1} parent=1 // pred_region
      _
    $region61: #{tpu_custom_call.1} parent=1 // pred_fallthru
      _
    // Predicated region
    $region62: #{tpu_custom_call.1} parent=1 // pred_check
      _
    $region63: #{tpu_custom_call.1} parent=1 // pred_check_branch
      %109 = sbr.rel (0) target = $region65
    $region64: #{tpu_custom_call.1} parent=1 // pred_region
      _
    $region65: #{tpu_custom_call.1} parent=1 // pred_fallthru
      _
    // Predicated region
    $region66: #{tpu_custom_call.1} parent=1 // pred_check
      _
    $region67: #{tpu_custom_call.1} parent=1 // pred_check_branch
      %111 = sbr.rel (0) target = $region69
    $region68: #{tpu_custom_call.1} parent=1 // pred_region
      _
    $region69: #{tpu_custom_call.1} parent=1 // pred_fallthru
      _
    // Predicated region
    $region70: #{tpu_custom_call.1} parent=1 // pred_check
      _
    $region71: #{tpu_custom_call.1} parent=1 // pred_check_branch
      %113 = sbr.rel (0) target = $region73
    $region72: #{tpu_custom_call.1} parent=1 // pred_region
      _
    $region73: #{tpu_custom_call.1} parent=1 // pred_fallthru
      _
    // Predicated region
    $region74: #{tpu_custom_call.1} parent=1 // pred_check
      _
    $region75: #{tpu_custom_call.1} parent=1 // pred_check_branch
      %115 = sbr.rel (0) target = $region77
    $region76: #{tpu_custom_call.1} parent=1 // pred_region
      _
    $region77: #{tpu_custom_call.1} parent=1 // pred_fallthru
      _
    // Predicated region
    $region78: #{tpu_custom_call.1} parent=1 // pred_check
      _
    $region79: #{tpu_custom_call.1} parent=1 // pred_check_branch
      %117 = sbr.rel (0) target = $region81
    $region80: #{tpu_custom_call.1} parent=1 // pred_region
      _
    $region81: #{tpu_custom_call.1} parent=1 // pred_fallthru
      _
    // Predicated region
    $region82: #{tpu_custom_call.1} parent=1 // pred_check
      _
    $region83: #{tpu_custom_call.1} parent=1 // pred_check_branch
      %119 = sbr.rel (0) target = $region85
    $region84: #{tpu_custom_call.1} parent=1 // pred_region
      _
    $region85: #{tpu_custom_call.1} parent=1 // pred_fallthru
      _
    // Predicated region
    $region86: #{tpu_custom_call.1} parent=1 // pred_check
      _
    $region87: #{tpu_custom_call.1} parent=1 // pred_check_branch
      %121 = sbr.rel (0) target = $region89
    $region88: #{tpu_custom_call.1} parent=1 // pred_region
      _
    $region89: #{tpu_custom_call.1} parent=1 // pred_fallthru
      _
    // Predicated region
    $region90: #{tpu_custom_call.1} parent=1 // pred_check
      _
    $region91: #{tpu_custom_call.1} parent=1 // pred_check_branch
      %123 = sbr.rel (0) target = $region93
    $region92: #{tpu_custom_call.1} parent=1 // pred_region
      _
    $region93: #{tpu_custom_call.1} parent=1 // pred_fallthru
      _
    // Predicated region
    $region94: #{tpu_custom_call.1} parent=1 // pred_check
      _
    $region95: #{tpu_custom_call.1} parent=1 // pred_check_branch
      %125 = sbr.rel (0) target = $region97
    $region96: #{tpu_custom_call.1} parent=1 // pred_region
      _
    $region97: #{tpu_custom_call.1} parent=1 // pred_fallthru
      _
    // Predicated region
    $region98: #{tpu_custom_call.1} parent=1 // pred_check
      _
    $region99: #{tpu_custom_call.1} parent=1 // pred_check_branch
      %127 = sbr.rel (0) target = $region101
    $region100: #{tpu_custom_call.1} parent=1 // pred_region
      _
    $region101: #{tpu_custom_call.1} parent=1 // pred_fallthru
      _
    // Predicated region
    $region102: #{tpu_custom_call.1} parent=1 // pred_check
      _
    $region103: #{tpu_custom_call.1} parent=1 // pred_check_branch
      %129 = sbr.rel (0) target = $region105
    $region104: #{tpu_custom_call.1} parent=1 // pred_region
      _
    $region105: #{tpu_custom_call.1} parent=1 // pred_fallthru
      _
    // Predicated region
    $region106: #{tpu_custom_call.1} parent=1 // pred_check
      _
    $region107: #{tpu_custom_call.1} parent=1 // pred_check_branch
      %131 = sbr.rel (0) target = $region109
    $region108: #{tpu_custom_call.1} parent=1 // pred_region
      _
    $region109: #{tpu_custom_call.1} parent=1 // pred_fallthru
      _
    // Predicated region
    $region110: #{tpu_custom_call.1} parent=1 // pred_check
      _
    $region111: #{tpu_custom_call.1} parent=1 // pred_check_branch
      %133 = sbr.rel (0) target = $region113
    $region112: #{tpu_custom_call.1} parent=1 // pred_region
      _
    $region113: #{tpu_custom_call.1} parent=1 // pred_fallthru
      _
    // Predicated region
    $region114: #{tpu_custom_call.1} parent=1 // pred_check
      _
    $region115: #{tpu_custom_call.1} parent=1 // pred_check_branch
      %135 = sbr.rel (0) target = $region117
    $region116: #{tpu_custom_call.1} parent=1 // pred_region
      _
    $region117: #{tpu_custom_call.1} parent=1 // pred_fallthru
      _
    // Predicated region
    $region118: #{tpu_custom_call.1} parent=1 // pred_check
      _
    $region119: #{tpu_custom_call.1} parent=1 // pred_check_branch
      %137 = sbr.rel (0) target = $region121
    $region120: #{tpu_custom_call.1} parent=1 // pred_region
      _
    $region121: #{tpu_custom_call.1} parent=1 // pred_fallthru
      _
    // Predicated region
    $region122: #{tpu_custom_call.1} parent=1 // pred_check
      _
    $region123: #{tpu_custom_call.1} parent=1 // pred_check_branch
      %139 = sbr.rel (0) target = $region125
    $region124: #{tpu_custom_call.1} parent=1 // pred_region
      _
    $region125: #{tpu_custom_call.1} parent=1 // pred_fallthru
      _
    // Predicated region
    $region126: #{tpu_custom_call.1} parent=1 // pred_check
      _
    $region127: #{tpu_custom_call.1} parent=1 // pred_check_branch
      %141 = sbr.rel (0) target = $region129
    $region128: #{tpu_custom_call.1} parent=1 // pred_region
      _
    $region129: #{tpu_custom_call.1} parent=1 // pred_fallthru
      _
    %v143 = vld [vmem:[%s1] sm:$0xff]
    %v144 = vld [vmem:[%s1 + $0x8] sm:$0xff]
    %v145 = vld [vmem:[%s9] sm:$0x1]
    %v146 = vld [vmem:[%s11] sm:$0x1]
    %vm147 = vcmask 261120
    %v148 = vsel %vm147, %v143, 0.0
    %149 = vadd.xlane.f32.xlu0 %v148
    %v150 = vpop.xlane.xlu0 %149
    %v151 = vsel %vm147, %v144, 0.0
    %152 = vadd.xlane.f32.xlu0 %v151
    %v153 = vpop.xlane.xlu0 %152
    %v154 = vrcp.pop 32.0
    %v155 = vmul.f32 %v150, %v154
    %v156 = vmul.f32 %v153, %v154
    %v157 = vsub.f32 %v143, %v155
    %v158 = vsub.f32 %v144, %v156
    %v159 = vmul.f32 %v157, %v157
    %v160 = vmul.f32 %v158, %v158
    %v161 = vsel %vm147, %v159, 0.0
    %162 = vadd.xlane.f32.xlu0 %v161
    %v163 = vpop.xlane.xlu0 %162
    %v164 = vsel %vm147, %v160, 0.0
    %165 = vadd.xlane.f32.xlu0 %v164
    %v166 = vpop.xlane.xlu0 %165
    %v167 = vmul.f32 %v163, %v154
    %v168 = vmul.f32 %v166, %v154
    %v169 = vadd.f32 %v167, 1e-12
    %v170 = vadd.f32 %v168, 1e-12
    %v171 = vrsqrt.pop %v169
    %v172 = vrsqrt.pop %v170
    %v173 = vmul.f32 %v157, %v171
    %v174 = vmul.f32 %v158, %v172
    %v176 = vlaneseq
    %v177 = vshrl.u32 %v176, 7
    %v178 = vsub.s32 0, %v177
    %v179 = vrot.slane %v145, %v178
    %v181 = vmul.f32 %v173, %v179
    %v182 = vmul.f32 %v174, %v179
    %v184 = vlaneseq
    %v185 = vshrl.u32 %v184, 7
    %v186 = vsub.s32 0, %v185
    %v187 = vrot.slane %v146, %v186
    %v189 = vadd.f32 %v181, %v187
    %v190 = vadd.f32 %v182, %v187
    %v191 = vpack.c.bf16 %v190, %v189
    %v192 = vld [vmem:[%s3] sm:$0xff]
    %v193 = vld [vmem:[%s3 + $0x8] sm:$0xff]
    %v194 = vld [vmem:[%s13] sm:$0xf]
    %v195 = vld [vmem:[%s13 + $0x4] sm:$0xf]
    %v196 = vld [vmem:[%s13 + $0x8] sm:$0xf]
    %v197 = vld [vmem:[%s13 + $0xc] sm:$0xf]
    %v198 = vld [vmem:[%s19] sm:$0x1]
    %v200 = vlaneseq
    %v201 = vshrl.u32 %v200, 7
    %v202 = vsub.s32 0, %v201
    %v203 = vrot.slane %v198, %v202
    %v209 = vunpack.c.l.b16 %v194
    %v210 = vunpack.c.l.b16 %v195
    %v211 = vunpack.c.l.b16 %v196
    %v212 = vunpack.c.l.b16 %v197
    %v213 = vpack.c.b16 %v210, %v209
    %v214 = vpack.c.b16 %v212, %v211
    %v218 = vsel %vm147, %v191, 0
    %220 = vmatprep.subr.bf16.mxu0 0
    %221 = vmatpush1.bf16.msra.mxu0 %v213
    %222 = vmatprep.subr.bf16.mxu0 0
    %223 = vmatpush1.bf16.msra.mxu0 %v214
    %224 = vmatprep.subr.bf16.mxu0 0
    %225 = vmatpush1.bf16.msra.mxu0 0
    %226 = vmatprep.subr.bf16.mxu0 0
    %227 = vmatpush1.bf16.msra.mxu0 0
    %228 = vmatprep.subr.bf16.mxu0 0
    %229 = vmatpush1.bf16.msra.mxu0 0
    %230 = vmatprep.subr.bf16.mxu0 0
    %231 = vmatpush1.bf16.msra.mxu0 0
    %232 = vmatprep.subr.bf16.mxu0 0
    %233 = vmatpush1.bf16.msra.mxu0 0
    %234 = vmatprep.subr.bf16.mxu0 0
    %235 = vmatpush1.bf16.msra.mxu0 0
    %236 = vmatprep.subr.bf16.mxu0 0
    %237 = vmatpush1.bf16.msra.mxu0 0
    %238 = vmatprep.subr.bf16.mxu0 0
    %239 = vmatpush1.bf16.msra.mxu0 0
    %240 = vmatprep.subr.bf16.mxu0 0
    %241 = vmatpush1.bf16.msra.mxu0 0
    %242 = vmatprep.subr.bf16.mxu0 0
    %243 = vmatpush1.bf16.msra.mxu0 0
    %244 = vmatprep.subr.bf16.mxu0 0
    %245 = vmatpush1.bf16.msra.mxu0 0
    %246 = vmatprep.subr.bf16.mxu0 0
    %247 = vmatpush1.bf16.msra.mxu0 0
    %248 = vmatprep.subr.bf16.mxu0 0
    %249 = vmatpush1.bf16.msra.mxu0 0
    %250 = vmatprep.subr.bf16.mxu0 0
    %251 = vmatpush1.bf16.msra.mxu0 0
    %252 = vmatprep.mubr.bf16.mxu0 0
    %253 = vmatmul.mubr.bf16.gmra.mrb[0].mxu0 %v218
    %v254 = vpop.f32.mrb[0].mxu0
    %v255 = vadd.f32 %v203, %v254
    %v256 = vpop.f32.mrb[0].mxu0
    %v257 = vpop.f32.mrb[0].mxu0
    %v258 = vadd.f32 %v203, %v257
    %v259 = vpop.f32.mrb[0].mxu0
    %260 = vdwg.mxu0
    %v261 = vld [vmem:[%s15] sm:$0xf]
    %v262 = vld [vmem:[%s15 + $0x4] sm:$0xf]
    %v263 = vld [vmem:[%s15 + $0x8] sm:$0xf]
    %v264 = vld [vmem:[%s15 + $0xc] sm:$0xf]
    %v265 = vld [vmem:[%s21] sm:$0x1]
    %v267 = vlaneseq
    %v268 = vshrl.u32 %v267, 7
    %v269 = vsub.s32 0, %v268
    %v270 = vrot.slane %v265, %v269
    %v276 = vunpack.c.l.b16 %v261
    %v277 = vunpack.c.l.b16 %v262
    %v278 = vunpack.c.l.b16 %v263
    %v279 = vunpack.c.l.b16 %v264
    %v280 = vpack.c.b16 %v277, %v276
    %v281 = vpack.c.b16 %v279, %v278
    %284 = vmatprep.subr.bf16.mxu0 0
    %285 = vmatpush1.bf16.msra.mxu0 %v280
    %286 = vmatprep.subr.bf16.mxu0 0
    %287 = vmatpush1.bf16.msra.mxu0 %v281
    %288 = vmatprep.subr.bf16.mxu0 0
    %289 = vmatpush1.bf16.msra.mxu0 0
    %290 = vmatprep.subr.bf16.mxu0 0
    %291 = vmatpush1.bf16.msra.mxu0 0
    %292 = vmatprep.subr.bf16.mxu0 0
    %293 = vmatpush1.bf16.msra.mxu0 0
    %294 = vmatprep.subr.bf16.mxu0 0
    %295 = vmatpush1.bf16.msra.mxu0 0
    %296 = vmatprep.subr.bf16.mxu0 0
    %297 = vmatpush1.bf16.msra.mxu0 0
    %298 = vmatprep.subr.bf16.mxu0 0
    %299 = vmatpush1.bf16.msra.mxu0 0
    %300 = vmatprep.subr.bf16.mxu0 0
    %301 = vmatpush1.bf16.msra.mxu0 0
    %302 = vmatprep.subr.bf16.mxu0 0
    %303 = vmatpush1.bf16.msra.mxu0 0
    %304 = vmatprep.subr.bf16.mxu0 0
    %305 = vmatpush1.bf16.msra.mxu0 0
    %306 = vmatprep.subr.bf16.mxu0 0
    %307 = vmatpush1.bf16.msra.mxu0 0
    %308 = vmatprep.subr.bf16.mxu0 0
    %309 = vmatpush1.bf16.msra.mxu0 0
    %310 = vmatprep.subr.bf16.mxu0 0
    %311 = vmatpush1.bf16.msra.mxu0 0
    %312 = vmatprep.subr.bf16.mxu0 0
    %313 = vmatpush1.bf16.msra.mxu0 0
    %314 = vmatprep.subr.bf16.mxu0 0
    %315 = vmatpush1.bf16.msra.mxu0 0
    %316 = vmatprep.mubr.bf16.mxu0 0
    %317 = vmatmul.mubr.bf16.gmra.mrb[0].mxu0 %v218
    %v318 = vpop.f32.mrb[0].mxu0
    %v319 = vadd.f32 %v270, %v318
    %v320 = vpop.f32.mrb[0].mxu0
    %v321 = vpop.f32.mrb[0].mxu0
    %v322 = vadd.f32 %v270, %v321
    %v323 = vpop.f32.mrb[0].mxu0
    %324 = vdwg.mxu0
    %v325 = vld [vmem:[%s17] sm:$0xf]
    %v326 = vld [vmem:[%s17 + $0x4] sm:$0xf]
    %v327 = vld [vmem:[%s17 + $0x8] sm:$0xf]
    %v328 = vld [vmem:[%s17 + $0xc] sm:$0xf]
    %v329 = vld [vmem:[%s23] sm:$0x1]
    %v331 = vlaneseq
    %v332 = vshrl.u32 %v331, 7
    %v333 = vsub.s32 0, %v332
    %v334 = vrot.slane %v329, %v333
    %v340 = vunpack.c.l.b16 %v325
    %v341 = vunpack.c.l.b16 %v326
    %v342 = vunpack.c.l.b16 %v327
    %v343 = vunpack.c.l.b16 %v328
    %v344 = vpack.c.b16 %v341, %v340
    %v345 = vpack.c.b16 %v343, %v342
    %348 = vmatprep.subr.bf16.mxu0 0
    %349 = vmatpush1.bf16.msra.mxu0 %v344
    %350 = vmatprep.subr.bf16.mxu0 0
    %351 = vmatpush1.bf16.msra.mxu0 %v345
    %352 = vmatprep.subr.bf16.mxu0 0
    %353 = vmatpush1.bf16.msra.mxu0 0
    %354 = vmatprep.subr.bf16.mxu0 0
    %355 = vmatpush1.bf16.msra.mxu0 0
    %356 = vmatprep.subr.bf16.mxu0 0
    %357 = vmatpush1.bf16.msra.mxu0 0
    %358 = vmatprep.subr.bf16.mxu0 0
    %359 = vmatpush1.bf16.msra.mxu0 0
    %360 = vmatprep.subr.bf16.mxu0 0
    %361 = vmatpush1.bf16.msra.mxu0 0
    %362 = vmatprep.subr.bf16.mxu0 0
    %363 = vmatpush1.bf16.msra.mxu0 0
    %364 = vmatprep.subr.bf16.mxu0 0
    %365 = vmatpush1.bf16.msra.mxu0 0
    %366 = vmatprep.subr.bf16.mxu0 0
    %367 = vmatpush1.bf16.msra.mxu0 0
    %368 = vmatprep.subr.bf16.mxu0 0
    %369 = vmatpush1.bf16.msra.mxu0 0
    %370 = vmatprep.subr.bf16.mxu0 0
    %371 = vmatpush1.bf16.msra.mxu0 0
    %372 = vmatprep.subr.bf16.mxu0 0
    %373 = vmatpush1.bf16.msra.mxu0 0
    %374 = vmatprep.subr.bf16.mxu0 0
    %375 = vmatpush1.bf16.msra.mxu0 0
    %376 = vmatprep.subr.bf16.mxu0 0
    %377 = vmatpush1.bf16.msra.mxu0 0
    %378 = vmatprep.subr.bf16.mxu0 0
    %379 = vmatpush1.bf16.msra.mxu0 0
    %380 = vmatprep.mubr.bf16.mxu0 0
    %381 = vmatmul.mubr.bf16.gmra.mrb[0].mxu0 %v218
    %v382 = vpop.f32.mrb[0].mxu0
    %v383 = vadd.f32 %v334, %v382
    %v384 = vpop.f32.mrb[0].mxu0
    %v385 = vpop.f32.mrb[0].mxu0
    %v386 = vadd.f32 %v334, %v385
    %v387 = vpop.f32.mrb[0].mxu0
    %388 = vdwg.mxu0
    %v389 = vpack.c.bf16 %v258, %v255
    %v390 = vpack.c.bf16 %v322, %v319
    %vm391 = vcmask 64512
    %v393 = vsel %vm391, %v389, 0
    %v396 = vsel %vm391, %v390, 0
    %398 = vmatprep.subr.bf16.mxu0 0
    %399 = vmatpush1.bf16.xpose.msra.mxu0 %v396
    %400 = vmatprep.subr.bf16.mxu0 0
    %401 = vmatpush1.bf16.xpose.msra.mxu0 0
    %402 = vmatprep.subr.bf16.mxu0 0
    %403 = vmatpush1.bf16.xpose.msra.mxu0 0
    %404 = vmatprep.subr.bf16.mxu0 0
    %405 = vmatpush1.bf16.xpose.msra.mxu0 0
    %406 = vmatprep.subr.bf16.mxu0 0
    %407 = vmatpush1.bf16.xpose.msra.mxu0 0
    %408 = vmatprep.subr.bf16.mxu0 0
    %409 = vmatpush1.bf16.xpose.msra.mxu0 0
    %410 = vmatprep.subr.bf16.mxu0 0
    %411 = vmatpush1.bf16.xpose.msra.mxu0 0
    %412 = vmatprep.subr.bf16.mxu0 0
    %413 = vmatpush1.bf16.xpose.msra.mxu0 0
    %414 = vmatprep.subr.bf16.mxu0 0
    %415 = vmatpush1.bf16.xpose.msra.mxu0 0
    %416 = vmatprep.subr.bf16.mxu0 0
    %417 = vmatpush1.bf16.xpose.msra.mxu0 0
    %418 = vmatprep.subr.bf16.mxu0 0
    %419 = vmatpush1.bf16.xpose.msra.mxu0 0
    %420 = vmatprep.subr.bf16.mxu0 0
    %421 = vmatpush1.bf16.xpose.msra.mxu0 0
    %422 = vmatprep.subr.bf16.mxu0 0
    %423 = vmatpush1.bf16.xpose.msra.mxu0 0
    %424 = vmatprep.subr.bf16.mxu0 0
    %425 = vmatpush1.bf16.xpose.msra.mxu0 0
    %426 = vmatprep.subr.bf16.mxu0 0
    %427 = vmatpush1.bf16.xpose.msra.mxu0 0
    %428 = vmatprep.subr.bf16.mxu0 0
    %429 = vmatpush1.bf16.xpose.msra.mxu0 0
    %430 = vmatprep.mubr.bf16.mxu0 0
    %431 = vmatmul.mubr.bf16.gmra.mrb[0].mxu0 %v393
    %v432 = vpop.f32.mrb[0].mxu0
    %v433 = vadd.f32 0.0, %v432
    %v434 = vpop.f32.mrb[0].mxu0
    %v435 = vpop.f32.mrb[0].mxu0
    %v436 = vadd.f32 0.0, %v435
    %v437 = vpop.f32.mrb[0].mxu0
    %438 = vdwg.mxu0
    %v439 = vmul.f32 %v433, 0.35355338
    %v440 = vmul.f32 %v436, 0.35355338
    %v441 = vadd.f32 %v439, %v192
    %v442 = vadd.f32 %v440, %v193
    %vm443 = vcmask 130048
    %v444 = vsel %vm443, %v441, -inf
    %445 = vmax.xlane.f32.xlu0 %v444
    %v446 = vpop.xlane.xlu0 %445
    %v447 = vsel %vm443, %v442, -inf
    %448 = vmax.xlane.f32.xlu0 %v447
    %v449 = vpop.xlane.xlu0 %448
    %v450 = vsub.f32 %v441, %v446
    %v451 = vsub.f32 %v442, %v449
    %v452 = vmul.f32 %v450, 1.442695
    %v453 = vpow.pop %v452
    %v454 = vmul.f32 %v451, 1.442695
    %v455 = vpow.pop %v454
    %v456 = vsel %vm443, %v453, 0.0
    %457 = vadd.xlane.f32.xlu0 %v456
    %v458 = vpop.xlane.xlu0 %457
    %v459 = vsel %vm443, %v455, 0.0
    %460 = vadd.xlane.f32.xlu0 %v459
    %v461 = vpop.xlane.xlu0 %460
    %v462 = vrcp.pop %v458
    %v463 = vmul.f32 %v453, %v462
    %v464 = vrcp.pop %v461
    %v465 = vmul.f32 %v455, %v464
    %v466 = vpack.c.bf16 %v465, %v463
    %v467 = vpack.c.bf16 %v386, %v383
    %v469 = vsel %vm443, %v466, 0
    %471 = vmatprep.subr.bf16.mxu0 0
    %472 = vmatpush1.bf16.msra.mxu0 %v467
    %473 = vmatprep.subr.bf16.mxu0 0
    %474 = vmatpush1.bf16.msra.mxu0 0
    %475 = vmatprep.subr.bf16.mxu0 0
    %476 = vmatpush1.bf16.msra.mxu0 0
    %477 = vmatprep.subr.bf16.mxu0 0
    %478 = vmatpush1.bf16.msra.mxu0 0
    %479 = vmatprep.subr.bf16.mxu0 0
    %480 = vmatpush1.bf16.msra.mxu0 0
    %481 = vmatprep.subr.bf16.mxu0 0
    %482 = vmatpush1.bf16.msra.mxu0 0
    %483 = vmatprep.subr.bf16.mxu0 0
    %484 = vmatpush1.bf16.msra.mxu0 0
    %485 = vmatprep.subr.bf16.mxu0 0
    %486 = vmatpush1.bf16.msra.mxu0 0
    %487 = vmatprep.subr.bf16.mxu0 0
    %488 = vmatpush1.bf16.msra.mxu0 0
    %489 = vmatprep.subr.bf16.mxu0 0
    %490 = vmatpush1.bf16.msra.mxu0 0
    %491 = vmatprep.subr.bf16.mxu0 0
    %492 = vmatpush1.bf16.msra.mxu0 0
    %493 = vmatprep.subr.bf16.mxu0 0
    %494 = vmatpush1.bf16.msra.mxu0 0
    %495 = vmatprep.subr.bf16.mxu0 0
    %496 = vmatpush1.bf16.msra.mxu0 0
    %497 = vmatprep.subr.bf16.mxu0 0
    %498 = vmatpush1.bf16.msra.mxu0 0
    %499 = vmatprep.subr.bf16.mxu0 0
    %500 = vmatpush1.bf16.msra.mxu0 0
    %501 = vmatprep.subr.bf16.mxu0 0
    %502 = vmatpush1.bf16.msra.mxu0 0
    %503 = vmatprep.mubr.bf16.mxu0 0
    %504 = vmatmul.mubr.bf16.gmra.mrb[0].mxu0 %v469
    %v505 = vpop.f32.mrb[0].mxu0
    %v506 = vadd.f32 0.0, %v505
    %v507 = vpop.f32.mrb[0].mxu0
    %v508 = vpop.f32.mrb[0].mxu0
    %v509 = vadd.f32 0.0, %v508
    %v510 = vpop.f32.mrb[0].mxu0
    %511 = vdwg.mxu0
    %v512 = vpack.c.bf16 %v509, %v506
    %v513 = vld [vmem:[%s25] sm:$0xf]
    %s514 = scalar_lea.vmem %s13, 16
    %v515 = vld [vmem:[%s514] sm:$0xf]
    %v516 = vld [vmem:[%s514 + $0x4] sm:$0xf]
    %v517 = vld [vmem:[%s514 + $0x8] sm:$0xf]
    %v518 = vld [vmem:[%s514 + $0xc] sm:$0xf]
    %s519 = scalar_lea.vmem %s19, 1
    %v520 = vld [vmem:[%s519] sm:$0x1]
    %v522 = vlaneseq
    %v523 = vshrl.u32 %v522, 7
    %v524 = vsub.s32 0, %v523
    %v525 = vrot.slane %v520, %v524
    %v531 = vunpack.c.l.b16 %v515
    %v532 = vunpack.c.l.b16 %v516
    %v533 = vunpack.c.l.b16 %v517
    %v534 = vunpack.c.l.b16 %v518
    %v535 = vpack.c.b16 %v532, %v531
    %v536 = vpack.c.b16 %v534, %v533
    %539 = vmatprep.subr.bf16.mxu0 0
    %540 = vmatpush1.bf16.msra.mxu0 %v535
    %541 = vmatprep.subr.bf16.mxu0 0
    %542 = vmatpush1.bf16.msra.mxu0 %v536
    %543 = vmatprep.subr.bf16.mxu0 0
    %544 = vmatpush1.bf16.msra.mxu0 0
    %545 = vmatprep.subr.bf16.mxu0 0
    %546 = vmatpush1.bf16.msra.mxu0 0
    %547 = vmatprep.subr.bf16.mxu0 0
    %548 = vmatpush1.bf16.msra.mxu0 0
    %549 = vmatprep.subr.bf16.mxu0 0
    %550 = vmatpush1.bf16.msra.mxu0 0
    %551 = vmatprep.subr.bf16.mxu0 0
    %552 = vmatpush1.bf16.msra.mxu0 0
    %553 = vmatprep.subr.bf16.mxu0 0
    %554 = vmatpush1.bf16.msra.mxu0 0
    %555 = vmatprep.subr.bf16.mxu0 0
    %556 = vmatpush1.bf16.msra.mxu0 0
    %557 = vmatprep.subr.bf16.mxu0 0
    %558 = vmatpush1.bf16.msra.mxu0 0
    %559 = vmatprep.subr.bf16.mxu0 0
    %560 = vmatpush1.bf16.msra.mxu0 0
    %561 = vmatprep.subr.bf16.mxu0 0
    %562 = vmatpush1.bf16.msra.mxu0 0
    %563 = vmatprep.subr.bf16.mxu0 0
    %564 = vmatpush1.bf16.msra.mxu0 0
    %565 = vmatprep.subr.bf16.mxu0 0
    %566 = vmatpush1.bf16.msra.mxu0 0
    %567 = vmatprep.subr.bf16.mxu0 0
    %568 = vmatpush1.bf16.msra.mxu0 0
    %569 = vmatprep.subr.bf16.mxu0 0
    %570 = vmatpush1.bf16.msra.mxu0 0
    %571 = vmatprep.mubr.bf16.mxu0 0
    %572 = vmatmul.mubr.bf16.gmra.mrb[0].mxu0 %v218
    %v573 = vpop.f32.mrb[0].mxu0
    %v574 = vadd.f32 %v525, %v573
    %v575 = vpop.f32.mrb[0].mxu0
    %v576 = vpop.f32.mrb[0].mxu0
    %v577 = vadd.f32 %v525, %v576
    %v578 = vpop.f32.mrb[0].mxu0
    %579 = vdwg.mxu0
    %s580 = scalar_lea.vmem %s15, 16
    %v581 = vld [vmem:[%s580] sm:$0xf]
    %v582 = vld [vmem:[%s580 + $0x4] sm:$0xf]
    %v583 = vld [vmem:[%s580 + $0x8] sm:$0xf]
    %v584 = vld [vmem:[%s580 + $0xc] sm:$0xf]
    %s585 = scalar_lea.vmem %s21, 1
    %v586 = vld [vmem:[%s585] sm:$0x1]
    %v588 = vlaneseq
    %v589 = vshrl.u32 %v588, 7
    %v590 = vsub.s32 0, %v589
    %v591 = vrot.slane %v586, %v590
    %v597 = vunpack.c.l.b16 %v581
    %v598 = vunpack.c.l.b16 %v582
    %v599 = vunpack.c.l.b16 %v583
    %v600 = vunpack.c.l.b16 %v584
    %v601 = vpack.c.b16 %v598, %v597
    %v602 = vpack.c.b16 %v600, %v599
    %605 = vmatprep.subr.bf16.mxu0 0
    %606 = vmatpush1.bf16.msra.mxu0 %v601
    %607 = vmatprep.subr.bf16.mxu0 0
    %608 = vmatpush1.bf16.msra.mxu0 %v602
    %609 = vmatprep.subr.bf16.mxu0 0
    %610 = vmatpush1.bf16.msra.mxu0 0
    %611 = vmatprep.subr.bf16.mxu0 0
    %612 = vmatpush1.bf16.msra.mxu0 0
    %613 = vmatprep.subr.bf16.mxu0 0
    %614 = vmatpush1.bf16.msra.mxu0 0
    %615 = vmatprep.subr.bf16.mxu0 0
    %616 = vmatpush1.bf16.msra.mxu0 0
    %617 = vmatprep.subr.bf16.mxu0 0
    %618 = vmatpush1.bf16.msra.mxu0 0
    %619 = vmatprep.subr.bf16.mxu0 0
    %620 = vmatpush1.bf16.msra.mxu0 0
    %621 = vmatprep.subr.bf16.mxu0 0
    %622 = vmatpush1.bf16.msra.mxu0 0
    %623 = vmatprep.subr.bf16.mxu0 0
    %624 = vmatpush1.bf16.msra.mxu0 0
    %625 = vmatprep.subr.bf16.mxu0 0
    %626 = vmatpush1.bf16.msra.mxu0 0
    %627 = vmatprep.subr.bf16.mxu0 0
    %628 = vmatpush1.bf16.msra.mxu0 0
    %629 = vmatprep.subr.bf16.mxu0 0
    %630 = vmatpush1.bf16.msra.mxu0 0
    %631 = vmatprep.subr.bf16.mxu0 0
    %632 = vmatpush1.bf16.msra.mxu0 0
    %633 = vmatprep.subr.bf16.mxu0 0
    %634 = vmatpush1.bf16.msra.mxu0 0
    %635 = vmatprep.subr.bf16.mxu0 0
    %636 = vmatpush1.bf16.msra.mxu0 0
    %637 = vmatprep.mubr.bf16.mxu0 0
    %638 = vmatmul.mubr.bf16.gmra.mrb[0].mxu0 %v218
    %v639 = vpop.f32.mrb[0].mxu0
    %v640 = vadd.f32 %v591, %v639
    %v641 = vpop.f32.mrb[0].mxu0
    %v642 = vpop.f32.mrb[0].mxu0
    %v643 = vadd.f32 %v591, %v642
    %v644 = vpop.f32.mrb[0].mxu0
    %645 = vdwg.mxu0
    %s646 = scalar_lea.vmem %s17, 16
    %v647 = vld [vmem:[%s646] sm:$0xf]
    %v648 = vld [vmem:[%s646 + $0x4] sm:$0xf]
    %v649 = vld [vmem:[%s646 + $0x8] sm:$0xf]
    %v650 = vld [vmem:[%s646 + $0xc] sm:$0xf]
    %s651 = scalar_lea.vmem %s23, 1
    %v652 = vld [vmem:[%s651] sm:$0x1]
    %v654 = vlaneseq
    %v655 = vshrl.u32 %v654, 7
    %v656 = vsub.s32 0, %v655
    %v657 = vrot.slane %v652, %v656
    %v663 = vunpack.c.l.b16 %v647
    %v664 = vunpack.c.l.b16 %v648
    %v665 = vunpack.c.l.b16 %v649
    %v666 = vunpack.c.l.b16 %v650
    %v667 = vpack.c.b16 %v664, %v663
    %v668 = vpack.c.b16 %v666, %v665
    %671 = vmatprep.subr.bf16.mxu0 0
    %672 = vmatpush1.bf16.msra.mxu0 %v667
    %673 = vmatprep.subr.bf16.mxu0 0
    %674 = vmatpush1.bf16.msra.mxu0 %v668
    %675 = vmatprep.subr.bf16.mxu0 0
    %676 = vmatpush1.bf16.msra.mxu0 0
    %677 = vmatprep.subr.bf16.mxu0 0
    %678 = vmatpush1.bf16.msra.mxu0 0
    %679 = vmatprep.subr.bf16.mxu0 0
    %680 = vmatpush1.bf16.msra.mxu0 0
    %681 = vmatprep.subr.bf16.mxu0 0
    %682 = vmatpush1.bf16.msra.mxu0 0
    %683 = vmatprep.subr.bf16.mxu0 0
    %684 = vmatpush1.bf16.msra.mxu0 0
    %685 = vmatprep.subr.bf16.mxu0 0
    %686 = vmatpush1.bf16.msra.mxu0 0
    %687 = vmatprep.subr.bf16.mxu0 0
    %688 = vmatpush1.bf16.msra.mxu0 0
    %689 = vmatprep.subr.bf16.mxu0 0
    %690 = vmatpush1.bf16.msra.mxu0 0
    %691 = vmatprep.subr.bf16.mxu0 0
    %692 = vmatpush1.bf16.msra.mxu0 0
    %693 = vmatprep.subr.bf16.mxu0 0
    %694 = vmatpush1.bf16.msra.mxu0 0
    %695 = vmatprep.subr.bf16.mxu0 0
    %696 = vmatpush1.bf16.msra.mxu0 0
    %697 = vmatprep.subr.bf16.mxu0 0
    %698 = vmatpush1.bf16.msra.mxu0 0
    %699 = vmatprep.subr.bf16.mxu0 0
    %700 = vmatpush1.bf16.msra.mxu0 0
    %701 = vmatprep.subr.bf16.mxu0 0
    %702 = vmatpush1.bf16.msra.mxu0 0
    %703 = vmatprep.mubr.bf16.mxu0 0
    %704 = vmatmul.mubr.bf16.gmra.mrb[0].mxu0 %v218
    %v705 = vpop.f32.mrb[0].mxu0
    %v706 = vadd.f32 %v657, %v705
    %v707 = vpop.f32.mrb[0].mxu0
    %v708 = vpop.f32.mrb[0].mxu0
    %v709 = vadd.f32 %v657, %v708
    %v710 = vpop.f32.mrb[0].mxu0
    %711 = vdwg.mxu0
    %v712 = vpack.c.bf16 %v577, %v574
    %v713 = vpack.c.bf16 %v643, %v640
    %v715 = vsel %vm391, %v712, 0
    %v718 = vsel %vm391, %v713, 0
    %720 = vmatprep.subr.bf16.mxu0 0
    %721 = vmatpush1.bf16.xpose.msra.mxu0 %v718
    %722 = vmatprep.subr.bf16.mxu0 0
    %723 = vmatpush1.bf16.xpose.msra.mxu0 0
    %724 = vmatprep.subr.bf16.mxu0 0
    %725 = vmatpush1.bf16.xpose.msra.mxu0 0
    %726 = vmatprep.subr.bf16.mxu0 0
    %727 = vmatpush1.bf16.xpose.msra.mxu0 0
    %728 = vmatprep.subr.bf16.mxu0 0
    %729 = vmatpush1.bf16.xpose.msra.mxu0 0
    %730 = vmatprep.subr.bf16.mxu0 0
    %731 = vmatpush1.bf16.xpose.msra.mxu0 0
    %732 = vmatprep.subr.bf16.mxu0 0
    %733 = vmatpush1.bf16.xpose.msra.mxu0 0
    %734 = vmatprep.subr.bf16.mxu0 0
    %735 = vmatpush1.bf16.xpose.msra.mxu0 0
    %736 = vmatprep.subr.bf16.mxu0 0
    %737 = vmatpush1.bf16.xpose.msra.mxu0 0
    %738 = vmatprep.subr.bf16.mxu0 0
    %739 = vmatpush1.bf16.xpose.msra.mxu0 0
    %740 = vmatprep.subr.bf16.mxu0 0
    %741 = vmatpush1.bf16.xpose.msra.mxu0 0
    %742 = vmatprep.subr.bf16.mxu0 0
    %743 = vmatpush1.bf16.xpose.msra.mxu0 0
    %744 = vmatprep.subr.bf16.mxu0 0
    %745 = vmatpush1.bf16.xpose.msra.mxu0 0
    %746 = vmatprep.subr.bf16.mxu0 0
    %747 = vmatpush1.bf16.xpose.msra.mxu0 0
    %748 = vmatprep.subr.bf16.mxu0 0
    %749 = vmatpush1.bf16.xpose.msra.mxu0 0
    %750 = vmatprep.subr.bf16.mxu0 0
    %751 = vmatpush1.bf16.xpose.msra.mxu0 0
    %752 = vmatprep.mubr.bf16.mxu0 0
    %753 = vmatmul.mubr.bf16.gmra.mrb[0].mxu0 %v715
    %v754 = vpop.f32.mrb[0].mxu0
    %v755 = vadd.f32 0.0, %v754
    %v756 = vpop.f32.mrb[0].mxu0
    %v757 = vpop.f32.mrb[0].mxu0
    %v758 = vadd.f32 0.0, %v757
    %v759 = vpop.f32.mrb[0].mxu0
    %760 = vdwg.mxu0
    %v761 = vmul.f32 %v755, 0.35355338
    %v762 = vmul.f32 %v758, 0.35355338
    %v763 = vadd.f32 %v761, %v192
    %v764 = vadd.f32 %v762, %v193
    %v765 = vsel %vm443, %v763, -inf
    %766 = vmax.xlane.f32.xlu0 %v765
    %v767 = vpop.xlane.xlu0 %766
    %v768 = vsel %vm443, %v764, -inf
    %769 = vmax.xlane.f32.xlu0 %v768
    %v770 = vpop.xlane.xlu0 %769
    %v771 = vsub.f32 %v763, %v767
    %v772 = vsub.f32 %v764, %v770
    %v773 = vmul.f32 %v771, 1.442695
    %v774 = vpow.pop %v773
    %v775 = vmul.f32 %v772, 1.442695
    %v776 = vpow.pop %v775
    %v777 = vsel %vm443, %v774, 0.0
    %778 = vadd.xlane.f32.xlu0 %v777
    %v779 = vpop.xlane.xlu0 %778
    %v780 = vsel %vm443, %v776, 0.0
    %781 = vadd.xlane.f32.xlu0 %v780
    %v782 = vpop.xlane.xlu0 %781
    %v783 = vrcp.pop %v779
    %v784 = vmul.f32 %v774, %v783
    %v785 = vrcp.pop %v782
    %v786 = vmul.f32 %v776, %v785
    %v787 = vpack.c.bf16 %v786, %v784
    %v788 = vpack.c.bf16 %v709, %v706
    %v790 = vsel %vm443, %v787, 0
    %792 = vmatprep.subr.bf16.mxu0 0
    %793 = vmatpush1.bf16.msra.mxu0 %v788
    %794 = vmatprep.subr.bf16.mxu0 0
    %795 = vmatpush1.bf16.msra.mxu0 0
    %796 = vmatprep.subr.bf16.mxu0 0
    %797 = vmatpush1.bf16.msra.mxu0 0
    %798 = vmatprep.subr.bf16.mxu0 0
    %799 = vmatpush1.bf16.msra.mxu0 0
    %800 = vmatprep.subr.bf16.mxu0 0
    %801 = vmatpush1.bf16.msra.mxu0 0
    %802 = vmatprep.subr.bf16.mxu0 0
    %803 = vmatpush1.bf16.msra.mxu0 0
    %804 = vmatprep.subr.bf16.mxu0 0
    %805 = vmatpush1.bf16.msra.mxu0 0
    %806 = vmatprep.subr.bf16.mxu0 0
    %807 = vmatpush1.bf16.msra.mxu0 0
    %808 = vmatprep.subr.bf16.mxu0 0
    %809 = vmatpush1.bf16.msra.mxu0 0
    %810 = vmatprep.subr.bf16.mxu0 0
    %811 = vmatpush1.bf16.msra.mxu0 0
    %812 = vmatprep.subr.bf16.mxu0 0
    %813 = vmatpush1.bf16.msra.mxu0 0
    %814 = vmatprep.subr.bf16.mxu0 0
    %815 = vmatpush1.bf16.msra.mxu0 0
    %816 = vmatprep.subr.bf16.mxu0 0
    %817 = vmatpush1.bf16.msra.mxu0 0
    %818 = vmatprep.subr.bf16.mxu0 0
    %819 = vmatpush1.bf16.msra.mxu0 0
    %820 = vmatprep.subr.bf16.mxu0 0
    %821 = vmatpush1.bf16.msra.mxu0 0
    %822 = vmatprep.subr.bf16.mxu0 0
    %823 = vmatpush1.bf16.msra.mxu0 0
    %824 = vmatprep.mubr.bf16.mxu0 0
    %825 = vmatmul.mubr.bf16.gmra.mrb[0].mxu0 %v790
    %v826 = vpop.f32.mrb[0].mxu0
    %v827 = vadd.f32 0.0, %v826
    %v828 = vpop.f32.mrb[0].mxu0
    %v829 = vpop.f32.mrb[0].mxu0
    %v830 = vadd.f32 0.0, %v829
    %v831 = vpop.f32.mrb[0].mxu0
    %832 = vdwg.mxu0
    %v833 = vpack.c.bf16 %v830, %v827
    %s834 = scalar_lea.vmem %s25, 4
    %v835 = vld [vmem:[%s834] sm:$0xf]
    %v837 = vsel %vm391, %v833, 0
    %vm839 = vcmask 1043456
    %v841 = vsel %vm839, %v835, 0
    %843 = vmatprep.subr.bf16.mxu0 0
    %844 = vmatpush1.bf16.msra.mxu0 %v841
    %845 = vmatprep.subr.bf16.mxu0 0
    %846 = vmatpush1.bf16.msra.mxu0 0
    %847 = vmatprep.subr.bf16.mxu0 0
    %848 = vmatpush1.bf16.msra.mxu0 0
    %849 = vmatprep.subr.bf16.mxu0 0
    %850 = vmatpush1.bf16.msra.mxu0 0
    %851 = vmatprep.subr.bf16.mxu0 0
    %852 = vmatpush1.bf16.msra.mxu0 0
    %853 = vmatprep.subr.bf16.mxu0 0
    %854 = vmatpush1.bf16.msra.mxu0 0
    %855 = vmatprep.subr.bf16.mxu0 0
    %856 = vmatpush1.bf16.msra.mxu0 0
    %857 = vmatprep.subr.bf16.mxu0 0
    %858 = vmatpush1.bf16.msra.mxu0 0
    %859 = vmatprep.subr.bf16.mxu0 0
    %860 = vmatpush1.bf16.msra.mxu0 0
    %861 = vmatprep.subr.bf16.mxu0 0
    %862 = vmatpush1.bf16.msra.mxu0 0
    %863 = vmatprep.subr.bf16.mxu0 0
    %864 = vmatpush1.bf16.msra.mxu0 0
    %865 = vmatprep.subr.bf16.mxu0 0
    %866 = vmatpush1.bf16.msra.mxu0 0
    %867 = vmatprep.subr.bf16.mxu0 0
    %868 = vmatpush1.bf16.msra.mxu0 0
    %869 = vmatprep.subr.bf16.mxu0 0
    %870 = vmatpush1.bf16.msra.mxu0 0
    %871 = vmatprep.subr.bf16.mxu0 0
    %872 = vmatpush1.bf16.msra.mxu0 0
    %873 = vmatprep.subr.bf16.mxu0 0
    %874 = vmatpush1.bf16.msra.mxu0 0
    %875 = vmatprep.mubr.bf16.mxu0 0
    %876 = vmatmul.mubr.bf16.gmra.mrb[0].mxu0 %v837
    %v877 = vpop.f32.mrb[0].mxu0
    %v878 = vadd.f32 0.0, %v877
    %v879 = vpop.f32.mrb[0].mxu0
    %v880 = vpop.f32.mrb[0].mxu0
    %v881 = vadd.f32 0.0, %v880
    %v882 = vpop.f32.mrb[0].mxu0
    %883 = vdwg.mxu0
    %v885 = vsel %vm391, %v512, 0
    %v888 = vsel %vm839, %v513, 0
    %890 = vmatprep.subr.bf16.mxu0 0
    %891 = vmatpush1.bf16.msra.mxu0 %v888
    %892 = vmatprep.subr.bf16.mxu0 0
    %893 = vmatpush1.bf16.msra.mxu0 0
    %894 = vmatprep.subr.bf16.mxu0 0
    %895 = vmatpush1.bf16.msra.mxu0 0
    %896 = vmatprep.subr.bf16.mxu0 0
    %897 = vmatpush1.bf16.msra.mxu0 0
    %898 = vmatprep.subr.bf16.mxu0 0
    %899 = vmatpush1.bf16.msra.mxu0 0
    %900 = vmatprep.subr.bf16.mxu0 0
    %901 = vmatpush1.bf16.msra.mxu0 0
    %902 = vmatprep.subr.bf16.mxu0 0
    %903 = vmatpush1.bf16.msra.mxu0 0
    %904 = vmatprep.subr.bf16.mxu0 0
    %905 = vmatpush1.bf16.msra.mxu0 0
    %906 = vmatprep.subr.bf16.mxu0 0
    %907 = vmatpush1.bf16.msra.mxu0 0
    %908 = vmatprep.subr.bf16.mxu0 0
    %909 = vmatpush1.bf16.msra.mxu0 0
    %910 = vmatprep.subr.bf16.mxu0 0
    %911 = vmatpush1.bf16.msra.mxu0 0
    %912 = vmatprep.subr.bf16.mxu0 0
    %913 = vmatpush1.bf16.msra.mxu0 0
    %914 = vmatprep.subr.bf16.mxu0 0
    %915 = vmatpush1.bf16.msra.mxu0 0
    %916 = vmatprep.subr.bf16.mxu0 0
    %917 = vmatpush1.bf16.msra.mxu0 0
    %918 = vmatprep.subr.bf16.mxu0 0
    %919 = vmatpush1.bf16.msra.mxu0 0
    %920 = vmatprep.subr.bf16.mxu0 0
    %921 = vmatpush1.bf16.msra.mxu0 0
    %922 = vmatprep.mubr.bf16.mxu0 0
    %923 = vmatmul.mubr.bf16.gmra.mrb[0].mxu0 %v885
    %v924 = vpop.f32.mrb[0].mxu0
    %v925 = vadd.f32 %v878, %v924
    %v926 = vpop.f32.mrb[0].mxu0
    %v927 = vpop.f32.mrb[0].mxu0
    %v928 = vadd.f32 %v881, %v927
    %v929 = vpop.f32.mrb[0].mxu0
    %930 = vdwg.mxu0
    %s931 = scalar_lea.vmem %s13, 32
    %v932 = vld [vmem:[%s931] sm:$0xf]
    %v933 = vld [vmem:[%s931 + $0x4] sm:$0xf]
    %v934 = vld [vmem:[%s931 + $0x8] sm:$0xf]
    %v935 = vld [vmem:[%s931 + $0xc] sm:$0xf]
    %s936 = scalar_lea.vmem %s19, 2
    %v937 = vld [vmem:[%s936] sm:$0x1]
    %v939 = vlaneseq
    %v940 = vshrl.u32 %v939, 7
    %v941 = vsub.s32 0, %v940
    %v942 = vrot.slane %v937, %v941
    %v948 = vunpack.c.l.b16 %v932
    %v949 = vunpack.c.l.b16 %v933
    %v950 = vunpack.c.l.b16 %v934
    %v951 = vunpack.c.l.b16 %v935
    %v952 = vpack.c.b16 %v949, %v948
    %v953 = vpack.c.b16 %v951, %v950
    %956 = vmatprep.subr.bf16.mxu0 0
    %957 = vmatpush1.bf16.msra.mxu0 %v952
    %958 = vmatprep.subr.bf16.mxu0 0
    %959 = vmatpush1.bf16.msra.mxu0 %v953
    %960 = vmatprep.subr.bf16.mxu0 0
    %961 = vmatpush1.bf16.msra.mxu0 0
    %962 = vmatprep.subr.bf16.mxu0 0
    %963 = vmatpush1.bf16.msra.mxu0 0
    %964 = vmatprep.subr.bf16.mxu0 0
    %965 = vmatpush1.bf16.msra.mxu0 0
    %966 = vmatprep.subr.bf16.mxu0 0
    %967 = vmatpush1.bf16.msra.mxu0 0
    %968 = vmatprep.subr.bf16.mxu0 0
    %969 = vmatpush1.bf16.msra.mxu0 0
    %970 = vmatprep.subr.bf16.mxu0 0
    %971 = vmatpush1.bf16.msra.mxu0 0
    %972 = vmatprep.subr.bf16.mxu0 0
    %973 = vmatpush1.bf16.msra.mxu0 0
    %974 = vmatprep.subr.bf16.mxu0 0
    %975 = vmatpush1.bf16.msra.mxu0 0
    %976 = vmatprep.subr.bf16.mxu0 0
    %977 = vmatpush1.bf16.msra.mxu0 0
    %978 = vmatprep.subr.bf16.mxu0 0
    %979 = vmatpush1.bf16.msra.mxu0 0
    %980 = vmatprep.subr.bf16.mxu0 0
    %981 = vmatpush1.bf16.msra.mxu0 0
    %982 = vmatprep.subr.bf16.mxu0 0
    %983 = vmatpush1.bf16.msra.mxu0 0
    %984 = vmatprep.subr.bf16.mxu0 0
    %985 = vmatpush1.bf16.msra.mxu0 0
    %986 = vmatprep.subr.bf16.mxu0 0
    %987 = vmatpush1.bf16.msra.mxu0 0
    %988 = vmatprep.mubr.bf16.mxu0 0
    %989 = vmatmul.mubr.bf16.gmra.mrb[0].mxu0 %v218
    %v990 = vpop.f32.mrb[0].mxu0
    %v991 = vadd.f32 %v942, %v990
    %v992 = vpop.f32.mrb[0].mxu0
    %v993 = vpop.f32.mrb[0].mxu0
    %v994 = vadd.f32 %v942, %v993
    %v995 = vpop.f32.mrb[0].mxu0
    %996 = vdwg.mxu0
    %s997 = scalar_lea.vmem %s15, 32
    %v998 = vld [vmem:[%s997] sm:$0xf]
    %v999 = vld [vmem:[%s997 + $0x4] sm:$0xf]
    %v1000 = vld [vmem:[%s997 + $0x8] sm:$0xf]
    %v1001 = vld [vmem:[%s997 + $0xc] sm:$0xf]
    %s1002 = scalar_lea.vmem %s21, 2
    %v1003 = vld [vmem:[%s1002] sm:$0x1]
    %v1005 = vlaneseq
    %v1006 = vshrl.u32 %v1005, 7
    %v1007 = vsub.s32 0, %v1006
    %v1008 = vrot.slane %v1003, %v1007
    %v1014 = vunpack.c.l.b16 %v998
    %v1015 = vunpack.c.l.b16 %v999
    %v1016 = vunpack.c.l.b16 %v1000
    %v1017 = vunpack.c.l.b16 %v1001
    %v1018 = vpack.c.b16 %v1015, %v1014
    %v1019 = vpack.c.b16 %v1017, %v1016
    %1022 = vmatprep.subr.bf16.mxu0 0
    %1023 = vmatpush1.bf16.msra.mxu0 %v1018
    %1024 = vmatprep.subr.bf16.mxu0 0
    %1025 = vmatpush1.bf16.msra.mxu0 %v1019
    %1026 = vmatprep.subr.bf16.mxu0 0
    %1027 = vmatpush1.bf16.msra.mxu0 0
    %1028 = vmatprep.subr.bf16.mxu0 0
    %1029 = vmatpush1.bf16.msra.mxu0 0
    %1030 = vmatprep.subr.bf16.mxu0 0
    %1031 = vmatpush1.bf16.msra.mxu0 0
    %1032 = vmatprep.subr.bf16.mxu0 0
    %1033 = vmatpush1.bf16.msra.mxu0 0
    %1034 = vmatprep.subr.bf16.mxu0 0
    %1035 = vmatpush1.bf16.msra.mxu0 0
    %1036 = vmatprep.subr.bf16.mxu0 0
    %1037 = vmatpush1.bf16.msra.mxu0 0
    %1038 = vmatprep.subr.bf16.mxu0 0
    %1039 = vmatpush1.bf16.msra.mxu0 0
    %1040 = vmatprep.subr.bf16.mxu0 0
    %1041 = vmatpush1.bf16.msra.mxu0 0
    %1042 = vmatprep.subr.bf16.mxu0 0
    %1043 = vmatpush1.bf16.msra.mxu0 0
    %1044 = vmatprep.subr.bf16.mxu0 0
    %1045 = vmatpush1.bf16.msra.mxu0 0
    %1046 = vmatprep.subr.bf16.mxu0 0
    %1047 = vmatpush1.bf16.msra.mxu0 0
    %1048 = vmatprep.subr.bf16.mxu0 0
    %1049 = vmatpush1.bf16.msra.mxu0 0
    %1050 = vmatprep.subr.bf16.mxu0 0
    %1051 = vmatpush1.bf16.msra.mxu0 0
    %1052 = vmatprep.subr.bf16.mxu0 0
    %1053 = vmatpush1.bf16.msra.mxu0 0
    %1054 = vmatprep.mubr.bf16.mxu0 0
    %1055 = vmatmul.mubr.bf16.gmra.mrb[0].mxu0 %v218
    %v1056 = vpop.f32.mrb[0].mxu0
    %v1057 = vadd.f32 %v1008, %v1056
    %v1058 = vpop.f32.mrb[0].mxu0
    %v1059 = vpop.f32.mrb[0].mxu0
    %v1060 = vadd.f32 %v1008, %v1059
    %v1061 = vpop.f32.mrb[0].mxu0
    %1062 = vdwg.mxu0
    %s1063 = scalar_lea.vmem %s17, 32
    %v1064 = vld [vmem:[%s1063] sm:$0xf]
    %v1065 = vld [vmem:[%s1063 + $0x4] sm:$0xf]
    %v1066 = vld [vmem:[%s1063 + $0x8] sm:$0xf]
    %v1067 = vld [vmem:[%s1063 + $0xc] sm:$0xf]
    %s1068 = scalar_lea.vmem %s23, 2
    %v1069 = vld [vmem:[%s1068] sm:$0x1]
    %v1071 = vlaneseq
    %v1072 = vshrl.u32 %v1071, 7
    %v1073 = vsub.s32 0, %v1072
    %v1074 = vrot.slane %v1069, %v1073
    %v1080 = vunpack.c.l.b16 %v1064
    %v1081 = vunpack.c.l.b16 %v1065
    %v1082 = vunpack.c.l.b16 %v1066
    %v1083 = vunpack.c.l.b16 %v1067
    %v1084 = vpack.c.b16 %v1081, %v1080
    %v1085 = vpack.c.b16 %v1083, %v1082
    %1088 = vmatprep.subr.bf16.mxu0 0
    %1089 = vmatpush1.bf16.msra.mxu0 %v1084
    %1090 = vmatprep.subr.bf16.mxu0 0
    %1091 = vmatpush1.bf16.msra.mxu0 %v1085
    %1092 = vmatprep.subr.bf16.mxu0 0
    %1093 = vmatpush1.bf16.msra.mxu0 0
    %1094 = vmatprep.subr.bf16.mxu0 0
    %1095 = vmatpush1.bf16.msra.mxu0 0
    %1096 = vmatprep.subr.bf16.mxu0 0
    %1097 = vmatpush1.bf16.msra.mxu0 0
    %1098 = vmatprep.subr.bf16.mxu0 0
    %1099 = vmatpush1.bf16.msra.mxu0 0
    %1100 = vmatprep.subr.bf16.mxu0 0
    %1101 = vmatpush1.bf16.msra.mxu0 0
    %1102 = vmatprep.subr.bf16.mxu0 0
    %1103 = vmatpush1.bf16.msra.mxu0 0
    %1104 = vmatprep.subr.bf16.mxu0 0
    %1105 = vmatpush1.bf16.msra.mxu0 0
    %1106 = vmatprep.subr.bf16.mxu0 0
    %1107 = vmatpush1.bf16.msra.mxu0 0
    %1108 = vmatprep.subr.bf16.mxu0 0
    %1109 = vmatpush1.bf16.msra.mxu0 0
    %1110 = vmatprep.subr.bf16.mxu0 0
    %1111 = vmatpush1.bf16.msra.mxu0 0
    %1112 = vmatprep.subr.bf16.mxu0 0
    %1113 = vmatpush1.bf16.msra.mxu0 0
    %1114 = vmatprep.subr.bf16.mxu0 0
    %1115 = vmatpush1.bf16.msra.mxu0 0
    %1116 = vmatprep.subr.bf16.mxu0 0
    %1117 = vmatpush1.bf16.msra.mxu0 0
    %1118 = vmatprep.subr.bf16.mxu0 0
    %1119 = vmatpush1.bf16.msra.mxu0 0
    %1120 = vmatprep.mubr.bf16.mxu0 0
    %1121 = vmatmul.mubr.bf16.gmra.mrb[0].mxu0 %v218
    %v1122 = vpop.f32.mrb[0].mxu0
    %v1123 = vadd.f32 %v1074, %v1122
    %v1124 = vpop.f32.mrb[0].mxu0
    %v1125 = vpop.f32.mrb[0].mxu0
    %v1126 = vadd.f32 %v1074, %v1125
    %v1127 = vpop.f32.mrb[0].mxu0
    %1128 = vdwg.mxu0
    %v1129 = vpack.c.bf16 %v994, %v991
    %v1130 = vpack.c.bf16 %v1060, %v1057
    %v1132 = vsel %vm391, %v1129, 0
    %v1135 = vsel %vm391, %v1130, 0
    %1137 = vmatprep.subr.bf16.mxu0 0
    %1138 = vmatpush1.bf16.xpose.msra.mxu0 %v1135
    %1139 = vmatprep.subr.bf16.mxu0 0
    %1140 = vmatpush1.bf16.xpose.msra.mxu0 0
    %1141 = vmatprep.subr.bf16.mxu0 0
    %1142 = vmatpush1.bf16.xpose.msra.mxu0 0
    %1143 = vmatprep.subr.bf16.mxu0 0
    %1144 = vmatpush1.bf16.xpose.msra.mxu0 0
    %1145 = vmatprep.subr.bf16.mxu0 0
    %1146 = vmatpush1.bf16.xpose.msra.mxu0 0
    %1147 = vmatprep.subr.bf16.mxu0 0
    %1148 = vmatpush1.bf16.xpose.msra.mxu0 0
    %1149 = vmatprep.subr.bf16.mxu0 0
    %1150 = vmatpush1.bf16.xpose.msra.mxu0 0
    %1151 = vmatprep.subr.bf16.mxu0 0
    %1152 = vmatpush1.bf16.xpose.msra.mxu0 0
    %1153 = vmatprep.subr.bf16.mxu0 0
    %1154 = vmatpush1.bf16.xpose.msra.mxu0 0
    %1155 = vmatprep.subr.bf16.mxu0 0
    %1156 = vmatpush1.bf16.xpose.msra.mxu0 0
    %1157 = vmatprep.subr.bf16.mxu0 0
    %1158 = vmatpush1.bf16.xpose.msra.mxu0 0
    %1159 = vmatprep.subr.bf16.mxu0 0
    %1160 = vmatpush1.bf16.xpose.msra.mxu0 0
    %1161 = vmatprep.subr.bf16.mxu0 0
    %1162 = vmatpush1.bf16.xpose.msra.mxu0 0
    %1163 = vmatprep.subr.bf16.mxu0 0
    %1164 = vmatpush1.bf16.xpose.msra.mxu0 0
    %1165 = vmatprep.subr.bf16.mxu0 0
    %1166 = vmatpush1.bf16.xpose.msra.mxu0 0
    %1167 = vmatprep.subr.bf16.mxu0 0
    %1168 = vmatpush1.bf16.xpose.msra.mxu0 0
    %1169 = vmatprep.mubr.bf16.mxu0 0
    %1170 = vmatmul.mubr.bf16.gmra.mrb[0].mxu0 %v1132
    %v1171 = vpop.f32.mrb[0].mxu0
    %v1172 = vadd.f32 0.0, %v1171
    %v1173 = vpop.f32.mrb[0].mxu0
    %v1174 = vpop.f32.mrb[0].mxu0
    %v1175 = vadd.f32 0.0, %v1174
    %v1176 = vpop.f32.mrb[0].mxu0
    %1177 = vdwg.mxu0
    %v1178 = vmul.f32 %v1172, 0.35355338
    %v1179 = vmul.f32 %v1175, 0.35355338
    %v1180 = vadd.f32 %v1178, %v192
    %v1181 = vadd.f32 %v1179, %v193
    %v1182 = vsel %vm443, %v1180, -inf
    %1183 = vmax.xlane.f32.xlu0 %v1182
    %v1184 = vpop.xlane.xlu0 %1183
    %v1185 = vsel %vm443, %v1181, -inf
    %1186 = vmax.xlane.f32.xlu0 %v1185
    %v1187 = vpop.xlane.xlu0 %1186
    %v1188 = vsub.f32 %v1180, %v1184
    %v1189 = vsub.f32 %v1181, %v1187
    %v1190 = vmul.f32 %v1188, 1.442695
    %v1191 = vpow.pop %v1190
    %v1192 = vmul.f32 %v1189, 1.442695
    %v1193 = vpow.pop %v1192
    %v1194 = vsel %vm443, %v1191, 0.0
    %1195 = vadd.xlane.f32.xlu0 %v1194
    %v1196 = vpop.xlane.xlu0 %1195
    %v1197 = vsel %vm443, %v1193, 0.0
    %1198 = vadd.xlane.f32.xlu0 %v1197
    %v1199 = vpop.xlane.xlu0 %1198
    %v1200 = vrcp.pop %v1196
    %v1201 = vmul.f32 %v1191, %v1200
    %v1202 = vrcp.pop %v1199
    %v1203 = vmul.f32 %v1193, %v1202
    %v1204 = vpack.c.bf16 %v1203, %v1201
    %v1205 = vpack.c.bf16 %v1126, %v1123
    %v1207 = vsel %vm443, %v1204, 0
    %1209 = vmatprep.subr.bf16.mxu0 0
    %1210 = vmatpush1.bf16.msra.mxu0 %v1205
    %1211 = vmatprep.subr.bf16.mxu0 0
    %1212 = vmatpush1.bf16.msra.mxu0 0
    %1213 = vmatprep.subr.bf16.mxu0 0
    %1214 = vmatpush1.bf16.msra.mxu0 0
    %1215 = vmatprep.subr.bf16.mxu0 0
    %1216 = vmatpush1.bf16.msra.mxu0 0
    %1217 = vmatprep.subr.bf16.mxu0 0
    %1218 = vmatpush1.bf16.msra.mxu0 0
    %1219 = vmatprep.subr.bf16.mxu0 0
    %1220 = vmatpush1.bf16.msra.mxu0 0
    %1221 = vmatprep.subr.bf16.mxu0 0
    %1222 = vmatpush1.bf16.msra.mxu0 0
    %1223 = vmatprep.subr.bf16.mxu0 0
    %1224 = vmatpush1.bf16.msra.mxu0 0
    %1225 = vmatprep.subr.bf16.mxu0 0
    %1226 = vmatpush1.bf16.msra.mxu0 0
    %1227 = vmatprep.subr.bf16.mxu0 0
    %1228 = vmatpush1.bf16.msra.mxu0 0
    %1229 = vmatprep.subr.bf16.mxu0 0
    %1230 = vmatpush1.bf16.msra.mxu0 0
    %1231 = vmatprep.subr.bf16.mxu0 0
    %1232 = vmatpush1.bf16.msra.mxu0 0
    %1233 = vmatprep.subr.bf16.mxu0 0
    %1234 = vmatpush1.bf16.msra.mxu0 0
    %1235 = vmatprep.subr.bf16.mxu0 0
    %1236 = vmatpush1.bf16.msra.mxu0 0
    %1237 = vmatprep.subr.bf16.mxu0 0
    %1238 = vmatpush1.bf16.msra.mxu0 0
    %1239 = vmatprep.subr.bf16.mxu0 0
    %1240 = vmatpush1.bf16.msra.mxu0 0
    %1241 = vmatprep.mubr.bf16.mxu0 0
    %1242 = vmatmul.mubr.bf16.gmra.mrb[0].mxu0 %v1207
    %v1243 = vpop.f32.mrb[0].mxu0
    %v1244 = vadd.f32 0.0, %v1243
    %v1245 = vpop.f32.mrb[0].mxu0
    %v1246 = vpop.f32.mrb[0].mxu0
    %v1247 = vadd.f32 0.0, %v1246
    %v1248 = vpop.f32.mrb[0].mxu0
    %1249 = vdwg.mxu0
    %v1250 = vpack.c.bf16 %v1247, %v1244
    %s1251 = scalar_lea.vmem %s25, 8
    %v1252 = vld [vmem:[%s1251] sm:$0xf]
    %v1254 = vsel %vm391, %v1250, 0
    %v1257 = vsel %vm839, %v1252, 0
    %1259 = vmatprep.subr.bf16.mxu0 0
    %1260 = vmatpush1.bf16.msra.mxu0 %v1257
    %1261 = vmatprep.subr.bf16.mxu0 0
    %1262 = vmatpush1.bf16.msra.mxu0 0
    %1263 = vmatprep.subr.bf16.mxu0 0
    %1264 = vmatpush1.bf16.msra.mxu0 0
    %1265 = vmatprep.subr.bf16.mxu0 0
    %1266 = vmatpush1.bf16.msra.mxu0 0
    %1267 = vmatprep.subr.bf16.mxu0 0
    %1268 = vmatpush1.bf16.msra.mxu0 0
    %1269 = vmatprep.subr.bf16.mxu0 0
    %1270 = vmatpush1.bf16.msra.mxu0 0
    %1271 = vmatprep.subr.bf16.mxu0 0
    %1272 = vmatpush1.bf16.msra.mxu0 0
    %1273 = vmatprep.subr.bf16.mxu0 0
    %1274 = vmatpush1.bf16.msra.mxu0 0
    %1275 = vmatprep.subr.bf16.mxu0 0
    %1276 = vmatpush1.bf16.msra.mxu0 0
    %1277 = vmatprep.subr.bf16.mxu0 0
    %1278 = vmatpush1.bf16.msra.mxu0 0
    %1279 = vmatprep.subr.bf16.mxu0 0
    %1280 = vmatpush1.bf16.msra.mxu0 0
    %1281 = vmatprep.subr.bf16.mxu0 0
    %1282 = vmatpush1.bf16.msra.mxu0 0
    %1283 = vmatprep.subr.bf16.mxu0 0
    %1284 = vmatpush1.bf16.msra.mxu0 0
    %1285 = vmatprep.subr.bf16.mxu0 0
    %1286 = vmatpush1.bf16.msra.mxu0 0
    %1287 = vmatprep.subr.bf16.mxu0 0
    %1288 = vmatpush1.bf16.msra.mxu0 0
    %1289 = vmatprep.subr.bf16.mxu0 0
    %1290 = vmatpush1.bf16.msra.mxu0 0
    %1291 = vmatprep.mubr.bf16.mxu0 0
    %1292 = vmatmul.mubr.bf16.gmra.mrb[0].mxu0 %v1254
    %v1293 = vpop.f32.mrb[0].mxu0
    %v1294 = vadd.f32 0.0, %v1293
    %v1295 = vpop.f32.mrb[0].mxu0
    %v1296 = vpop.f32.mrb[0].mxu0
    %v1297 = vadd.f32 0.0, %v1296
    %v1298 = vpop.f32.mrb[0].mxu0
    %1299 = vdwg.mxu0
    %v1300 = vadd.f32 %v925, %v1294
    %v1301 = vadd.f32 %v928, %v1297
    %s1302 = scalar_lea.vmem %s13, 48
    %v1303 = vld [vmem:[%s1302] sm:$0xf]
    %v1304 = vld [vmem:[%s1302 + $0x4] sm:$0xf]
    %v1305 = vld [vmem:[%s1302 + $0x8] sm:$0xf]
    %v1306 = vld [vmem:[%s1302 + $0xc] sm:$0xf]
    %s1307 = scalar_lea.vmem %s19, 3
    %v1308 = vld [vmem:[%s1307] sm:$0x1]
    %v1310 = vlaneseq
    %v1311 = vshrl.u32 %v1310, 7
    %v1312 = vsub.s32 0, %v1311
    %v1313 = vrot.slane %v1308, %v1312
    %v1319 = vunpack.c.l.b16 %v1303
    %v1320 = vunpack.c.l.b16 %v1304
    %v1321 = vunpack.c.l.b16 %v1305
    %v1322 = vunpack.c.l.b16 %v1306
    %v1323 = vpack.c.b16 %v1320, %v1319
    %v1324 = vpack.c.b16 %v1322, %v1321
    %1327 = vmatprep.subr.bf16.mxu0 0
    %1328 = vmatpush1.bf16.msra.mxu0 %v1323
    %1329 = vmatprep.subr.bf16.mxu0 0
    %1330 = vmatpush1.bf16.msra.mxu0 %v1324
    %1331 = vmatprep.subr.bf16.mxu0 0
    %1332 = vmatpush1.bf16.msra.mxu0 0
    %1333 = vmatprep.subr.bf16.mxu0 0
    %1334 = vmatpush1.bf16.msra.mxu0 0
    %1335 = vmatprep.subr.bf16.mxu0 0
    %1336 = vmatpush1.bf16.msra.mxu0 0
    %1337 = vmatprep.subr.bf16.mxu0 0
    %1338 = vmatpush1.bf16.msra.mxu0 0
    %1339 = vmatprep.subr.bf16.mxu0 0
    %1340 = vmatpush1.bf16.msra.mxu0 0
    %1341 = vmatprep.subr.bf16.mxu0 0
    %1342 = vmatpush1.bf16.msra.mxu0 0
    %1343 = vmatprep.subr.bf16.mxu0 0
    %1344 = vmatpush1.bf16.msra.mxu0 0
    %1345 = vmatprep.subr.bf16.mxu0 0
    %1346 = vmatpush1.bf16.msra.mxu0 0
    %1347 = vmatprep.subr.bf16.mxu0 0
    %1348 = vmatpush1.bf16.msra.mxu0 0
    %1349 = vmatprep.subr.bf16.mxu0 0
    %1350 = vmatpush1.bf16.msra.mxu0 0
    %1351 = vmatprep.subr.bf16.mxu0 0
    %1352 = vmatpush1.bf16.msra.mxu0 0
    %1353 = vmatprep.subr.bf16.mxu0 0
    %1354 = vmatpush1.bf16.msra.mxu0 0
    %1355 = vmatprep.subr.bf16.mxu0 0
    %1356 = vmatpush1.bf16.msra.mxu0 0
    %1357 = vmatprep.subr.bf16.mxu0 0
    %1358 = vmatpush1.bf16.msra.mxu0 0
    %1359 = vmatprep.mubr.bf16.mxu0 0
    %1360 = vmatmul.mubr.bf16.gmra.mrb[0].mxu0 %v218
    %v1361 = vpop.f32.mrb[0].mxu0
    %v1362 = vadd.f32 %v1313, %v1361
    %v1363 = vpop.f32.mrb[0].mxu0
    %v1364 = vpop.f32.mrb[0].mxu0
    %v1365 = vadd.f32 %v1313, %v1364
    %v1366 = vpop.f32.mrb[0].mxu0
    %1367 = vdwg.mxu0
    %s1368 = scalar_lea.vmem %s15, 48
    %v1369 = vld [vmem:[%s1368] sm:$0xf]
    %v1370 = vld [vmem:[%s1368 + $0x4] sm:$0xf]
    %v1371 = vld [vmem:[%s1368 + $0x8] sm:$0xf]
    %v1372 = vld [vmem:[%s1368 + $0xc] sm:$0xf]
    %s1373 = scalar_lea.vmem %s21, 3
    %v1374 = vld [vmem:[%s1373] sm:$0x1]
    %v1376 = vlaneseq
    %v1377 = vshrl.u32 %v1376, 7
    %v1378 = vsub.s32 0, %v1377
    %v1379 = vrot.slane %v1374, %v1378
    %v1385 = vunpack.c.l.b16 %v1369
    %v1386 = vunpack.c.l.b16 %v1370
    %v1387 = vunpack.c.l.b16 %v1371
    %v1388 = vunpack.c.l.b16 %v1372
    %v1389 = vpack.c.b16 %v1386, %v1385
    %v1390 = vpack.c.b16 %v1388, %v1387
    %1393 = vmatprep.subr.bf16.mxu0 0
    %1394 = vmatpush1.bf16.msra.mxu0 %v1389
    %1395 = vmatprep.subr.bf16.mxu0 0
    %1396 = vmatpush1.bf16.msra.mxu0 %v1390
    %1397 = vmatprep.subr.bf16.mxu0 0
    %1398 = vmatpush1.bf16.msra.mxu0 0
    %1399 = vmatprep.subr.bf16.mxu0 0
    %1400 = vmatpush1.bf16.msra.mxu0 0
    %1401 = vmatprep.subr.bf16.mxu0 0
    %1402 = vmatpush1.bf16.msra.mxu0 0
    %1403 = vmatprep.subr.bf16.mxu0 0
    %1404 = vmatpush1.bf16.msra.mxu0 0
    %1405 = vmatprep.subr.bf16.mxu0 0
    %1406 = vmatpush1.bf16.msra.mxu0 0
    %1407 = vmatprep.subr.bf16.mxu0 0
    %1408 = vmatpush1.bf16.msra.mxu0 0
    %1409 = vmatprep.subr.bf16.mxu0 0
    %1410 = vmatpush1.bf16.msra.mxu0 0
    %1411 = vmatprep.subr.bf16.mxu0 0
    %1412 = vmatpush1.bf16.msra.mxu0 0
    %1413 = vmatprep.subr.bf16.mxu0 0
    %1414 = vmatpush1.bf16.msra.mxu0 0
    %1415 = vmatprep.subr.bf16.mxu0 0
    %1416 = vmatpush1.bf16.msra.mxu0 0
    %1417 = vmatprep.subr.bf16.mxu0 0
    %1418 = vmatpush1.bf16.msra.mxu0 0
    %1419 = vmatprep.subr.bf16.mxu0 0
    %1420 = vmatpush1.bf16.msra.mxu0 0
    %1421 = vmatprep.subr.bf16.mxu0 0
    %1422 = vmatpush1.bf16.msra.mxu0 0
    %1423 = vmatprep.subr.bf16.mxu0 0
    %1424 = vmatpush1.bf16.msra.mxu0 0
    %1425 = vmatprep.mubr.bf16.mxu0 0
    %1426 = vmatmul.mubr.bf16.gmra.mrb[0].mxu0 %v218
    %v1427 = vpop.f32.mrb[0].mxu0
    %v1428 = vadd.f32 %v1379, %v1427
    %v1429 = vpop.f32.mrb[0].mxu0
    %v1430 = vpop.f32.mrb[0].mxu0
    %v1431 = vadd.f32 %v1379, %v1430
    %v1432 = vpop.f32.mrb[0].mxu0
    %1433 = vdwg.mxu0
    %s1434 = scalar_lea.vmem %s17, 48
    %v1435 = vld [vmem:[%s1434] sm:$0xf]
    %v1436 = vld [vmem:[%s1434 + $0x4] sm:$0xf]
    %v1437 = vld [vmem:[%s1434 + $0x8] sm:$0xf]
    %v1438 = vld [vmem:[%s1434 + $0xc] sm:$0xf]
    %s1439 = scalar_lea.vmem %s23, 3
    %v1440 = vld [vmem:[%s1439] sm:$0x1]
    %v1442 = vlaneseq
    %v1443 = vshrl.u32 %v1442, 7
    %v1444 = vsub.s32 0, %v1443
    %v1445 = vrot.slane %v1440, %v1444
    %v1451 = vunpack.c.l.b16 %v1435
    %v1452 = vunpack.c.l.b16 %v1436
    %v1453 = vunpack.c.l.b16 %v1437
    %v1454 = vunpack.c.l.b16 %v1438
    %v1455 = vpack.c.b16 %v1452, %v1451
    %v1456 = vpack.c.b16 %v1454, %v1453
    %1459 = vmatprep.subr.bf16.mxu0 0
    %1460 = vmatpush1.bf16.msra.mxu0 %v1455
    %1461 = vmatprep.subr.bf16.mxu0 0
    %1462 = vmatpush1.bf16.msra.mxu0 %v1456
    %1463 = vmatprep.subr.bf16.mxu0 0
    %1464 = vmatpush1.bf16.msra.mxu0 0
    %1465 = vmatprep.subr.bf16.mxu0 0
    %1466 = vmatpush1.bf16.msra.mxu0 0
    %1467 = vmatprep.subr.bf16.mxu0 0
    %1468 = vmatpush1.bf16.msra.mxu0 0
    %1469 = vmatprep.subr.bf16.mxu0 0
    %1470 = vmatpush1.bf16.msra.mxu0 0
    %1471 = vmatprep.subr.bf16.mxu0 0
    %1472 = vmatpush1.bf16.msra.mxu0 0
    %1473 = vmatprep.subr.bf16.mxu0 0
    %1474 = vmatpush1.bf16.msra.mxu0 0
    %1475 = vmatprep.subr.bf16.mxu0 0
    %1476 = vmatpush1.bf16.msra.mxu0 0
    %1477 = vmatprep.subr.bf16.mxu0 0
    %1478 = vmatpush1.bf16.msra.mxu0 0
    %1479 = vmatprep.subr.bf16.mxu0 0
    %1480 = vmatpush1.bf16.msra.mxu0 0
    %1481 = vmatprep.subr.bf16.mxu0 0
    %1482 = vmatpush1.bf16.msra.mxu0 0
    %1483 = vmatprep.subr.bf16.mxu0 0
    %1484 = vmatpush1.bf16.msra.mxu0 0
    %1485 = vmatprep.subr.bf16.mxu0 0
    %1486 = vmatpush1.bf16.msra.mxu0 0
    %1487 = vmatprep.subr.bf16.mxu0 0
    %1488 = vmatpush1.bf16.msra.mxu0 0
    %1489 = vmatprep.subr.bf16.mxu0 0
    %1490 = vmatpush1.bf16.msra.mxu0 0
    %1491 = vmatprep.mubr.bf16.mxu0 0
    %1492 = vmatmul.mubr.bf16.gmra.mrb[0].mxu0 %v218
    %v1493 = vpop.f32.mrb[0].mxu0
    %v1494 = vadd.f32 %v1445, %v1493
    %v1495 = vpop.f32.mrb[0].mxu0
    %v1496 = vpop.f32.mrb[0].mxu0
    %v1497 = vadd.f32 %v1445, %v1496
    %v1498 = vpop.f32.mrb[0].mxu0
    %1499 = vdwg.mxu0
    %v1500 = vpack.c.bf16 %v1365, %v1362
    %v1501 = vpack.c.bf16 %v1431, %v1428
    %v1503 = vsel %vm391, %v1500, 0
    %v1506 = vsel %vm391, %v1501, 0
    %1508 = vmatprep.subr.bf16.mxu0 0
    %1509 = vmatpush1.bf16.xpose.msra.mxu0 %v1506
    %1510 = vmatprep.subr.bf16.mxu0 0
    %1511 = vmatpush1.bf16.xpose.msra.mxu0 0
    %1512 = vmatprep.subr.bf16.mxu0 0
    %1513 = vmatpush1.bf16.xpose.msra.mxu0 0
    %1514 = vmatprep.subr.bf16.mxu0 0
    %1515 = vmatpush1.bf16.xpose.msra.mxu0 0
    %1516 = vmatprep.subr.bf16.mxu0 0
    %1517 = vmatpush1.bf16.xpose.msra.mxu0 0
    %1518 = vmatprep.subr.bf16.mxu0 0
    %1519 = vmatpush1.bf16.xpose.msra.mxu0 0
    %1520 = vmatprep.subr.bf16.mxu0 0
    %1521 = vmatpush1.bf16.xpose.msra.mxu0 0
    %1522 = vmatprep.subr.bf16.mxu0 0
    %1523 = vmatpush1.bf16.xpose.msra.mxu0 0
    %1524 = vmatprep.subr.bf16.mxu0 0
    %1525 = vmatpush1.bf16.xpose.msra.mxu0 0
    %1526 = vmatprep.subr.bf16.mxu0 0
    %1527 = vmatpush1.bf16.xpose.msra.mxu0 0
    %1528 = vmatprep.subr.bf16.mxu0 0
    %1529 = vmatpush1.bf16.xpose.msra.mxu0 0
    %1530 = vmatprep.subr.bf16.mxu0 0
    %1531 = vmatpush1.bf16.xpose.msra.mxu0 0
    %1532 = vmatprep.subr.bf16.mxu0 0
    %1533 = vmatpush1.bf16.xpose.msra.mxu0 0
    %1534 = vmatprep.subr.bf16.mxu0 0
    %1535 = vmatpush1.bf16.xpose.msra.mxu0 0
    %1536 = vmatprep.subr.bf16.mxu0 0
    %1537 = vmatpush1.bf16.xpose.msra.mxu0 0
    %1538 = vmatprep.subr.bf16.mxu0 0
    %1539 = vmatpush1.bf16.xpose.msra.mxu0 0
    %1540 = vmatprep.mubr.bf16.mxu0 0
    %1541 = vmatmul.mubr.bf16.gmra.mrb[0].mxu0 %v1503
    %v1542 = vpop.f32.mrb[0].mxu0
    %v1543 = vadd.f32 0.0, %v1542
    %v1544 = vpop.f32.mrb[0].mxu0
    %v1545 = vpop.f32.mrb[0].mxu0
    %v1546 = vadd.f32 0.0, %v1545
    %v1547 = vpop.f32.mrb[0].mxu0
    %1548 = vdwg.mxu0
    %v1549 = vmul.f32 %v1543, 0.35355338
    %v1550 = vmul.f32 %v1546, 0.35355338
    %v1551 = vadd.f32 %v1549, %v192
    %v1552 = vadd.f32 %v1550, %v193
    %v1553 = vsel %vm443, %v1551, -inf
    %1554 = vmax.xlane.f32.xlu0 %v1553
    %v1555 = vpop.xlane.xlu0 %1554
    %v1556 = vsel %vm443, %v1552, -inf
    %1557 = vmax.xlane.f32.xlu0 %v1556
    %v1558 = vpop.xlane.xlu0 %1557
    %v1559 = vsub.f32 %v1551, %v1555
    %v1560 = vsub.f32 %v1552, %v1558
    %v1561 = vmul.f32 %v1559, 1.442695
    %v1562 = vpow.pop %v1561
    %v1563 = vmul.f32 %v1560, 1.442695
    %v1564 = vpow.pop %v1563
    %v1565 = vsel %vm443, %v1562, 0.0
    %1566 = vadd.xlane.f32.xlu0 %v1565
    %v1567 = vpop.xlane.xlu0 %1566
    %v1568 = vsel %vm443, %v1564, 0.0
    %1569 = vadd.xlane.f32.xlu0 %v1568
    %v1570 = vpop.xlane.xlu0 %1569
    %v1571 = vrcp.pop %v1567
    %v1572 = vmul.f32 %v1562, %v1571
    %v1573 = vrcp.pop %v1570
    %v1574 = vmul.f32 %v1564, %v1573
    %v1575 = vpack.c.bf16 %v1574, %v1572
    %v1576 = vpack.c.bf16 %v1497, %v1494
    %v1578 = vsel %vm443, %v1575, 0
    %1580 = vmatprep.subr.bf16.mxu0 0
    %1581 = vmatpush1.bf16.msra.mxu0 %v1576
    %1582 = vmatprep.subr.bf16.mxu0 0
    %1583 = vmatpush1.bf16.msra.mxu0 0
    %1584 = vmatprep.subr.bf16.mxu0 0
    %1585 = vmatpush1.bf16.msra.mxu0 0
    %1586 = vmatprep.subr.bf16.mxu0 0
    %1587 = vmatpush1.bf16.msra.mxu0 0
    %1588 = vmatprep.subr.bf16.mxu0 0
    %1589 = vmatpush1.bf16.msra.mxu0 0
    %1590 = vmatprep.subr.bf16.mxu0 0
    %1591 = vmatpush1.bf16.msra.mxu0 0
    %1592 = vmatprep.subr.bf16.mxu0 0
    %1593 = vmatpush1.bf16.msra.mxu0 0
    %1594 = vmatprep.subr.bf16.mxu0 0
    %1595 = vmatpush1.bf16.msra.mxu0 0
    %1596 = vmatprep.subr.bf16.mxu0 0
    %1597 = vmatpush1.bf16.msra.mxu0 0
    %1598 = vmatprep.subr.bf16.mxu0 0
    %1599 = vmatpush1.bf16.msra.mxu0 0
    %1600 = vmatprep.subr.bf16.mxu0 0
    %1601 = vmatpush1.bf16.msra.mxu0 0
    %1602 = vmatprep.subr.bf16.mxu0 0
    %1603 = vmatpush1.bf16.msra.mxu0 0
    %1604 = vmatprep.subr.bf16.mxu0 0
    %1605 = vmatpush1.bf16.msra.mxu0 0
    %1606 = vmatprep.subr.bf16.mxu0 0
    %1607 = vmatpush1.bf16.msra.mxu0 0
    %1608 = vmatprep.subr.bf16.mxu0 0
    %1609 = vmatpush1.bf16.msra.mxu0 0
    %1610 = vmatprep.subr.bf16.mxu0 0
    %1611 = vmatpush1.bf16.msra.mxu0 0
    %1612 = vmatprep.mubr.bf16.mxu0 0
    %1613 = vmatmul.mubr.bf16.gmra.mrb[0].mxu0 %v1578
    %v1614 = vpop.f32.mrb[0].mxu0
    %v1615 = vadd.f32 0.0, %v1614
    %v1616 = vpop.f32.mrb[0].mxu0
    %v1617 = vpop.f32.mrb[0].mxu0
    %v1618 = vadd.f32 0.0, %v1617
    %v1619 = vpop.f32.mrb[0].mxu0
    %1620 = vdwg.mxu0
    %v1621 = vpack.c.bf16 %v1618, %v1615
    %s1622 = scalar_lea.vmem %s25, 12
    %v1623 = vld [vmem:[%s1622] sm:$0xf]
    %v1625 = vsel %vm391, %v1621, 0
    %v1628 = vsel %vm839, %v1623, 0
    %1630 = vmatprep.subr.bf16.mxu0 0
    %1631 = vmatpush1.bf16.msra.mxu0 %v1628
    %1632 = vmatprep.subr.bf16.mxu0 0
    %1633 = vmatpush1.bf16.msra.mxu0 0
    %1634 = vmatprep.subr.bf16.mxu0 0
    %1635 = vmatpush1.bf16.msra.mxu0 0
    %1636 = vmatprep.subr.bf16.mxu0 0
    %1637 = vmatpush1.bf16.msra.mxu0 0
    %1638 = vmatprep.subr.bf16.mxu0 0
    %1639 = vmatpush1.bf16.msra.mxu0 0
    %1640 = vmatprep.subr.bf16.mxu0 0
    %1641 = vmatpush1.bf16.msra.mxu0 0
    %1642 = vmatprep.subr.bf16.mxu0 0
    %1643 = vmatpush1.bf16.msra.mxu0 0
    %1644 = vmatprep.subr.bf16.mxu0 0
    %1645 = vmatpush1.bf16.msra.mxu0 0
    %1646 = vmatprep.subr.bf16.mxu0 0
    %1647 = vmatpush1.bf16.msra.mxu0 0
    %1648 = vmatprep.subr.bf16.mxu0 0
    %1649 = vmatpush1.bf16.msra.mxu0 0
    %1650 = vmatprep.subr.bf16.mxu0 0
    %1651 = vmatpush1.bf16.msra.mxu0 0
    %1652 = vmatprep.subr.bf16.mxu0 0
    %1653 = vmatpush1.bf16.msra.mxu0 0
    %1654 = vmatprep.subr.bf16.mxu0 0
    %1655 = vmatpush1.bf16.msra.mxu0 0
    %1656 = vmatprep.subr.bf16.mxu0 0
    %1657 = vmatpush1.bf16.msra.mxu0 0
    %1658 = vmatprep.subr.bf16.mxu0 0
    %1659 = vmatpush1.bf16.msra.mxu0 0
    %1660 = vmatprep.subr.bf16.mxu0 0
    %1661 = vmatpush1.bf16.msra.mxu0 0
    %1662 = vmatprep.mubr.bf16.mxu0 0
    %1663 = vmatmul.mubr.bf16.gmra.mrb[0].mxu0 %v1625
    %v1664 = vpop.f32.mrb[0].mxu0
    %v1665 = vadd.f32 0.0, %v1664
    %v1666 = vpop.f32.mrb[0].mxu0
    %v1667 = vpop.f32.mrb[0].mxu0
    %v1668 = vadd.f32 0.0, %v1667
    %v1669 = vpop.f32.mrb[0].mxu0
    %1670 = vdwg.mxu0
    %v1671 = vadd.f32 %v1300, %v1665
    %v1672 = vadd.f32 %v1301, %v1668
    %v1673 = vld [vmem:[%s27] sm:$0x1]
    %v1675 = vlaneseq
    %v1676 = vshrl.u32 %v1675, 7
    %v1677 = vsub.s32 0, %v1676
    %v1678 = vrot.slane %v1673, %v1677
    %v1680 = vadd.f32 %v1671, %v1678
    %v1681 = vadd.f32 %v1672, %v1678
    %v1682 = vadd.f32 %v1680, %v189
    %v1683 = vadd.f32 %v1681, %v190
    %v1684 = vld [vmem:[%s29] sm:$0x1]
    %v1685 = vld [vmem:[%s31] sm:$0x1]
    %v1686 = vsel %vm147, %v1682, 0.0
    %1687 = vadd.xlane.f32.xlu0 %v1686
    %v1688 = vpop.xlane.xlu0 %1687
    %v1689 = vsel %vm147, %v1683, 0.0
    %1690 = vadd.xlane.f32.xlu0 %v1689
    %v1691 = vpop.xlane.xlu0 %1690
    %v1692 = vmul.f32 %v1688, %v154
    %v1693 = vmul.f32 %v1691, %v154
    %v1694 = vsub.f32 %v1682, %v1692
    %v1695 = vsub.f32 %v1683, %v1693
    %v1696 = vmul.f32 %v1694, %v1694
    %v1697 = vmul.f32 %v1695, %v1695
    %v1698 = vsel %vm147, %v1696, 0.0
    %1699 = vadd.xlane.f32.xlu0 %v1698
    %v1700 = vpop.xlane.xlu0 %1699
    %v1701 = vsel %vm147, %v1697, 0.0
    %1702 = vadd.xlane.f32.xlu0 %v1701
    %v1703 = vpop.xlane.xlu0 %1702
    %v1704 = vmul.f32 %v1700, %v154
    %v1705 = vmul.f32 %v1703, %v154
    %v1706 = vadd.f32 %v1704, 1e-12
    %v1707 = vadd.f32 %v1705, 1e-12
    %v1708 = vrsqrt.pop %v1706
    %v1709 = vrsqrt.pop %v1707
    %v1710 = vmul.f32 %v1694, %v1708
    %v1711 = vmul.f32 %v1695, %v1709
    %v1713 = vlaneseq
    %v1714 = vshrl.u32 %v1713, 7
    %v1715 = vsub.s32 0, %v1714
    %v1716 = vrot.slane %v1684, %v1715
    %v1718 = vmul.f32 %v1710, %v1716
    %v1719 = vmul.f32 %v1711, %v1716
    %v1721 = vlaneseq
    %v1722 = vshrl.u32 %v1721, 7
    %v1723 = vsub.s32 0, %v1722
    %v1724 = vrot.slane %v1685, %v1723
    %v1726 = vadd.f32 %v1718, %v1724
    %v1727 = vadd.f32 %v1719, %v1724
    %v1728 = vpack.c.bf16 %v1727, %v1726
    %v1729 = vld [vmem:[%s33] sm:$0xf]
    %v1730 = vld [vmem:[%s33 + $0x4] sm:$0xf]
    %v1731 = vld [vmem:[%s33 + $0x8] sm:$0xf]
    %v1732 = vld [vmem:[%s33 + $0xc] sm:$0xf]
    %v1733 = vld [vmem:[%s35] sm:$0x1]
    %v1735 = vlaneseq
    %v1736 = vshrl.u32 %v1735, 7
    %v1737 = vsub.s32 0, %v1736
    %v1738 = vrot.slane %v1733, %v1737
    %v1744 = vunpack.c.l.b16 %v1729
    %v1745 = vunpack.c.l.b16 %v1730
    %v1746 = vunpack.c.l.b16 %v1731
    %v1747 = vunpack.c.l.b16 %v1732
    %v1748 = vpack.c.b16 %v1745, %v1744
    %v1749 = vpack.c.b16 %v1747, %v1746
    %v1753 = vsel %vm147, %v1728, 0
    %1755 = vmatprep.subr.bf16.mxu0 0
    %1756 = vmatpush1.bf16.msra.mxu0 %v1748
    %1757 = vmatprep.subr.bf16.mxu0 0
    %1758 = vmatpush1.bf16.msra.mxu0 %v1749
    %1759 = vmatprep.subr.bf16.mxu0 0
    %1760 = vmatpush1.bf16.msra.mxu0 0
    %1761 = vmatprep.subr.bf16.mxu0 0
    %1762 = vmatpush1.bf16.msra.mxu0 0
    %1763 = vmatprep.subr.bf16.mxu0 0
    %1764 = vmatpush1.bf16.msra.mxu0 0
    %1765 = vmatprep.subr.bf16.mxu0 0
    %1766 = vmatpush1.bf16.msra.mxu0 0
    %1767 = vmatprep.subr.bf16.mxu0 0
    %1768 = vmatpush1.bf16.msra.mxu0 0
    %1769 = vmatprep.subr.bf16.mxu0 0
    %1770 = vmatpush1.bf16.msra.mxu0 0
    %1771 = vmatprep.subr.bf16.mxu0 0
    %1772 = vmatpush1.bf16.msra.mxu0 0
    %1773 = vmatprep.subr.bf16.mxu0 0
    %1774 = vmatpush1.bf16.msra.mxu0 0
    %1775 = vmatprep.subr.bf16.mxu0 0
    %1776 = vmatpush1.bf16.msra.mxu0 0
    %1777 = vmatprep.subr.bf16.mxu0 0
    %1778 = vmatpush1.bf16.msra.mxu0 0
    %1779 = vmatprep.subr.bf16.mxu0 0
    %1780 = vmatpush1.bf16.msra.mxu0 0
    %1781 = vmatprep.subr.bf16.mxu0 0
    %1782 = vmatpush1.bf16.msra.mxu0 0
    %1783 = vmatprep.subr.bf16.mxu0 0
    %1784 = vmatpush1.bf16.msra.mxu0 0
    %1785 = vmatprep.subr.bf16.mxu0 0
    %1786 = vmatpush1.bf16.msra.mxu0 0
    %1787 = vmatprep.mubr.bf16.mxu0 0
    %1788 = vmatmul.mubr.bf16.gmra.mrb[0].mxu0 %v1753
    %v1789 = vpop.f32.mrb[0].mxu0
    %v1790 = vadd.f32 %v1738, %v1789
    %v1791 = vpop.f32.mrb[0].mxu0
    %v1792 = vpop.f32.mrb[0].mxu0
    %v1793 = vadd.f32 %v1738, %v1792
    %v1794 = vpop.f32.mrb[0].mxu0
    %1795 = vdwg.mxu0
    %v1796 = vmul.f32 %v1790, 0.5
    %v1797 = vmul.f32 %v1793, 0.5
    %v1798 = vmul.f32 %v1790, 0.044715
    %v1799 = vmul.f32 %v1793, 0.044715
    %v1800 = vmul.f32 %v1798, %v1790
    %v1801 = vmul.f32 %v1799, %v1793
    %v1802 = vmul.f32 %v1800, %v1790
    %v1803 = vmul.f32 %v1801, %v1793
    %v1804 = vadd.f32 %v1790, %v1802
    %v1805 = vadd.f32 %v1793, %v1803
    %v1806 = vmul.f32 %v1804, 0.7978846
    %v1807 = vmul.f32 %v1805, 0.7978846
    %v1808 = vtanh.pop %v1806
    %v1809 = vtanh.pop %v1807
    %v1810 = vadd.f32 %v1808, 1.0
    %v1811 = vadd.f32 %v1809, 1.0
    %v1812 = vmul.f32 %v1796, %v1810
    %v1813 = vmul.f32 %v1797, %v1811
    %v1814 = vpack.c.bf16 %v1813, %v1812
    %v1815 = vld [vmem:[%s37] sm:$0xf]
    %v1816 = vld [vmem:[%s37 + $0x4] sm:$0xf]
    %v1817 = vld [vmem:[%s37 + $0x8] sm:$0xf]
    %v1818 = vld [vmem:[%s37 + $0xc] sm:$0xf]
    %v1819 = vld [vmem:[%s37 + $0x10] sm:$0xf]
    %v1820 = vld [vmem:[%s37 + $0x14] sm:$0xf]
    %v1821 = vld [vmem:[%s37 + $0x18] sm:$0xf]
    %v1822 = vld [vmem:[%s37 + $0x1c] sm:$0xf]
    %v1823 = vld [vmem:[%s39] sm:$0x1]
    %v1825 = vlaneseq
    %v1826 = vshrl.u32 %v1825, 7
    %v1827 = vsub.s32 0, %v1826
    %v1828 = vrot.slane %v1823, %v1827
    %v1838 = vunpack.c.l.b16 %v1815
    %v1839 = vunpack.c.l.b16 %v1816
    %v1840 = vunpack.c.l.b16 %v1817
    %v1841 = vunpack.c.l.b16 %v1818
    %v1842 = vunpack.c.l.b16 %v1819
    %v1843 = vunpack.c.l.b16 %v1820
    %v1844 = vunpack.c.l.b16 %v1821
    %v1845 = vunpack.c.l.b16 %v1822
    %v1846 = vpack.c.b16 %v1839, %v1838
    %v1847 = vpack.c.b16 %v1841, %v1840
    %v1848 = vpack.c.b16 %v1843, %v1842
    %v1849 = vpack.c.b16 %v1845, %v1844
    %vm1854 = vcmask 523264
    %v1856 = vsel %vm1854, %v1814, 0
    %1858 = vmatprep.subr.bf16.mxu0 0
    %1859 = vmatpush1.bf16.msra.mxu0 %v1846
    %1860 = vmatprep.subr.bf16.mxu0 0
    %1861 = vmatpush1.bf16.msra.mxu0 %v1847
    %1862 = vmatprep.subr.bf16.mxu0 0
    %1863 = vmatpush1.bf16.msra.mxu0 %v1848
    %1864 = vmatprep.subr.bf16.mxu0 0
    %1865 = vmatpush1.bf16.msra.mxu0 %v1849
    %1866 = vmatprep.subr.bf16.mxu0 0
    %1867 = vmatpush1.bf16.msra.mxu0 0
    %1868 = vmatprep.subr.bf16.mxu0 0
    %1869 = vmatpush1.bf16.msra.mxu0 0
    %1870 = vmatprep.subr.bf16.mxu0 0
    %1871 = vmatpush1.bf16.msra.mxu0 0
    %1872 = vmatprep.subr.bf16.mxu0 0
    %1873 = vmatpush1.bf16.msra.mxu0 0
    %1874 = vmatprep.subr.bf16.mxu0 0
    %1875 = vmatpush1.bf16.msra.mxu0 0
    %1876 = vmatprep.subr.bf16.mxu0 0
    %1877 = vmatpush1.bf16.msra.mxu0 0
    %1878 = vmatprep.subr.bf16.mxu0 0
    %1879 = vmatpush1.bf16.msra.mxu0 0
    %1880 = vmatprep.subr.bf16.mxu0 0
    %1881 = vmatpush1.bf16.msra.mxu0 0
    %1882 = vmatprep.subr.bf16.mxu0 0
    %1883 = vmatpush1.bf16.msra.mxu0 0
    %1884 = vmatprep.subr.bf16.mxu0 0
    %1885 = vmatpush1.bf16.msra.mxu0 0
    %1886 = vmatprep.subr.bf16.mxu0 0
    %1887 = vmatpush1.bf16.msra.mxu0 0
    %1888 = vmatprep.subr.bf16.mxu0 0
    %1889 = vmatpush1.bf16.msra.mxu0 0
    %1890 = vmatprep.mubr.bf16.mxu0 0
    %1891 = vmatmul.mubr.bf16.gmra.mrb[0].mxu0 %v1856
    %v1892 = vpop.f32.mrb[0].mxu0
    %v1893 = vadd.f32 %v1828, %v1892
    %v1894 = vpop.f32.mrb[0].mxu0
    %v1895 = vpop.f32.mrb[0].mxu0
    %v1896 = vadd.f32 %v1828, %v1895
    %v1897 = vpop.f32.mrb[0].mxu0
    %1898 = vdwg.mxu0
    %v1899 = vadd.f32 %v1893, %v1726
    %v1900 = vadd.f32 %v1896, %v1727
    %v1901 = vld [vmem:[%s41] sm:$0x1]
    %v1902 = vld [vmem:[%s43] sm:$0x1]
    %v1903 = vsel %vm147, %v1899, 0.0
    %1904 = vadd.xlane.f32.xlu0 %v1903
    %v1905 = vpop.xlane.xlu0 %1904
    %v1906 = vsel %vm147, %v1900, 0.0
    %1907 = vadd.xlane.f32.xlu0 %v1906
    %v1908 = vpop.xlane.xlu0 %1907
    %v1909 = vmul.f32 %v1905, %v154
    %v1910 = vmul.f32 %v1908, %v154
    %v1911 = vsub.f32 %v1899, %v1909
    %v1912 = vsub.f32 %v1900, %v1910
    %v1913 = vmul.f32 %v1911, %v1911
    %v1914 = vmul.f32 %v1912, %v1912
    %v1915 = vsel %vm147, %v1913, 0.0
    %1916 = vadd.xlane.f32.xlu0 %v1915
    %v1917 = vpop.xlane.xlu0 %1916
    %v1918 = vsel %vm147, %v1914, 0.0
    %1919 = vadd.xlane.f32.xlu0 %v1918
    %v1920 = vpop.xlane.xlu0 %1919
    %v1921 = vmul.f32 %v1917, %v154
    %v1922 = vmul.f32 %v1920, %v154
    %v1923 = vadd.f32 %v1921, 1e-12
    %v1924 = vadd.f32 %v1922, 1e-12
    %v1925 = vrsqrt.pop %v1923
    %v1926 = vrsqrt.pop %v1924
    %v1927 = vmul.f32 %v1911, %v1925
    %v1928 = vmul.f32 %v1912, %v1926
    %v1930 = vlaneseq
    %v1931 = vshrl.u32 %v1930, 7
    %v1932 = vsub.s32 0, %v1931
    %v1933 = vrot.slane %v1901, %v1932
    %v1935 = vmul.f32 %v1927, %v1933
    %v1936 = vmul.f32 %v1928, %v1933
    %v1938 = vlaneseq
    %v1939 = vshrl.u32 %v1938, 7
    %v1940 = vsub.s32 0, %v1939
    %v1941 = vrot.slane %v1902, %v1940
    %v1943 = vadd.f32 %v1935, %v1941
    %v1944 = vadd.f32 %v1936, %v1941
    %v1945 = vpack.c.bf16 %v1944, %v1943
    %s1946 = scalar_lea.vmem %s13, 64
    %v1947 = vld [vmem:[%s1946] sm:$0xf]
    %v1948 = vld [vmem:[%s1946 + $0x4] sm:$0xf]
    %v1949 = vld [vmem:[%s1946 + $0x8] sm:$0xf]
    %v1950 = vld [vmem:[%s1946 + $0xc] sm:$0xf]
    %s1951 = scalar_lea.vmem %s19, 4
    %v1952 = vld [vmem:[%s1951] sm:$0x1]
    %v1954 = vlaneseq
    %v1955 = vshrl.u32 %v1954, 7
    %v1956 = vsub.s32 0, %v1955
    %v1957 = vrot.slane %v1952, %v1956
    %v1963 = vunpack.c.l.b16 %v1947
    %v1964 = vunpack.c.l.b16 %v1948
    %v1965 = vunpack.c.l.b16 %v1949
    %v1966 = vunpack.c.l.b16 %v1950
    %v1967 = vpack.c.b16 %v1964, %v1963
    %v1968 = vpack.c.b16 %v1966, %v1965
    %v1972 = vsel %vm147, %v1945, 0
    %1974 = vmatprep.subr.bf16.mxu0 0
    %1975 = vmatpush1.bf16.msra.mxu0 %v1967
    %1976 = vmatprep.subr.bf16.mxu0 0
    %1977 = vmatpush1.bf16.msra.mxu0 %v1968
    %1978 = vmatprep.subr.bf16.mxu0 0
    %1979 = vmatpush1.bf16.msra.mxu0 0
    %1980 = vmatprep.subr.bf16.mxu0 0
    %1981 = vmatpush1.bf16.msra.mxu0 0
    %1982 = vmatprep.subr.bf16.mxu0 0
    %1983 = vmatpush1.bf16.msra.mxu0 0
    %1984 = vmatprep.subr.bf16.mxu0 0
    %1985 = vmatpush1.bf16.msra.mxu0 0
    %1986 = vmatprep.subr.bf16.mxu0 0
    %1987 = vmatpush1.bf16.msra.mxu0 0
    %1988 = vmatprep.subr.bf16.mxu0 0
    %1989 = vmatpush1.bf16.msra.mxu0 0
    %1990 = vmatprep.subr.bf16.mxu0 0
    %1991 = vmatpush1.bf16.msra.mxu0 0
    %1992 = vmatprep.subr.bf16.mxu0 0
    %1993 = vmatpush1.bf16.msra.mxu0 0
    %1994 = vmatprep.subr.bf16.mxu0 0
    %1995 = vmatpush1.bf16.msra.mxu0 0
    %1996 = vmatprep.subr.bf16.mxu0 0
    %1997 = vmatpush1.bf16.msra.mxu0 0
    %1998 = vmatprep.subr.bf16.mxu0 0
    %1999 = vmatpush1.bf16.msra.mxu0 0
    %2000 = vmatprep.subr.bf16.mxu0 0
    %2001 = vmatpush1.bf16.msra.mxu0 0
    %2002 = vmatprep.subr.bf16.mxu0 0
    %2003 = vmatpush1.bf16.msra.mxu0 0
    %2004 = vmatprep.subr.bf16.mxu0 0
    %2005 = vmatpush1.bf16.msra.mxu0 0
    %2006 = vmatprep.mubr.bf16.mxu0 0
    %2007 = vmatmul.mubr.bf16.gmra.mrb[0].mxu0 %v1972
    %v2008 = vpop.f32.mrb[0].mxu0
    %v2009 = vadd.f32 %v1957, %v2008
    %v2010 = vpop.f32.mrb[0].mxu0
    %v2011 = vpop.f32.mrb[0].mxu0
    %v2012 = vadd.f32 %v1957, %v2011
    %v2013 = vpop.f32.mrb[0].mxu0
    %2014 = vdwg.mxu0
    %s2015 = scalar_lea.vmem %s15, 64
    %v2016 = vld [vmem:[%s2015] sm:$0xf]
    %v2017 = vld [vmem:[%s2015 + $0x4] sm:$0xf]
    %v2018 = vld [vmem:[%s2015 + $0x8] sm:$0xf]
    %v2019 = vld [vmem:[%s2015 + $0xc] sm:$0xf]
    %s2020 = scalar_lea.vmem %s21, 4
    %v2021 = vld [vmem:[%s2020] sm:$0x1]
    %v2023 = vlaneseq
    %v2024 = vshrl.u32 %v2023, 7
    %v2025 = vsub.s32 0, %v2024
    %v2026 = vrot.slane %v2021, %v2025
    %v2032 = vunpack.c.l.b16 %v2016
    %v2033 = vunpack.c.l.b16 %v2017
    %v2034 = vunpack.c.l.b16 %v2018
    %v2035 = vunpack.c.l.b16 %v2019
    %v2036 = vpack.c.b16 %v2033, %v2032
    %v2037 = vpack.c.b16 %v2035, %v2034
    %2040 = vmatprep.subr.bf16.mxu0 0
    %2041 = vmatpush1.bf16.msra.mxu0 %v2036
    %2042 = vmatprep.subr.bf16.mxu0 0
    %2043 = vmatpush1.bf16.msra.mxu0 %v2037
    %2044 = vmatprep.subr.bf16.mxu0 0
    %2045 = vmatpush1.bf16.msra.mxu0 0
    %2046 = vmatprep.subr.bf16.mxu0 0
    %2047 = vmatpush1.bf16.msra.mxu0 0
    %2048 = vmatprep.subr.bf16.mxu0 0
    %2049 = vmatpush1.bf16.msra.mxu0 0
    %2050 = vmatprep.subr.bf16.mxu0 0
    %2051 = vmatpush1.bf16.msra.mxu0 0
    %2052 = vmatprep.subr.bf16.mxu0 0
    %2053 = vmatpush1.bf16.msra.mxu0 0
    %2054 = vmatprep.subr.bf16.mxu0 0
    %2055 = vmatpush1.bf16.msra.mxu0 0
    %2056 = vmatprep.subr.bf16.mxu0 0
    %2057 = vmatpush1.bf16.msra.mxu0 0
    %2058 = vmatprep.subr.bf16.mxu0 0
    %2059 = vmatpush1.bf16.msra.mxu0 0
    %2060 = vmatprep.subr.bf16.mxu0 0
    %2061 = vmatpush1.bf16.msra.mxu0 0
    %2062 = vmatprep.subr.bf16.mxu0 0
    %2063 = vmatpush1.bf16.msra.mxu0 0
    %2064 = vmatprep.subr.bf16.mxu0 0
    %2065 = vmatpush1.bf16.msra.mxu0 0
    %2066 = vmatprep.subr.bf16.mxu0 0
    %2067 = vmatpush1.bf16.msra.mxu0 0
    %2068 = vmatprep.subr.bf16.mxu0 0
    %2069 = vmatpush1.bf16.msra.mxu0 0
    %2070 = vmatprep.subr.bf16.mxu0 0
    %2071 = vmatpush1.bf16.msra.mxu0 0
    %2072 = vmatprep.mubr.bf16.mxu0 0
    %2073 = vmatmul.mubr.bf16.gmra.mrb[0].mxu0 %v1972
    %v2074 = vpop.f32.mrb[0].mxu0
    %v2075 = vadd.f32 %v2026, %v2074
    %v2076 = vpop.f32.mrb[0].mxu0
    %v2077 = vpop.f32.mrb[0].mxu0
    %v2078 = vadd.f32 %v2026, %v2077
    %v2079 = vpop.f32.mrb[0].mxu0
    %2080 = vdwg.mxu0
    %s2081 = scalar_lea.vmem %s17, 64
    %v2082 = vld [vmem:[%s2081] sm:$0xf]
    %v2083 = vld [vmem:[%s2081 + $0x4] sm:$0xf]
    %v2084 = vld [vmem:[%s2081 + $0x8] sm:$0xf]
    %v2085 = vld [vmem:[%s2081 + $0xc] sm:$0xf]
    %s2086 = scalar_lea.vmem %s23, 4
    %v2087 = vld [vmem:[%s2086] sm:$0x1]
    %v2089 = vlaneseq
    %v2090 = vshrl.u32 %v2089, 7
    %v2091 = vsub.s32 0, %v2090
    %v2092 = vrot.slane %v2087, %v2091
    %v2098 = vunpack.c.l.b16 %v2082
    %v2099 = vunpack.c.l.b16 %v2083
    %v2100 = vunpack.c.l.b16 %v2084
    %v2101 = vunpack.c.l.b16 %v2085
    %v2102 = vpack.c.b16 %v2099, %v2098
    %v2103 = vpack.c.b16 %v2101, %v2100
    %2106 = vmatprep.subr.bf16.mxu0 0
    %2107 = vmatpush1.bf16.msra.mxu0 %v2102
    %2108 = vmatprep.subr.bf16.mxu0 0
    %2109 = vmatpush1.bf16.msra.mxu0 %v2103
    %2110 = vmatprep.subr.bf16.mxu0 0
    %2111 = vmatpush1.bf16.msra.mxu0 0
    %2112 = vmatprep.subr.bf16.mxu0 0
    %2113 = vmatpush1.bf16.msra.mxu0 0
    %2114 = vmatprep.subr.bf16.mxu0 0
    %2115 = vmatpush1.bf16.msra.mxu0 0
    %2116 = vmatprep.subr.bf16.mxu0 0
    %2117 = vmatpush1.bf16.msra.mxu0 0
    %2118 = vmatprep.subr.bf16.mxu0 0
    %2119 = vmatpush1.bf16.msra.mxu0 0
    %2120 = vmatprep.subr.bf16.mxu0 0
    %2121 = vmatpush1.bf16.msra.mxu0 0
    %2122 = vmatprep.subr.bf16.mxu0 0
    %2123 = vmatpush1.bf16.msra.mxu0 0
    %2124 = vmatprep.subr.bf16.mxu0 0
    %2125 = vmatpush1.bf16.msra.mxu0 0
    %2126 = vmatprep.subr.bf16.mxu0 0
    %2127 = vmatpush1.bf16.msra.mxu0 0
    %2128 = vmatprep.subr.bf16.mxu0 0
    %2129 = vmatpush1.bf16.msra.mxu0 0
    %2130 = vmatprep.subr.bf16.mxu0 0
    %2131 = vmatpush1.bf16.msra.mxu0 0
    %2132 = vmatprep.subr.bf16.mxu0 0
    %2133 = vmatpush1.bf16.msra.mxu0 0
    %2134 = vmatprep.subr.bf16.mxu0 0
    %2135 = vmatpush1.bf16.msra.mxu0 0
    %2136 = vmatprep.subr.bf16.mxu0 0
    %2137 = vmatpush1.bf16.msra.mxu0 0
    %2138 = vmatprep.mubr.bf16.mxu0 0
    %2139 = vmatmul.mubr.bf16.gmra.mrb[0].mxu0 %v1972
    %v2140 = vpop.f32.mrb[0].mxu0
    %v2141 = vadd.f32 %v2092, %v2140
    %v2142 = vpop.f32.mrb[0].mxu0
    %v2143 = vpop.f32.mrb[0].mxu0
    %v2144 = vadd.f32 %v2092, %v2143
    %v2145 = vpop.f32.mrb[0].mxu0
    %2146 = vdwg.mxu0
    %v2147 = vpack.c.bf16 %v2012, %v2009
    %v2148 = vpack.c.bf16 %v2078, %v2075
    %v2150 = vsel %vm391, %v2147, 0
    %v2153 = vsel %vm391, %v2148, 0
    %2155 = vmatprep.subr.bf16.mxu0 0
    %2156 = vmatpush1.bf16.xpose.msra.mxu0 %v2153
    %2157 = vmatprep.subr.bf16.mxu0 0
    %2158 = vmatpush1.bf16.xpose.msra.mxu0 0
    %2159 = vmatprep.subr.bf16.mxu0 0
    %2160 = vmatpush1.bf16.xpose.msra.mxu0 0
    %2161 = vmatprep.subr.bf16.mxu0 0
    %2162 = vmatpush1.bf16.xpose.msra.mxu0 0
    %2163 = vmatprep.subr.bf16.mxu0 0
    %2164 = vmatpush1.bf16.xpose.msra.mxu0 0
    %2165 = vmatprep.subr.bf16.mxu0 0
    %2166 = vmatpush1.bf16.xpose.msra.mxu0 0
    %2167 = vmatprep.subr.bf16.mxu0 0
    %2168 = vmatpush1.bf16.xpose.msra.mxu0 0
    %2169 = vmatprep.subr.bf16.mxu0 0
    %2170 = vmatpush1.bf16.xpose.msra.mxu0 0
    %2171 = vmatprep.subr.bf16.mxu0 0
    %2172 = vmatpush1.bf16.xpose.msra.mxu0 0
    %2173 = vmatprep.subr.bf16.mxu0 0
    %2174 = vmatpush1.bf16.xpose.msra.mxu0 0
    %2175 = vmatprep.subr.bf16.mxu0 0
    %2176 = vmatpush1.bf16.xpose.msra.mxu0 0
    %2177 = vmatprep.subr.bf16.mxu0 0
    %2178 = vmatpush1.bf16.xpose.msra.mxu0 0
    %2179 = vmatprep.subr.bf16.mxu0 0
    %2180 = vmatpush1.bf16.xpose.msra.mxu0 0
    %2181 = vmatprep.subr.bf16.mxu0 0
    %2182 = vmatpush1.bf16.xpose.msra.mxu0 0
    %2183 = vmatprep.subr.bf16.mxu0 0
    %2184 = vmatpush1.bf16.xpose.msra.mxu0 0
    %2185 = vmatprep.subr.bf16.mxu0 0
    %2186 = vmatpush1.bf16.xpose.msra.mxu0 0
    %2187 = vmatprep.mubr.bf16.mxu0 0
    %2188 = vmatmul.mubr.bf16.gmra.mrb[0].mxu0 %v2150
    %v2189 = vpop.f32.mrb[0].mxu0
    %v2190 = vadd.f32 0.0, %v2189
    %v2191 = vpop.f32.mrb[0].mxu0
    %v2192 = vpop.f32.mrb[0].mxu0
    %v2193 = vadd.f32 0.0, %v2192
    %v2194 = vpop.f32.mrb[0].mxu0
    %2195 = vdwg.mxu0
    %v2196 = vmul.f32 %v2190, 0.35355338
    %v2197 = vmul.f32 %v2193, 0.35355338
    %v2198 = vadd.f32 %v2196, %v192
    %v2199 = vadd.f32 %v2197, %v193
    %v2200 = vsel %vm443, %v2198, -inf
    %2201 = vmax.xlane.f32.xlu0 %v2200
    %v2202 = vpop.xlane.xlu0 %2201
    %v2203 = vsel %vm443, %v2199, -inf
    %2204 = vmax.xlane.f32.xlu0 %v2203
    %v2205 = vpop.xlane.xlu0 %2204
    %v2206 = vsub.f32 %v2198, %v2202
    %v2207 = vsub.f32 %v2199, %v2205
    %v2208 = vmul.f32 %v2206, 1.442695
    %v2209 = vpow.pop %v2208
    %v2210 = vmul.f32 %v2207, 1.442695
    %v2211 = vpow.pop %v2210
    %v2212 = vsel %vm443, %v2209, 0.0
    %2213 = vadd.xlane.f32.xlu0 %v2212
    %v2214 = vpop.xlane.xlu0 %2213
    %v2215 = vsel %vm443, %v2211, 0.0
    %2216 = vadd.xlane.f32.xlu0 %v2215
    %v2217 = vpop.xlane.xlu0 %2216
    %v2218 = vrcp.pop %v2214
    %v2219 = vmul.f32 %v2209, %v2218
    %v2220 = vrcp.pop %v2217
    %v2221 = vmul.f32 %v2211, %v2220
    %v2222 = vpack.c.bf16 %v2221, %v2219
    %v2223 = vpack.c.bf16 %v2144, %v2141
    %v2225 = vsel %vm443, %v2222, 0
    %2227 = vmatprep.subr.bf16.mxu0 0
    %2228 = vmatpush1.bf16.msra.mxu0 %v2223
    %2229 = vmatprep.subr.bf16.mxu0 0
    %2230 = vmatpush1.bf16.msra.mxu0 0
    %2231 = vmatprep.subr.bf16.mxu0 0
    %2232 = vmatpush1.bf16.msra.mxu0 0
    %2233 = vmatprep.subr.bf16.mxu0 0
    %2234 = vmatpush1.bf16.msra.mxu0 0
    %2235 = vmatprep.subr.bf16.mxu0 0
    %2236 = vmatpush1.bf16.msra.mxu0 0
    %2237 = vmatprep.subr.bf16.mxu0 0
    %2238 = vmatpush1.bf16.msra.mxu0 0
    %2239 = vmatprep.subr.bf16.mxu0 0
    %2240 = vmatpush1.bf16.msra.mxu0 0
    %2241 = vmatprep.subr.bf16.mxu0 0
    %2242 = vmatpush1.bf16.msra.mxu0 0
    %2243 = vmatprep.subr.bf16.mxu0 0
    %2244 = vmatpush1.bf16.msra.mxu0 0
    %2245 = vmatprep.subr.bf16.mxu0 0
    %2246 = vmatpush1.bf16.msra.mxu0 0
    %2247 = vmatprep.subr.bf16.mxu0 0
    %2248 = vmatpush1.bf16.msra.mxu0 0
    %2249 = vmatprep.subr.bf16.mxu0 0
    %2250 = vmatpush1.bf16.msra.mxu0 0
    %2251 = vmatprep.subr.bf16.mxu0 0
    %2252 = vmatpush1.bf16.msra.mxu0 0
    %2253 = vmatprep.subr.bf16.mxu0 0
    %2254 = vmatpush1.bf16.msra.mxu0 0
    %2255 = vmatprep.subr.bf16.mxu0 0
    %2256 = vmatpush1.bf16.msra.mxu0 0
    %2257 = vmatprep.subr.bf16.mxu0 0
    %2258 = vmatpush1.bf16.msra.mxu0 0
    %2259 = vmatprep.mubr.bf16.mxu0 0
    %2260 = vmatmul.mubr.bf16.gmra.mrb[0].mxu0 %v2225
    %v2261 = vpop.f32.mrb[0].mxu0
    %v2262 = vadd.f32 0.0, %v2261
    %v2263 = vpop.f32.mrb[0].mxu0
    %v2264 = vpop.f32.mrb[0].mxu0
    %v2265 = vadd.f32 0.0, %v2264
    %v2266 = vpop.f32.mrb[0].mxu0
    %2267 = vdwg.mxu0
    %v2268 = vpack.c.bf16 %v2265, %v2262
    %s2269 = scalar_lea.vmem %s25, 16
    %v2270 = vld [vmem:[%s2269] sm:$0xf]
    %s2271 = scalar_lea.vmem %s13, 80
    %v2272 = vld [vmem:[%s2271] sm:$0xf]
    %v2273 = vld [vmem:[%s2271 + $0x4] sm:$0xf]
    %v2274 = vld [vmem:[%s2271 + $0x8] sm:$0xf]
    %v2275 = vld [vmem:[%s2271 + $0xc] sm:$0xf]
    %s2276 = scalar_lea.vmem %s19, 5
    %v2277 = vld [vmem:[%s2276] sm:$0x1]
    %v2279 = vlaneseq
    %v2280 = vshrl.u32 %v2279, 7
    %v2281 = vsub.s32 0, %v2280
    %v2282 = vrot.slane %v2277, %v2281
    %v2288 = vunpack.c.l.b16 %v2272
    %v2289 = vunpack.c.l.b16 %v2273
    %v2290 = vunpack.c.l.b16 %v2274
    %v2291 = vunpack.c.l.b16 %v2275
    %v2292 = vpack.c.b16 %v2289, %v2288
    %v2293 = vpack.c.b16 %v2291, %v2290
    %2296 = vmatprep.subr.bf16.mxu0 0
    %2297 = vmatpush1.bf16.msra.mxu0 %v2292
    %2298 = vmatprep.subr.bf16.mxu0 0
    %2299 = vmatpush1.bf16.msra.mxu0 %v2293
    %2300 = vmatprep.subr.bf16.mxu0 0
    %2301 = vmatpush1.bf16.msra.mxu0 0
    %2302 = vmatprep.subr.bf16.mxu0 0
    %2303 = vmatpush1.bf16.msra.mxu0 0
    %2304 = vmatprep.subr.bf16.mxu0 0
    %2305 = vmatpush1.bf16.msra.mxu0 0
    %2306 = vmatprep.subr.bf16.mxu0 0
    %2307 = vmatpush1.bf16.msra.mxu0 0
    %2308 = vmatprep.subr.bf16.mxu0 0
    %2309 = vmatpush1.bf16.msra.mxu0 0
    %2310 = vmatprep.subr.bf16.mxu0 0
    %2311 = vmatpush1.bf16.msra.mxu0 0
    %2312 = vmatprep.subr.bf16.mxu0 0
    %2313 = vmatpush1.bf16.msra.mxu0 0
    %2314 = vmatprep.subr.bf16.mxu0 0
    %2315 = vmatpush1.bf16.msra.mxu0 0
    %2316 = vmatprep.subr.bf16.mxu0 0
    %2317 = vmatpush1.bf16.msra.mxu0 0
    %2318 = vmatprep.subr.bf16.mxu0 0
    %2319 = vmatpush1.bf16.msra.mxu0 0
    %2320 = vmatprep.subr.bf16.mxu0 0
    %2321 = vmatpush1.bf16.msra.mxu0 0
    %2322 = vmatprep.subr.bf16.mxu0 0
    %2323 = vmatpush1.bf16.msra.mxu0 0
    %2324 = vmatprep.subr.bf16.mxu0 0
    %2325 = vmatpush1.bf16.msra.mxu0 0
    %2326 = vmatprep.subr.bf16.mxu0 0
    %2327 = vmatpush1.bf16.msra.mxu0 0
    %2328 = vmatprep.mubr.bf16.mxu0 0
    %2329 = vmatmul.mubr.bf16.gmra.mrb[0].mxu0 %v1972
    %v2330 = vpop.f32.mrb[0].mxu0
    %v2331 = vadd.f32 %v2282, %v2330
    %v2332 = vpop.f32.mrb[0].mxu0
    %v2333 = vpop.f32.mrb[0].mxu0
    %v2334 = vadd.f32 %v2282, %v2333
    %v2335 = vpop.f32.mrb[0].mxu0
    %2336 = vdwg.mxu0
    %s2337 = scalar_lea.vmem %s15, 80
    %v2338 = vld [vmem:[%s2337] sm:$0xf]
    %v2339 = vld [vmem:[%s2337 + $0x4] sm:$0xf]
    %v2340 = vld [vmem:[%s2337 + $0x8] sm:$0xf]
    %v2341 = vld [vmem:[%s2337 + $0xc] sm:$0xf]
    %s2342 = scalar_lea.vmem %s21, 5
    %v2343 = vld [vmem:[%s2342] sm:$0x1]
    %v2345 = vlaneseq
    %v2346 = vshrl.u32 %v2345, 7
    %v2347 = vsub.s32 0, %v2346
    %v2348 = vrot.slane %v2343, %v2347
    %v2354 = vunpack.c.l.b16 %v2338
    %v2355 = vunpack.c.l.b16 %v2339
    %v2356 = vunpack.c.l.b16 %v2340
    %v2357 = vunpack.c.l.b16 %v2341
    %v2358 = vpack.c.b16 %v2355, %v2354
    %v2359 = vpack.c.b16 %v2357, %v2356
    %2362 = vmatprep.subr.bf16.mxu0 0
    %2363 = vmatpush1.bf16.msra.mxu0 %v2358
    %2364 = vmatprep.subr.bf16.mxu0 0
    %2365 = vmatpush1.bf16.msra.mxu0 %v2359
    %2366 = vmatprep.subr.bf16.mxu0 0
    %2367 = vmatpush1.bf16.msra.mxu0 0
    %2368 = vmatprep.subr.bf16.mxu0 0
    %2369 = vmatpush1.bf16.msra.mxu0 0
    %2370 = vmatprep.subr.bf16.mxu0 0
    %2371 = vmatpush1.bf16.msra.mxu0 0
    %2372 = vmatprep.subr.bf16.mxu0 0
    %2373 = vmatpush1.bf16.msra.mxu0 0
    %2374 = vmatprep.subr.bf16.mxu0 0
    %2375 = vmatpush1.bf16.msra.mxu0 0
    %2376 = vmatprep.subr.bf16.mxu0 0
    %2377 = vmatpush1.bf16.msra.mxu0 0
    %2378 = vmatprep.subr.bf16.mxu0 0
    %2379 = vmatpush1.bf16.msra.mxu0 0
    %2380 = vmatprep.subr.bf16.mxu0 0
    %2381 = vmatpush1.bf16.msra.mxu0 0
    %2382 = vmatprep.subr.bf16.mxu0 0
    %2383 = vmatpush1.bf16.msra.mxu0 0
    %2384 = vmatprep.subr.bf16.mxu0 0
    %2385 = vmatpush1.bf16.msra.mxu0 0
    %2386 = vmatprep.subr.bf16.mxu0 0
    %2387 = vmatpush1.bf16.msra.mxu0 0
    %2388 = vmatprep.subr.bf16.mxu0 0
    %2389 = vmatpush1.bf16.msra.mxu0 0
    %2390 = vmatprep.subr.bf16.mxu0 0
    %2391 = vmatpush1.bf16.msra.mxu0 0
    %2392 = vmatprep.subr.bf16.mxu0 0
    %2393 = vmatpush1.bf16.msra.mxu0 0
    %2394 = vmatprep.mubr.bf16.mxu0 0
    %2395 = vmatmul.mubr.bf16.gmra.mrb[0].mxu0 %v1972
    %v2396 = vpop.f32.mrb[0].mxu0
    %v2397 = vadd.f32 %v2348, %v2396
    %v2398 = vpop.f32.mrb[0].mxu0
    %v2399 = vpop.f32.mrb[0].mxu0
    %v2400 = vadd.f32 %v2348, %v2399
    %v2401 = vpop.f32.mrb[0].mxu0
    %2402 = vdwg.mxu0
    %s2403 = scalar_lea.vmem %s17, 80
    %v2404 = vld [vmem:[%s2403] sm:$0xf]
    %v2405 = vld [vmem:[%s2403 + $0x4] sm:$0xf]
    %v2406 = vld [vmem:[%s2403 + $0x8] sm:$0xf]
    %v2407 = vld [vmem:[%s2403 + $0xc] sm:$0xf]
    %s2408 = scalar_lea.vmem %s23, 5
    %v2409 = vld [vmem:[%s2408] sm:$0x1]
    %v2411 = vlaneseq
    %v2412 = vshrl.u32 %v2411, 7
    %v2413 = vsub.s32 0, %v2412
    %v2414 = vrot.slane %v2409, %v2413
    %v2420 = vunpack.c.l.b16 %v2404
    %v2421 = vunpack.c.l.b16 %v2405
    %v2422 = vunpack.c.l.b16 %v2406
    %v2423 = vunpack.c.l.b16 %v2407
    %v2424 = vpack.c.b16 %v2421, %v2420
    %v2425 = vpack.c.b16 %v2423, %v2422
    %2428 = vmatprep.subr.bf16.mxu0 0
    %2429 = vmatpush1.bf16.msra.mxu0 %v2424
    %2430 = vmatprep.subr.bf16.mxu0 0
    %2431 = vmatpush1.bf16.msra.mxu0 %v2425
    %2432 = vmatprep.subr.bf16.mxu0 0
    %2433 = vmatpush1.bf16.msra.mxu0 0
    %2434 = vmatprep.subr.bf16.mxu0 0
    %2435 = vmatpush1.bf16.msra.mxu0 0
    %2436 = vmatprep.subr.bf16.mxu0 0
    %2437 = vmatpush1.bf16.msra.mxu0 0
    %2438 = vmatprep.subr.bf16.mxu0 0
    %2439 = vmatpush1.bf16.msra.mxu0 0
    %2440 = vmatprep.subr.bf16.mxu0 0
    %2441 = vmatpush1.bf16.msra.mxu0 0
    %2442 = vmatprep.subr.bf16.mxu0 0
    %2443 = vmatpush1.bf16.msra.mxu0 0
    %2444 = vmatprep.subr.bf16.mxu0 0
    %2445 = vmatpush1.bf16.msra.mxu0 0
    %2446 = vmatprep.subr.bf16.mxu0 0
    %2447 = vmatpush1.bf16.msra.mxu0 0
    %2448 = vmatprep.subr.bf16.mxu0 0
    %2449 = vmatpush1.bf16.msra.mxu0 0
    %2450 = vmatprep.subr.bf16.mxu0 0
    %2451 = vmatpush1.bf16.msra.mxu0 0
    %2452 = vmatprep.subr.bf16.mxu0 0
    %2453 = vmatpush1.bf16.msra.mxu0 0
    %2454 = vmatprep.subr.bf16.mxu0 0
    %2455 = vmatpush1.bf16.msra.mxu0 0
    %2456 = vmatprep.subr.bf16.mxu0 0
    %2457 = vmatpush1.bf16.msra.mxu0 0
    %2458 = vmatprep.subr.bf16.mxu0 0
    %2459 = vmatpush1.bf16.msra.mxu0 0
    %2460 = vmatprep.mubr.bf16.mxu0 0
    %2461 = vmatmul.mubr.bf16.gmra.mrb[0].mxu0 %v1972
    %v2462 = vpop.f32.mrb[0].mxu0
    %v2463 = vadd.f32 %v2414, %v2462
    %v2464 = vpop.f32.mrb[0].mxu0
    %v2465 = vpop.f32.mrb[0].mxu0
    %v2466 = vadd.f32 %v2414, %v2465
    %v2467 = vpop.f32.mrb[0].mxu0
    %2468 = vdwg.mxu0
    %v2469 = vpack.c.bf16 %v2334, %v2331
    %v2470 = vpack.c.bf16 %v2400, %v2397
    %v2472 = vsel %vm391, %v2469, 0
    %v2475 = vsel %vm391, %v2470, 0
    %2477 = vmatprep.subr.bf16.mxu0 0
    %2478 = vmatpush1.bf16.xpose.msra.mxu0 %v2475
    %2479 = vmatprep.subr.bf16.mxu0 0
    %2480 = vmatpush1.bf16.xpose.msra.mxu0 0
    %2481 = vmatprep.subr.bf16.mxu0 0
    %2482 = vmatpush1.bf16.xpose.msra.mxu0 0
    %2483 = vmatprep.subr.bf16.mxu0 0
    %2484 = vmatpush1.bf16.xpose.msra.mxu0 0
    %2485 = vmatprep.subr.bf16.mxu0 0
    %2486 = vmatpush1.bf16.xpose.msra.mxu0 0
    %2487 = vmatprep.subr.bf16.mxu0 0
    %2488 = vmatpush1.bf16.xpose.msra.mxu0 0
    %2489 = vmatprep.subr.bf16.mxu0 0
    %2490 = vmatpush1.bf16.xpose.msra.mxu0 0
    %2491 = vmatprep.subr.bf16.mxu0 0
    %2492 = vmatpush1.bf16.xpose.msra.mxu0 0
    %2493 = vmatprep.subr.bf16.mxu0 0
    %2494 = vmatpush1.bf16.xpose.msra.mxu0 0
    %2495 = vmatprep.subr.bf16.mxu0 0
    %2496 = vmatpush1.bf16.xpose.msra.mxu0 0
    %2497 = vmatprep.subr.bf16.mxu0 0
    %2498 = vmatpush1.bf16.xpose.msra.mxu0 0
    %2499 = vmatprep.subr.bf16.mxu0 0
    %2500 = vmatpush1.bf16.xpose.msra.mxu0 0
    %2501 = vmatprep.subr.bf16.mxu0 0
    %2502 = vmatpush1.bf16.xpose.msra.mxu0 0
    %2503 = vmatprep.subr.bf16.mxu0 0
    %2504 = vmatpush1.bf16.xpose.msra.mxu0 0
    %2505 = vmatprep.subr.bf16.mxu0 0
    %2506 = vmatpush1.bf16.xpose.msra.mxu0 0
    %2507 = vmatprep.subr.bf16.mxu0 0
    %2508 = vmatpush1.bf16.xpose.msra.mxu0 0
    %2509 = vmatprep.mubr.bf16.mxu0 0
    %2510 = vmatmul.mubr.bf16.gmra.mrb[0].mxu0 %v2472
    %v2511 = vpop.f32.mrb[0].mxu0
    %v2512 = vadd.f32 0.0, %v2511
    %v2513 = vpop.f32.mrb[0].mxu0
    %v2514 = vpop.f32.mrb[0].mxu0
    %v2515 = vadd.f32 0.0, %v2514
    %v2516 = vpop.f32.mrb[0].mxu0
    %2517 = vdwg.mxu0
    %v2518 = vmul.f32 %v2512, 0.35355338
    %v2519 = vmul.f32 %v2515, 0.35355338
    %v2520 = vadd.f32 %v2518, %v192
    %v2521 = vadd.f32 %v2519, %v193
    %v2522 = vsel %vm443, %v2520, -inf
    %2523 = vmax.xlane.f32.xlu0 %v2522
    %v2524 = vpop.xlane.xlu0 %2523
    %v2525 = vsel %vm443, %v2521, -inf
    %2526 = vmax.xlane.f32.xlu0 %v2525
    %v2527 = vpop.xlane.xlu0 %2526
    %v2528 = vsub.f32 %v2520, %v2524
    %v2529 = vsub.f32 %v2521, %v2527
    %v2530 = vmul.f32 %v2528, 1.442695
    %v2531 = vpow.pop %v2530
    %v2532 = vmul.f32 %v2529, 1.442695
    %v2533 = vpow.pop %v2532
    %v2534 = vsel %vm443, %v2531, 0.0
    %2535 = vadd.xlane.f32.xlu0 %v2534
    %v2536 = vpop.xlane.xlu0 %2535
    %v2537 = vsel %vm443, %v2533, 0.0
    %2538 = vadd.xlane.f32.xlu0 %v2537
    %v2539 = vpop.xlane.xlu0 %2538
    %v2540 = vrcp.pop %v2536
    %v2541 = vmul.f32 %v2531, %v2540
    %v2542 = vrcp.pop %v2539
    %v2543 = vmul.f32 %v2533, %v2542
    %v2544 = vpack.c.bf16 %v2543, %v2541
    %v2545 = vpack.c.bf16 %v2466, %v2463
    %v2547 = vsel %vm443, %v2544, 0
    %2549 = vmatprep.subr.bf16.mxu0 0
    %2550 = vmatpush1.bf16.msra.mxu0 %v2545
    %2551 = vmatprep.subr.bf16.mxu0 0
    %2552 = vmatpush1.bf16.msra.mxu0 0
    %2553 = vmatprep.subr.bf16.mxu0 0
    %2554 = vmatpush1.bf16.msra.mxu0 0
    %2555 = vmatprep.subr.bf16.mxu0 0
    %2556 = vmatpush1.bf16.msra.mxu0 0
    %2557 = vmatprep.subr.bf16.mxu0 0
    %2558 = vmatpush1.bf16.msra.mxu0 0
    %2559 = vmatprep.subr.bf16.mxu0 0
    %2560 = vmatpush1.bf16.msra.mxu0 0
    %2561 = vmatprep.subr.bf16.mxu0 0
    %2562 = vmatpush1.bf16.msra.mxu0 0
    %2563 = vmatprep.subr.bf16.mxu0 0
    %2564 = vmatpush1.bf16.msra.mxu0 0
    %2565 = vmatprep.subr.bf16.mxu0 0
    %2566 = vmatpush1.bf16.msra.mxu0 0
    %2567 = vmatprep.subr.bf16.mxu0 0
    %2568 = vmatpush1.bf16.msra.mxu0 0
    %2569 = vmatprep.subr.bf16.mxu0 0
    %2570 = vmatpush1.bf16.msra.mxu0 0
    %2571 = vmatprep.subr.bf16.mxu0 0
    %2572 = vmatpush1.bf16.msra.mxu0 0
    %2573 = vmatprep.subr.bf16.mxu0 0
    %2574 = vmatpush1.bf16.msra.mxu0 0
    %2575 = vmatprep.subr.bf16.mxu0 0
    %2576 = vmatpush1.bf16.msra.mxu0 0
    %2577 = vmatprep.subr.bf16.mxu0 0
    %2578 = vmatpush1.bf16.msra.mxu0 0
    %2579 = vmatprep.subr.bf16.mxu0 0
    %2580 = vmatpush1.bf16.msra.mxu0 0
    %2581 = vmatprep.mubr.bf16.mxu0 0
    %2582 = vmatmul.mubr.bf16.gmra.mrb[0].mxu0 %v2547
    %v2583 = vpop.f32.mrb[0].mxu0
    %v2584 = vadd.f32 0.0, %v2583
    %v2585 = vpop.f32.mrb[0].mxu0
    %v2586 = vpop.f32.mrb[0].mxu0
    %v2587 = vadd.f32 0.0, %v2586
    %v2588 = vpop.f32.mrb[0].mxu0
    %2589 = vdwg.mxu0
    %v2590 = vpack.c.bf16 %v2587, %v2584
    %s2591 = scalar_lea.vmem %s25, 20
    %v2592 = vld [vmem:[%s2591] sm:$0xf]
    %v2594 = vsel %vm391, %v2590, 0
    %v2597 = vsel %vm839, %v2592, 0
    %2599 = vmatprep.subr.bf16.mxu0 0
    %2600 = vmatpush1.bf16.msra.mxu0 %v2597
    %2601 = vmatprep.subr.bf16.mxu0 0
    %2602 = vmatpush1.bf16.msra.mxu0 0
    %2603 = vmatprep.subr.bf16.mxu0 0
    %2604 = vmatpush1.bf16.msra.mxu0 0
    %2605 = vmatprep.subr.bf16.mxu0 0
    %2606 = vmatpush1.bf16.msra.mxu0 0
    %2607 = vmatprep.subr.bf16.mxu0 0
    %2608 = vmatpush1.bf16.msra.mxu0 0
    %2609 = vmatprep.subr.bf16.mxu0 0
    %2610 = vmatpush1.bf16.msra.mxu0 0
    %2611 = vmatprep.subr.bf16.mxu0 0
    %2612 = vmatpush1.bf16.msra.mxu0 0
    %2613 = vmatprep.subr.bf16.mxu0 0
    %2614 = vmatpush1.bf16.msra.mxu0 0
    %2615 = vmatprep.subr.bf16.mxu0 0
    %2616 = vmatpush1.bf16.msra.mxu0 0
    %2617 = vmatprep.subr.bf16.mxu0 0
    %2618 = vmatpush1.bf16.msra.mxu0 0
    %2619 = vmatprep.subr.bf16.mxu0 0
    %2620 = vmatpush1.bf16.msra.mxu0 0
    %2621 = vmatprep.subr.bf16.mxu0 0
    %2622 = vmatpush1.bf16.msra.mxu0 0
    %2623 = vmatprep.subr.bf16.mxu0 0
    %2624 = vmatpush1.bf16.msra.mxu0 0
    %2625 = vmatprep.subr.bf16.mxu0 0
    %2626 = vmatpush1.bf16.msra.mxu0 0
    %2627 = vmatprep.subr.bf16.mxu0 0
    %2628 = vmatpush1.bf16.msra.mxu0 0
    %2629 = vmatprep.subr.bf16.mxu0 0
    %2630 = vmatpush1.bf16.msra.mxu0 0
    %2631 = vmatprep.mubr.bf16.mxu0 0
    %2632 = vmatmul.mubr.bf16.gmra.mrb[0].mxu0 %v2594
    %v2633 = vpop.f32.mrb[0].mxu0
    %v2634 = vadd.f32 0.0, %v2633
    %v2635 = vpop.f32.mrb[0].mxu0
    %v2636 = vpop.f32.mrb[0].mxu0
    %v2637 = vadd.f32 0.0, %v2636
    %v2638 = vpop.f32.mrb[0].mxu0
    %2639 = vdwg.mxu0
    %v2641 = vsel %vm391, %v2268, 0
    %v2644 = vsel %vm839, %v2270, 0
    %2646 = vmatprep.subr.bf16.mxu0 0
    %2647 = vmatpush1.bf16.msra.mxu0 %v2644
    %2648 = vmatprep.subr.bf16.mxu0 0
    %2649 = vmatpush1.bf16.msra.mxu0 0
    %2650 = vmatprep.subr.bf16.mxu0 0
    %2651 = vmatpush1.bf16.msra.mxu0 0
    %2652 = vmatprep.subr.bf16.mxu0 0
    %2653 = vmatpush1.bf16.msra.mxu0 0
    %2654 = vmatprep.subr.bf16.mxu0 0
    %2655 = vmatpush1.bf16.msra.mxu0 0
    %2656 = vmatprep.subr.bf16.mxu0 0
    %2657 = vmatpush1.bf16.msra.mxu0 0
    %2658 = vmatprep.subr.bf16.mxu0 0
    %2659 = vmatpush1.bf16.msra.mxu0 0
    %2660 = vmatprep.subr.bf16.mxu0 0
    %2661 = vmatpush1.bf16.msra.mxu0 0
    %2662 = vmatprep.subr.bf16.mxu0 0
    %2663 = vmatpush1.bf16.msra.mxu0 0
    %2664 = vmatprep.subr.bf16.mxu0 0
    %2665 = vmatpush1.bf16.msra.mxu0 0
    %2666 = vmatprep.subr.bf16.mxu0 0
    %2667 = vmatpush1.bf16.msra.mxu0 0
    %2668 = vmatprep.subr.bf16.mxu0 0
    %2669 = vmatpush1.bf16.msra.mxu0 0
    %2670 = vmatprep.subr.bf16.mxu0 0
    %2671 = vmatpush1.bf16.msra.mxu0 0
    %2672 = vmatprep.subr.bf16.mxu0 0
    %2673 = vmatpush1.bf16.msra.mxu0 0
    %2674 = vmatprep.subr.bf16.mxu0 0
    %2675 = vmatpush1.bf16.msra.mxu0 0
    %2676 = vmatprep.subr.bf16.mxu0 0
    %2677 = vmatpush1.bf16.msra.mxu0 0
    %2678 = vmatprep.mubr.bf16.mxu0 0
    %2679 = vmatmul.mubr.bf16.gmra.mrb[0].mxu0 %v2641
    %v2680 = vpop.f32.mrb[0].mxu0
    %v2681 = vadd.f32 %v2634, %v2680
    %v2682 = vpop.f32.mrb[0].mxu0
    %v2683 = vpop.f32.mrb[0].mxu0
    %v2684 = vadd.f32 %v2637, %v2683
    %v2685 = vpop.f32.mrb[0].mxu0
    %2686 = vdwg.mxu0
    %s2687 = scalar_lea.vmem %s13, 96
    %v2688 = vld [vmem:[%s2687] sm:$0xf]
    %v2689 = vld [vmem:[%s2687 + $0x4] sm:$0xf]
    %v2690 = vld [vmem:[%s2687 + $0x8] sm:$0xf]
    %v2691 = vld [vmem:[%s2687 + $0xc] sm:$0xf]
    %s2692 = scalar_lea.vmem %s19, 6
    %v2693 = vld [vmem:[%s2692] sm:$0x1]
    %v2695 = vlaneseq
    %v2696 = vshrl.u32 %v2695, 7
    %v2697 = vsub.s32 0, %v2696
    %v2698 = vrot.slane %v2693, %v2697
    %v2704 = vunpack.c.l.b16 %v2688
    %v2705 = vunpack.c.l.b16 %v2689
    %v2706 = vunpack.c.l.b16 %v2690
    %v2707 = vunpack.c.l.b16 %v2691
    %v2708 = vpack.c.b16 %v2705, %v2704
    %v2709 = vpack.c.b16 %v2707, %v2706
    %2712 = vmatprep.subr.bf16.mxu0 0
    %2713 = vmatpush1.bf16.msra.mxu0 %v2708
    %2714 = vmatprep.subr.bf16.mxu0 0
    %2715 = vmatpush1.bf16.msra.mxu0 %v2709
    %2716 = vmatprep.subr.bf16.mxu0 0
    %2717 = vmatpush1.bf16.msra.mxu0 0
    %2718 = vmatprep.subr.bf16.mxu0 0
    %2719 = vmatpush1.bf16.msra.mxu0 0
    %2720 = vmatprep.subr.bf16.mxu0 0
    %2721 = vmatpush1.bf16.msra.mxu0 0
    %2722 = vmatprep.subr.bf16.mxu0 0
    %2723 = vmatpush1.bf16.msra.mxu0 0
    %2724 = vmatprep.subr.bf16.mxu0 0
    %2725 = vmatpush1.bf16.msra.mxu0 0
    %2726 = vmatprep.subr.bf16.mxu0 0
    %2727 = vmatpush1.bf16.msra.mxu0 0
    %2728 = vmatprep.subr.bf16.mxu0 0
    %2729 = vmatpush1.bf16.msra.mxu0 0
    %2730 = vmatprep.subr.bf16.mxu0 0
    %2731 = vmatpush1.bf16.msra.mxu0 0
    %2732 = vmatprep.subr.bf16.mxu0 0
    %2733 = vmatpush1.bf16.msra.mxu0 0
    %2734 = vmatprep.subr.bf16.mxu0 0
    %2735 = vmatpush1.bf16.msra.mxu0 0
    %2736 = vmatprep.subr.bf16.mxu0 0
    %2737 = vmatpush1.bf16.msra.mxu0 0
    %2738 = vmatprep.subr.bf16.mxu0 0
    %2739 = vmatpush1.bf16.msra.mxu0 0
    %2740 = vmatprep.subr.bf16.mxu0 0
    %2741 = vmatpush1.bf16.msra.mxu0 0
    %2742 = vmatprep.subr.bf16.mxu0 0
    %2743 = vmatpush1.bf16.msra.mxu0 0
    %2744 = vmatprep.mubr.bf16.mxu0 0
    %2745 = vmatmul.mubr.bf16.gmra.mrb[0].mxu0 %v1972
    %v2746 = vpop.f32.mrb[0].mxu0
    %v2747 = vadd.f32 %v2698, %v2746
    %v2748 = vpop.f32.mrb[0].mxu0
    %v2749 = vpop.f32.mrb[0].mxu0
    %v2750 = vadd.f32 %v2698, %v2749
    %v2751 = vpop.f32.mrb[0].mxu0
    %2752 = vdwg.mxu0
    %s2753 = scalar_lea.vmem %s15, 96
    %v2754 = vld [vmem:[%s2753] sm:$0xf]
    %v2755 = vld [vmem:[%s2753 + $0x4] sm:$0xf]
    %v2756 = vld [vmem:[%s2753 + $0x8] sm:$0xf]
    %v2757 = vld [vmem:[%s2753 + $0xc] sm:$0xf]
    %s2758 = scalar_lea.vmem %s21, 6
    %v2759 = vld [vmem:[%s2758] sm:$0x1]
    %v2761 = vlaneseq
    %v2762 = vshrl.u32 %v2761, 7
    %v2763 = vsub.s32 0, %v2762
    %v2764 = vrot.slane %v2759, %v2763
    %v2770 = vunpack.c.l.b16 %v2754
    %v2771 = vunpack.c.l.b16 %v2755
    %v2772 = vunpack.c.l.b16 %v2756
    %v2773 = vunpack.c.l.b16 %v2757
    %v2774 = vpack.c.b16 %v2771, %v2770
    %v2775 = vpack.c.b16 %v2773, %v2772
    %2778 = vmatprep.subr.bf16.mxu0 0
    %2779 = vmatpush1.bf16.msra.mxu0 %v2774
    %2780 = vmatprep.subr.bf16.mxu0 0
    %2781 = vmatpush1.bf16.msra.mxu0 %v2775
    %2782 = vmatprep.subr.bf16.mxu0 0
    %2783 = vmatpush1.bf16.msra.mxu0 0
    %2784 = vmatprep.subr.bf16.mxu0 0
    %2785 = vmatpush1.bf16.msra.mxu0 0
    %2786 = vmatprep.subr.bf16.mxu0 0
    %2787 = vmatpush1.bf16.msra.mxu0 0
    %2788 = vmatprep.subr.bf16.mxu0 0
    %2789 = vmatpush1.bf16.msra.mxu0 0
    %2790 = vmatprep.subr.bf16.mxu0 0
    %2791 = vmatpush1.bf16.msra.mxu0 0
    %2792 = vmatprep.subr.bf16.mxu0 0
    %2793 = vmatpush1.bf16.msra.mxu0 0
    %2794 = vmatprep.subr.bf16.mxu0 0
    %2795 = vmatpush1.bf16.msra.mxu0 0
    %2796 = vmatprep.subr.bf16.mxu0 0
    %2797 = vmatpush1.bf16.msra.mxu0 0
    %2798 = vmatprep.subr.bf16.mxu0 0
    %2799 = vmatpush1.bf16.msra.mxu0 0
    %2800 = vmatprep.subr.bf16.mxu0 0
    %2801 = vmatpush1.bf16.msra.mxu0 0
    %2802 = vmatprep.subr.bf16.mxu0 0
    %2803 = vmatpush1.bf16.msra.mxu0 0
    %2804 = vmatprep.subr.bf16.mxu0 0
    %2805 = vmatpush1.bf16.msra.mxu0 0
    %2806 = vmatprep.subr.bf16.mxu0 0
    %2807 = vmatpush1.bf16.msra.mxu0 0
    %2808 = vmatprep.subr.bf16.mxu0 0
    %2809 = vmatpush1.bf16.msra.mxu0 0
    %2810 = vmatprep.mubr.bf16.mxu0 0
    %2811 = vmatmul.mubr.bf16.gmra.mrb[0].mxu0 %v1972
    %v2812 = vpop.f32.mrb[0].mxu0
    %v2813 = vadd.f32 %v2764, %v2812
    %v2814 = vpop.f32.mrb[0].mxu0
    %v2815 = vpop.f32.mrb[0].mxu0
    %v2816 = vadd.f32 %v2764, %v2815
    %v2817 = vpop.f32.mrb[0].mxu0
    %2818 = vdwg.mxu0
    %s2819 = scalar_lea.vmem %s17, 96
    %v2820 = vld [vmem:[%s2819] sm:$0xf]
    %v2821 = vld [vmem:[%s2819 + $0x4] sm:$0xf]
    %v2822 = vld [vmem:[%s2819 + $0x8] sm:$0xf]
    %v2823 = vld [vmem:[%s2819 + $0xc] sm:$0xf]
    %s2824 = scalar_lea.vmem %s23, 6
    %v2825 = vld [vmem:[%s2824] sm:$0x1]
    %v2827 = vlaneseq
    %v2828 = vshrl.u32 %v2827, 7
    %v2829 = vsub.s32 0, %v2828
    %v2830 = vrot.slane %v2825, %v2829
    %v2836 = vunpack.c.l.b16 %v2820
    %v2837 = vunpack.c.l.b16 %v2821
    %v2838 = vunpack.c.l.b16 %v2822
    %v2839 = vunpack.c.l.b16 %v2823
    %v2840 = vpack.c.b16 %v2837, %v2836
    %v2841 = vpack.c.b16 %v2839, %v2838
    %2844 = vmatprep.subr.bf16.mxu0 0
    %2845 = vmatpush1.bf16.msra.mxu0 %v2840
    %2846 = vmatprep.subr.bf16.mxu0 0
    %2847 = vmatpush1.bf16.msra.mxu0 %v2841
    %2848 = vmatprep.subr.bf16.mxu0 0
    %2849 = vmatpush1.bf16.msra.mxu0 0
    %2850 = vmatprep.subr.bf16.mxu0 0
    %2851 = vmatpush1.bf16.msra.mxu0 0
    %2852 = vmatprep.subr.bf16.mxu0 0
    %2853 = vmatpush1.bf16.msra.mxu0 0
    %2854 = vmatprep.subr.bf16.mxu0 0
    %2855 = vmatpush1.bf16.msra.mxu0 0
    %2856 = vmatprep.subr.bf16.mxu0 0
    %2857 = vmatpush1.bf16.msra.mxu0 0
    %2858 = vmatprep.subr.bf16.mxu0 0
    %2859 = vmatpush1.bf16.msra.mxu0 0
    %2860 = vmatprep.subr.bf16.mxu0 0
    %2861 = vmatpush1.bf16.msra.mxu0 0
    %2862 = vmatprep.subr.bf16.mxu0 0
    %2863 = vmatpush1.bf16.msra.mxu0 0
    %2864 = vmatprep.subr.bf16.mxu0 0
    %2865 = vmatpush1.bf16.msra.mxu0 0
    %2866 = vmatprep.subr.bf16.mxu0 0
    %2867 = vmatpush1.bf16.msra.mxu0 0
    %2868 = vmatprep.subr.bf16.mxu0 0
    %2869 = vmatpush1.bf16.msra.mxu0 0
    %2870 = vmatprep.subr.bf16.mxu0 0
    %2871 = vmatpush1.bf16.msra.mxu0 0
    %2872 = vmatprep.subr.bf16.mxu0 0
    %2873 = vmatpush1.bf16.msra.mxu0 0
    %2874 = vmatprep.subr.bf16.mxu0 0
    %2875 = vmatpush1.bf16.msra.mxu0 0
    %2876 = vmatprep.mubr.bf16.mxu0 0
    %2877 = vmatmul.mubr.bf16.gmra.mrb[0].mxu0 %v1972
    %v2878 = vpop.f32.mrb[0].mxu0
    %v2879 = vadd.f32 %v2830, %v2878
    %v2880 = vpop.f32.mrb[0].mxu0
    %v2881 = vpop.f32.mrb[0].mxu0
    %v2882 = vadd.f32 %v2830, %v2881
    %v2883 = vpop.f32.mrb[0].mxu0
    %2884 = vdwg.mxu0
    %v2885 = vpack.c.bf16 %v2750, %v2747
    %v2886 = vpack.c.bf16 %v2816, %v2813
    %v2888 = vsel %vm391, %v2885, 0
    %v2891 = vsel %vm391, %v2886, 0
    %2893 = vmatprep.subr.bf16.mxu0 0
    %2894 = vmatpush1.bf16.xpose.msra.mxu0 %v2891
    %2895 = vmatprep.subr.bf16.mxu0 0
    %2896 = vmatpush1.bf16.xpose.msra.mxu0 0
    %2897 = vmatprep.subr.bf16.mxu0 0
    %2898 = vmatpush1.bf16.xpose.msra.mxu0 0
    %2899 = vmatprep.subr.bf16.mxu0 0
    %2900 = vmatpush1.bf16.xpose.msra.mxu0 0
    %2901 = vmatprep.subr.bf16.mxu0 0
    %2902 = vmatpush1.bf16.xpose.msra.mxu0 0
    %2903 = vmatprep.subr.bf16.mxu0 0
    %2904 = vmatpush1.bf16.xpose.msra.mxu0 0
    %2905 = vmatprep.subr.bf16.mxu0 0
    %2906 = vmatpush1.bf16.xpose.msra.mxu0 0
    %2907 = vmatprep.subr.bf16.mxu0 0
    %2908 = vmatpush1.bf16.xpose.msra.mxu0 0
    %2909 = vmatprep.subr.bf16.mxu0 0
    %2910 = vmatpush1.bf16.xpose.msra.mxu0 0
    %2911 = vmatprep.subr.bf16.mxu0 0
    %2912 = vmatpush1.bf16.xpose.msra.mxu0 0
    %2913 = vmatprep.subr.bf16.mxu0 0
    %2914 = vmatpush1.bf16.xpose.msra.mxu0 0
    %2915 = vmatprep.subr.bf16.mxu0 0
    %2916 = vmatpush1.bf16.xpose.msra.mxu0 0
    %2917 = vmatprep.subr.bf16.mxu0 0
    %2918 = vmatpush1.bf16.xpose.msra.mxu0 0
    %2919 = vmatprep.subr.bf16.mxu0 0
    %2920 = vmatpush1.bf16.xpose.msra.mxu0 0
    %2921 = vmatprep.subr.bf16.mxu0 0
    %2922 = vmatpush1.bf16.xpose.msra.mxu0 0
    %2923 = vmatprep.subr.bf16.mxu0 0
    %2924 = vmatpush1.bf16.xpose.msra.mxu0 0
    %2925 = vmatprep.mubr.bf16.mxu0 0
    %2926 = vmatmul.mubr.bf16.gmra.mrb[0].mxu0 %v2888
    %v2927 = vpop.f32.mrb[0].mxu0
    %v2928 = vadd.f32 0.0, %v2927
    %v2929 = vpop.f32.mrb[0].mxu0
    %v2930 = vpop.f32.mrb[0].mxu0
    %v2931 = vadd.f32 0.0, %v2930
    %v2932 = vpop.f32.mrb[0].mxu0
    %2933 = vdwg.mxu0
    %v2934 = vmul.f32 %v2928, 0.35355338
    %v2935 = vmul.f32 %v2931, 0.35355338
    %v2936 = vadd.f32 %v2934, %v192
    %v2937 = vadd.f32 %v2935, %v193
    %v2938 = vsel %vm443, %v2936, -inf
    %2939 = vmax.xlane.f32.xlu0 %v2938
    %v2940 = vpop.xlane.xlu0 %2939
    %v2941 = vsel %vm443, %v2937, -inf
    %2942 = vmax.xlane.f32.xlu0 %v2941
    %v2943 = vpop.xlane.xlu0 %2942
    %v2944 = vsub.f32 %v2936, %v2940
    %v2945 = vsub.f32 %v2937, %v2943
    %v2946 = vmul.f32 %v2944, 1.442695
    %v2947 = vpow.pop %v2946
    %v2948 = vmul.f32 %v2945, 1.442695
    %v2949 = vpow.pop %v2948
    %v2950 = vsel %vm443, %v2947, 0.0
    %2951 = vadd.xlane.f32.xlu0 %v2950
    %v2952 = vpop.xlane.xlu0 %2951
    %v2953 = vsel %vm443, %v2949, 0.0
    %2954 = vadd.xlane.f32.xlu0 %v2953
    %v2955 = vpop.xlane.xlu0 %2954
    %v2956 = vrcp.pop %v2952
    %v2957 = vmul.f32 %v2947, %v2956
    %v2958 = vrcp.pop %v2955
    %v2959 = vmul.f32 %v2949, %v2958
    %v2960 = vpack.c.bf16 %v2959, %v2957
    %v2961 = vpack.c.bf16 %v2882, %v2879
    %v2963 = vsel %vm443, %v2960, 0
    %2965 = vmatprep.subr.bf16.mxu0 0
    %2966 = vmatpush1.bf16.msra.mxu0 %v2961
    %2967 = vmatprep.subr.bf16.mxu0 0
    %2968 = vmatpush1.bf16.msra.mxu0 0
    %2969 = vmatprep.subr.bf16.mxu0 0
    %2970 = vmatpush1.bf16.msra.mxu0 0
    %2971 = vmatprep.subr.bf16.mxu0 0
    %2972 = vmatpush1.bf16.msra.mxu0 0
    %2973 = vmatprep.subr.bf16.mxu0 0
    %2974 = vmatpush1.bf16.msra.mxu0 0
    %2975 = vmatprep.subr.bf16.mxu0 0
    %2976 = vmatpush1.bf16.msra.mxu0 0
    %2977 = vmatprep.subr.bf16.mxu0 0
    %2978 = vmatpush1.bf16.msra.mxu0 0
    %2979 = vmatprep.subr.bf16.mxu0 0
    %2980 = vmatpush1.bf16.msra.mxu0 0
    %2981 = vmatprep.subr.bf16.mxu0 0
    %2982 = vmatpush1.bf16.msra.mxu0 0
    %2983 = vmatprep.subr.bf16.mxu0 0
    %2984 = vmatpush1.bf16.msra.mxu0 0
    %2985 = vmatprep.subr.bf16.mxu0 0
    %2986 = vmatpush1.bf16.msra.mxu0 0
    %2987 = vmatprep.subr.bf16.mxu0 0
    %2988 = vmatpush1.bf16.msra.mxu0 0
    %2989 = vmatprep.subr.bf16.mxu0 0
    %2990 = vmatpush1.bf16.msra.mxu0 0
    %2991 = vmatprep.subr.bf16.mxu0 0
    %2992 = vmatpush1.bf16.msra.mxu0 0
    %2993 = vmatprep.subr.bf16.mxu0 0
    %2994 = vmatpush1.bf16.msra.mxu0 0
    %2995 = vmatprep.subr.bf16.mxu0 0
    %2996 = vmatpush1.bf16.msra.mxu0 0
    %2997 = vmatprep.mubr.bf16.mxu0 0
    %2998 = vmatmul.mubr.bf16.gmra.mrb[0].mxu0 %v2963
    %v2999 = vpop.f32.mrb[0].mxu0
    %v3000 = vadd.f32 0.0, %v2999
    %v3001 = vpop.f32.mrb[0].mxu0
    %v3002 = vpop.f32.mrb[0].mxu0
    %v3003 = vadd.f32 0.0, %v3002
    %v3004 = vpop.f32.mrb[0].mxu0
    %3005 = vdwg.mxu0
    %v3006 = vpack.c.bf16 %v3003, %v3000
    %s3007 = scalar_lea.vmem %s25, 24
    %v3008 = vld [vmem:[%s3007] sm:$0xf]
    %v3010 = vsel %vm391, %v3006, 0
    %v3013 = vsel %vm839, %v3008, 0
    %3015 = vmatprep.subr.bf16.mxu0 0
    %3016 = vmatpush1.bf16.msra.mxu0 %v3013
    %3017 = vmatprep.subr.bf16.mxu0 0
    %3018 = vmatpush1.bf16.msra.mxu0 0
    %3019 = vmatprep.subr.bf16.mxu0 0
    %3020 = vmatpush1.bf16.msra.mxu0 0
    %3021 = vmatprep.subr.bf16.mxu0 0
    %3022 = vmatpush1.bf16.msra.mxu0 0
    %3023 = vmatprep.subr.bf16.mxu0 0
    %3024 = vmatpush1.bf16.msra.mxu0 0
    %3025 = vmatprep.subr.bf16.mxu0 0
    %3026 = vmatpush1.bf16.msra.mxu0 0
    %3027 = vmatprep.subr.bf16.mxu0 0
    %3028 = vmatpush1.bf16.msra.mxu0 0
    %3029 = vmatprep.subr.bf16.mxu0 0
    %3030 = vmatpush1.bf16.msra.mxu0 0
    %3031 = vmatprep.subr.bf16.mxu0 0
    %3032 = vmatpush1.bf16.msra.mxu0 0
    %3033 = vmatprep.subr.bf16.mxu0 0
    %3034 = vmatpush1.bf16.msra.mxu0 0
    %3035 = vmatprep.subr.bf16.mxu0 0
    %3036 = vmatpush1.bf16.msra.mxu0 0
    %3037 = vmatprep.subr.bf16.mxu0 0
    %3038 = vmatpush1.bf16.msra.mxu0 0
    %3039 = vmatprep.subr.bf16.mxu0 0
    %3040 = vmatpush1.bf16.msra.mxu0 0
    %3041 = vmatprep.subr.bf16.mxu0 0
    %3042 = vmatpush1.bf16.msra.mxu0 0
    %3043 = vmatprep.subr.bf16.mxu0 0
    %3044 = vmatpush1.bf16.msra.mxu0 0
    %3045 = vmatprep.subr.bf16.mxu0 0
    %3046 = vmatpush1.bf16.msra.mxu0 0
    %3047 = vmatprep.mubr.bf16.mxu0 0
    %3048 = vmatmul.mubr.bf16.gmra.mrb[0].mxu0 %v3010
    %v3049 = vpop.f32.mrb[0].mxu0
    %v3050 = vadd.f32 0.0, %v3049
    %v3051 = vpop.f32.mrb[0].mxu0
    %v3052 = vpop.f32.mrb[0].mxu0
    %v3053 = vadd.f32 0.0, %v3052
    %v3054 = vpop.f32.mrb[0].mxu0
    %3055 = vdwg.mxu0
    %v3056 = vadd.f32 %v2681, %v3050
    %v3057 = vadd.f32 %v2684, %v3053
    %s3058 = scalar_lea.vmem %s13, 112
    %v3059 = vld [vmem:[%s3058] sm:$0xf]
    %v3060 = vld [vmem:[%s3058 + $0x4] sm:$0xf]
    %v3061 = vld [vmem:[%s3058 + $0x8] sm:$0xf]
    %v3062 = vld [vmem:[%s3058 + $0xc] sm:$0xf]
    %s3063 = scalar_lea.vmem %s19, 7
    %v3064 = vld [vmem:[%s3063] sm:$0x1]
    %v3066 = vlaneseq
    %v3067 = vshrl.u32 %v3066, 7
    %v3068 = vsub.s32 0, %v3067
    %v3069 = vrot.slane %v3064, %v3068
    %v3075 = vunpack.c.l.b16 %v3059
    %v3076 = vunpack.c.l.b16 %v3060
    %v3077 = vunpack.c.l.b16 %v3061
    %v3078 = vunpack.c.l.b16 %v3062
    %v3079 = vpack.c.b16 %v3076, %v3075
    %v3080 = vpack.c.b16 %v3078, %v3077
    %3083 = vmatprep.subr.bf16.mxu0 0
    %3084 = vmatpush1.bf16.msra.mxu0 %v3079
    %3085 = vmatprep.subr.bf16.mxu0 0
    %3086 = vmatpush1.bf16.msra.mxu0 %v3080
    %3087 = vmatprep.subr.bf16.mxu0 0
    %3088 = vmatpush1.bf16.msra.mxu0 0
    %3089 = vmatprep.subr.bf16.mxu0 0
    %3090 = vmatpush1.bf16.msra.mxu0 0
    %3091 = vmatprep.subr.bf16.mxu0 0
    %3092 = vmatpush1.bf16.msra.mxu0 0
    %3093 = vmatprep.subr.bf16.mxu0 0
    %3094 = vmatpush1.bf16.msra.mxu0 0
    %3095 = vmatprep.subr.bf16.mxu0 0
    %3096 = vmatpush1.bf16.msra.mxu0 0
    %3097 = vmatprep.subr.bf16.mxu0 0
    %3098 = vmatpush1.bf16.msra.mxu0 0
    %3099 = vmatprep.subr.bf16.mxu0 0
    %3100 = vmatpush1.bf16.msra.mxu0 0
    %3101 = vmatprep.subr.bf16.mxu0 0
    %3102 = vmatpush1.bf16.msra.mxu0 0
    %3103 = vmatprep.subr.bf16.mxu0 0
    %3104 = vmatpush1.bf16.msra.mxu0 0
    %3105 = vmatprep.subr.bf16.mxu0 0
    %3106 = vmatpush1.bf16.msra.mxu0 0
    %3107 = vmatprep.subr.bf16.mxu0 0
    %3108 = vmatpush1.bf16.msra.mxu0 0
    %3109 = vmatprep.subr.bf16.mxu0 0
    %3110 = vmatpush1.bf16.msra.mxu0 0
    %3111 = vmatprep.subr.bf16.mxu0 0
    %3112 = vmatpush1.bf16.msra.mxu0 0
    %3113 = vmatprep.subr.bf16.mxu0 0
    %3114 = vmatpush1.bf16.msra.mxu0 0
    %3115 = vmatprep.mubr.bf16.mxu0 0
    %3116 = vmatmul.mubr.bf16.gmra.mrb[0].mxu0 %v1972
    %v3117 = vpop.f32.mrb[0].mxu0
    %v3118 = vadd.f32 %v3069, %v3117
    %v3119 = vpop.f32.mrb[0].mxu0
    %v3120 = vpop.f32.mrb[0].mxu0
    %v3121 = vadd.f32 %v3069, %v3120
    %v3122 = vpop.f32.mrb[0].mxu0
    %3123 = vdwg.mxu0
    %s3124 = scalar_lea.vmem %s15, 112
    %v3125 = vld [vmem:[%s3124] sm:$0xf]
    %v3126 = vld [vmem:[%s3124 + $0x4] sm:$0xf]
    %v3127 = vld [vmem:[%s3124 + $0x8] sm:$0xf]
    %v3128 = vld [vmem:[%s3124 + $0xc] sm:$0xf]
    %s3129 = scalar_lea.vmem %s21, 7
    %v3130 = vld [vmem:[%s3129] sm:$0x1]
    %v3132 = vlaneseq
    %v3133 = vshrl.u32 %v3132, 7
    %v3134 = vsub.s32 0, %v3133
    %v3135 = vrot.slane %v3130, %v3134
    %v3141 = vunpack.c.l.b16 %v3125
    %v3142 = vunpack.c.l.b16 %v3126
    %v3143 = vunpack.c.l.b16 %v3127
    %v3144 = vunpack.c.l.b16 %v3128
    %v3145 = vpack.c.b16 %v3142, %v3141
    %v3146 = vpack.c.b16 %v3144, %v3143
    %3149 = vmatprep.subr.bf16.mxu0 0
    %3150 = vmatpush1.bf16.msra.mxu0 %v3145
    %3151 = vmatprep.subr.bf16.mxu0 0
    %3152 = vmatpush1.bf16.msra.mxu0 %v3146
    %3153 = vmatprep.subr.bf16.mxu0 0
    %3154 = vmatpush1.bf16.msra.mxu0 0
    %3155 = vmatprep.subr.bf16.mxu0 0
    %3156 = vmatpush1.bf16.msra.mxu0 0
    %3157 = vmatprep.subr.bf16.mxu0 0
    %3158 = vmatpush1.bf16.msra.mxu0 0
    %3159 = vmatprep.subr.bf16.mxu0 0
    %3160 = vmatpush1.bf16.msra.mxu0 0
    %3161 = vmatprep.subr.bf16.mxu0 0
    %3162 = vmatpush1.bf16.msra.mxu0 0
    %3163 = vmatprep.subr.bf16.mxu0 0
    %3164 = vmatpush1.bf16.msra.mxu0 0
    %3165 = vmatprep.subr.bf16.mxu0 0
    %3166 = vmatpush1.bf16.msra.mxu0 0
    %3167 = vmatprep.subr.bf16.mxu0 0
    %3168 = vmatpush1.bf16.msra.mxu0 0
    %3169 = vmatprep.subr.bf16.mxu0 0
    %3170 = vmatpush1.bf16.msra.mxu0 0
    %3171 = vmatprep.subr.bf16.mxu0 0
    %3172 = vmatpush1.bf16.msra.mxu0 0
    %3173 = vmatprep.subr.bf16.mxu0 0
    %3174 = vmatpush1.bf16.msra.mxu0 0
    %3175 = vmatprep.subr.bf16.mxu0 0
    %3176 = vmatpush1.bf16.msra.mxu0 0
    %3177 = vmatprep.subr.bf16.mxu0 0
    %3178 = vmatpush1.bf16.msra.mxu0 0
    %3179 = vmatprep.subr.bf16.mxu0 0
    %3180 = vmatpush1.bf16.msra.mxu0 0
    %3181 = vmatprep.mubr.bf16.mxu0 0
    %3182 = vmatmul.mubr.bf16.gmra.mrb[0].mxu0 %v1972
    %v3183 = vpop.f32.mrb[0].mxu0
    %v3184 = vadd.f32 %v3135, %v3183
    %v3185 = vpop.f32.mrb[0].mxu0
    %v3186 = vpop.f32.mrb[0].mxu0
    %v3187 = vadd.f32 %v3135, %v3186
    %v3188 = vpop.f32.mrb[0].mxu0
    %3189 = vdwg.mxu0
    %s3190 = scalar_lea.vmem %s17, 112
    %v3191 = vld [vmem:[%s3190] sm:$0xf]
    %v3192 = vld [vmem:[%s3190 + $0x4] sm:$0xf]
    %v3193 = vld [vmem:[%s3190 + $0x8] sm:$0xf]
    %v3194 = vld [vmem:[%s3190 + $0xc] sm:$0xf]
    %s3195 = scalar_lea.vmem %s23, 7
    %v3196 = vld [vmem:[%s3195] sm:$0x1]
    %v3198 = vlaneseq
    %v3199 = vshrl.u32 %v3198, 7
    %v3200 = vsub.s32 0, %v3199
    %v3201 = vrot.slane %v3196, %v3200
    %v3207 = vunpack.c.l.b16 %v3191
    %v3208 = vunpack.c.l.b16 %v3192
    %v3209 = vunpack.c.l.b16 %v3193
    %v3210 = vunpack.c.l.b16 %v3194
    %v3211 = vpack.c.b16 %v3208, %v3207
    %v3212 = vpack.c.b16 %v3210, %v3209
    %3215 = vmatprep.subr.bf16.mxu0 0
    %3216 = vmatpush1.bf16.msra.mxu0 %v3211
    %3217 = vmatprep.subr.bf16.mxu0 0
    %3218 = vmatpush1.bf16.msra.mxu0 %v3212
    %3219 = vmatprep.subr.bf16.mxu0 0
    %3220 = vmatpush1.bf16.msra.mxu0 0
    %3221 = vmatprep.subr.bf16.mxu0 0
    %3222 = vmatpush1.bf16.msra.mxu0 0
    %3223 = vmatprep.subr.bf16.mxu0 0
    %3224 = vmatpush1.bf16.msra.mxu0 0
    %3225 = vmatprep.subr.bf16.mxu0 0
    %3226 = vmatpush1.bf16.msra.mxu0 0
    %3227 = vmatprep.subr.bf16.mxu0 0
    %3228 = vmatpush1.bf16.msra.mxu0 0
    %3229 = vmatprep.subr.bf16.mxu0 0
    %3230 = vmatpush1.bf16.msra.mxu0 0
    %3231 = vmatprep.subr.bf16.mxu0 0
    %3232 = vmatpush1.bf16.msra.mxu0 0
    %3233 = vmatprep.subr.bf16.mxu0 0
    %3234 = vmatpush1.bf16.msra.mxu0 0
    %3235 = vmatprep.subr.bf16.mxu0 0
    %3236 = vmatpush1.bf16.msra.mxu0 0
    %3237 = vmatprep.subr.bf16.mxu0 0
    %3238 = vmatpush1.bf16.msra.mxu0 0
    %3239 = vmatprep.subr.bf16.mxu0 0
    %3240 = vmatpush1.bf16.msra.mxu0 0
    %3241 = vmatprep.subr.bf16.mxu0 0
    %3242 = vmatpush1.bf16.msra.mxu0 0
    %3243 = vmatprep.subr.bf16.mxu0 0
    %3244 = vmatpush1.bf16.msra.mxu0 0
    %3245 = vmatprep.subr.bf16.mxu0 0
    %3246 = vmatpush1.bf16.msra.mxu0 0
    %3247 = vmatprep.mubr.bf16.mxu0 0
    %3248 = vmatmul.mubr.bf16.gmra.mrb[0].mxu0 %v1972
    %v3249 = vpop.f32.mrb[0].mxu0
    %v3250 = vadd.f32 %v3201, %v3249
    %v3251 = vpop.f32.mrb[0].mxu0
    %v3252 = vpop.f32.mrb[0].mxu0
    %v3253 = vadd.f32 %v3201, %v3252
    %v3254 = vpop.f32.mrb[0].mxu0
    %3255 = vdwg.mxu0
    %v3256 = vpack.c.bf16 %v3121, %v3118
    %v3257 = vpack.c.bf16 %v3187, %v3184
    %v3259 = vsel %vm391, %v3256, 0
    %v3262 = vsel %vm391, %v3257, 0
    %3264 = vmatprep.subr.bf16.mxu0 0
    %3265 = vmatpush1.bf16.xpose.msra.mxu0 %v3262
    %3266 = vmatprep.subr.bf16.mxu0 0
    %3267 = vmatpush1.bf16.xpose.msra.mxu0 0
    %3268 = vmatprep.subr.bf16.mxu0 0
    %3269 = vmatpush1.bf16.xpose.msra.mxu0 0
    %3270 = vmatprep.subr.bf16.mxu0 0
    %3271 = vmatpush1.bf16.xpose.msra.mxu0 0
    %3272 = vmatprep.subr.bf16.mxu0 0
    %3273 = vmatpush1.bf16.xpose.msra.mxu0 0
    %3274 = vmatprep.subr.bf16.mxu0 0
    %3275 = vmatpush1.bf16.xpose.msra.mxu0 0
    %3276 = vmatprep.subr.bf16.mxu0 0
    %3277 = vmatpush1.bf16.xpose.msra.mxu0 0
    %3278 = vmatprep.subr.bf16.mxu0 0
    %3279 = vmatpush1.bf16.xpose.msra.mxu0 0
    %3280 = vmatprep.subr.bf16.mxu0 0
    %3281 = vmatpush1.bf16.xpose.msra.mxu0 0
    %3282 = vmatprep.subr.bf16.mxu0 0
    %3283 = vmatpush1.bf16.xpose.msra.mxu0 0
    %3284 = vmatprep.subr.bf16.mxu0 0
    %3285 = vmatpush1.bf16.xpose.msra.mxu0 0
    %3286 = vmatprep.subr.bf16.mxu0 0
    %3287 = vmatpush1.bf16.xpose.msra.mxu0 0
    %3288 = vmatprep.subr.bf16.mxu0 0
    %3289 = vmatpush1.bf16.xpose.msra.mxu0 0
    %3290 = vmatprep.subr.bf16.mxu0 0
    %3291 = vmatpush1.bf16.xpose.msra.mxu0 0
    %3292 = vmatprep.subr.bf16.mxu0 0
    %3293 = vmatpush1.bf16.xpose.msra.mxu0 0
    %3294 = vmatprep.subr.bf16.mxu0 0
    %3295 = vmatpush1.bf16.xpose.msra.mxu0 0
    %3296 = vmatprep.mubr.bf16.mxu0 0
    %3297 = vmatmul.mubr.bf16.gmra.mrb[0].mxu0 %v3259
    %v3298 = vpop.f32.mrb[0].mxu0
    %v3299 = vadd.f32 0.0, %v3298
    %v3300 = vpop.f32.mrb[0].mxu0
    %v3301 = vpop.f32.mrb[0].mxu0
    %v3302 = vadd.f32 0.0, %v3301
    %v3303 = vpop.f32.mrb[0].mxu0
    %3304 = vdwg.mxu0
    %v3305 = vmul.f32 %v3299, 0.35355338
    %v3306 = vmul.f32 %v3302, 0.35355338
    %v3307 = vadd.f32 %v3305, %v192
    %v3308 = vadd.f32 %v3306, %v193
    %v3309 = vsel %vm443, %v3307, -inf
    %3310 = vmax.xlane.f32.xlu0 %v3309
    %v3311 = vpop.xlane.xlu0 %3310
    %v3312 = vsel %vm443, %v3308, -inf
    %3313 = vmax.xlane.f32.xlu0 %v3312
    %v3314 = vpop.xlane.xlu0 %3313
    %v3315 = vsub.f32 %v3307, %v3311
    %v3316 = vsub.f32 %v3308, %v3314
    %v3317 = vmul.f32 %v3315, 1.442695
    %v3318 = vpow.pop %v3317
    %v3319 = vmul.f32 %v3316, 1.442695
    %v3320 = vpow.pop %v3319
    %v3321 = vsel %vm443, %v3318, 0.0
    %3322 = vadd.xlane.f32.xlu0 %v3321
    %v3323 = vpop.xlane.xlu0 %3322
    %v3324 = vsel %vm443, %v3320, 0.0
    %3325 = vadd.xlane.f32.xlu0 %v3324
    %v3326 = vpop.xlane.xlu0 %3325
    %v3327 = vrcp.pop %v3323
    %v3328 = vmul.f32 %v3318, %v3327
    %v3329 = vrcp.pop %v3326
    %v3330 = vmul.f32 %v3320, %v3329
    %v3331 = vpack.c.bf16 %v3330, %v3328
    %v3332 = vpack.c.bf16 %v3253, %v3250
    %v3334 = vsel %vm443, %v3331, 0
    %3336 = vmatprep.subr.bf16.mxu0 0
    %3337 = vmatpush1.bf16.msra.mxu0 %v3332
    %3338 = vmatprep.subr.bf16.mxu0 0
    %3339 = vmatpush1.bf16.msra.mxu0 0
    %3340 = vmatprep.subr.bf16.mxu0 0
    %3341 = vmatpush1.bf16.msra.mxu0 0
    %3342 = vmatprep.subr.bf16.mxu0 0
    %3343 = vmatpush1.bf16.msra.mxu0 0
    %3344 = vmatprep.subr.bf16.mxu0 0
    %3345 = vmatpush1.bf16.msra.mxu0 0
    %3346 = vmatprep.subr.bf16.mxu0 0
    %3347 = vmatpush1.bf16.msra.mxu0 0
    %3348 = vmatprep.subr.bf16.mxu0 0
    %3349 = vmatpush1.bf16.msra.mxu0 0
    %3350 = vmatprep.subr.bf16.mxu0 0
    %3351 = vmatpush1.bf16.msra.mxu0 0
    %3352 = vmatprep.subr.bf16.mxu0 0
    %3353 = vmatpush1.bf16.msra.mxu0 0
    %3354 = vmatprep.subr.bf16.mxu0 0
    %3355 = vmatpush1.bf16.msra.mxu0 0
    %3356 = vmatprep.subr.bf16.mxu0 0
    %3357 = vmatpush1.bf16.msra.mxu0 0
    %3358 = vmatprep.subr.bf16.mxu0 0
    %3359 = vmatpush1.bf16.msra.mxu0 0
    %3360 = vmatprep.subr.bf16.mxu0 0
    %3361 = vmatpush1.bf16.msra.mxu0 0
    %3362 = vmatprep.subr.bf16.mxu0 0
    %3363 = vmatpush1.bf16.msra.mxu0 0
    %3364 = vmatprep.subr.bf16.mxu0 0
    %3365 = vmatpush1.bf16.msra.mxu0 0
    %3366 = vmatprep.subr.bf16.mxu0 0
    %3367 = vmatpush1.bf16.msra.mxu0 0
    %3368 = vmatprep.mubr.bf16.mxu0 0
    %3369 = vmatmul.mubr.bf16.gmra.mrb[0].mxu0 %v3334
    %v3370 = vpop.f32.mrb[0].mxu0
    %v3371 = vadd.f32 0.0, %v3370
    %v3372 = vpop.f32.mrb[0].mxu0
    %v3373 = vpop.f32.mrb[0].mxu0
    %v3374 = vadd.f32 0.0, %v3373
    %v3375 = vpop.f32.mrb[0].mxu0
    %3376 = vdwg.mxu0
    %v3377 = vpack.c.bf16 %v3374, %v3371
    %s3378 = scalar_lea.vmem %s25, 28
    %v3379 = vld [vmem:[%s3378] sm:$0xf]
    %v3381 = vsel %vm391, %v3377, 0
    %v3384 = vsel %vm839, %v3379, 0
    %3386 = vmatprep.subr.bf16.mxu0 0
    %3387 = vmatpush1.bf16.msra.mxu0 %v3384
    %3388 = vmatprep.subr.bf16.mxu0 0
    %3389 = vmatpush1.bf16.msra.mxu0 0
    %3390 = vmatprep.subr.bf16.mxu0 0
    %3391 = vmatpush1.bf16.msra.mxu0 0
    %3392 = vmatprep.subr.bf16.mxu0 0
    %3393 = vmatpush1.bf16.msra.mxu0 0
    %3394 = vmatprep.subr.bf16.mxu0 0
    %3395 = vmatpush1.bf16.msra.mxu0 0
    %3396 = vmatprep.subr.bf16.mxu0 0
    %3397 = vmatpush1.bf16.msra.mxu0 0
    %3398 = vmatprep.subr.bf16.mxu0 0
    %3399 = vmatpush1.bf16.msra.mxu0 0
    %3400 = vmatprep.subr.bf16.mxu0 0
    %3401 = vmatpush1.bf16.msra.mxu0 0
    %3402 = vmatprep.subr.bf16.mxu0 0
    %3403 = vmatpush1.bf16.msra.mxu0 0
    %3404 = vmatprep.subr.bf16.mxu0 0
    %3405 = vmatpush1.bf16.msra.mxu0 0
    %3406 = vmatprep.subr.bf16.mxu0 0
    %3407 = vmatpush1.bf16.msra.mxu0 0
    %3408 = vmatprep.subr.bf16.mxu0 0
    %3409 = vmatpush1.bf16.msra.mxu0 0
    %3410 = vmatprep.subr.bf16.mxu0 0
    %3411 = vmatpush1.bf16.msra.mxu0 0
    %3412 = vmatprep.subr.bf16.mxu0 0
    %3413 = vmatpush1.bf16.msra.mxu0 0
    %3414 = vmatprep.subr.bf16.mxu0 0
    %3415 = vmatpush1.bf16.msra.mxu0 0
    %3416 = vmatprep.subr.bf16.mxu0 0
    %3417 = vmatpush1.bf16.msra.mxu0 0
    %3418 = vmatprep.mubr.bf16.mxu0 0
    %3419 = vmatmul.mubr.bf16.gmra.mrb[0].mxu0 %v3381
    %v3420 = vpop.f32.mrb[0].mxu0
    %v3421 = vadd.f32 0.0, %v3420
    %v3422 = vpop.f32.mrb[0].mxu0
    %v3423 = vpop.f32.mrb[0].mxu0
    %v3424 = vadd.f32 0.0, %v3423
    %v3425 = vpop.f32.mrb[0].mxu0
    %3426 = vdwg.mxu0
    %v3427 = vadd.f32 %v3056, %v3421
    %v3428 = vadd.f32 %v3057, %v3424
    %s3429 = scalar_lea.vmem %s27, 1
    %v3430 = vld [vmem:[%s3429] sm:$0x1]
    %v3432 = vlaneseq
    %v3433 = vshrl.u32 %v3432, 7
    %v3434 = vsub.s32 0, %v3433
    %v3435 = vrot.slane %v3430, %v3434
    %v3437 = vadd.f32 %v3427, %v3435
    %v3438 = vadd.f32 %v3428, %v3435
    %v3439 = vadd.f32 %v3437, %v1943
    %v3440 = vadd.f32 %v3438, %v1944
    %s3441 = scalar_lea.vmem %s29, 1
    %v3442 = vld [vmem:[%s3441] sm:$0x1]
    %s3443 = scalar_lea.vmem %s31, 1
    %v3444 = vld [vmem:[%s3443] sm:$0x1]
    %v3445 = vsel %vm147, %v3439, 0.0
    %3446 = vadd.xlane.f32.xlu0 %v3445
    %v3447 = vpop.xlane.xlu0 %3446
    %v3448 = vsel %vm147, %v3440, 0.0
    %3449 = vadd.xlane.f32.xlu0 %v3448
    %v3450 = vpop.xlane.xlu0 %3449
    %v3451 = vmul.f32 %v3447, %v154
    %v3452 = vmul.f32 %v3450, %v154
    %v3453 = vsub.f32 %v3439, %v3451
    %v3454 = vsub.f32 %v3440, %v3452
    %v3455 = vmul.f32 %v3453, %v3453
    %v3456 = vmul.f32 %v3454, %v3454
    %v3457 = vsel %vm147, %v3455, 0.0
    %3458 = vadd.xlane.f32.xlu0 %v3457
    %v3459 = vpop.xlane.xlu0 %3458
    %v3460 = vsel %vm147, %v3456, 0.0
    %3461 = vadd.xlane.f32.xlu0 %v3460
    %v3462 = vpop.xlane.xlu0 %3461
    %v3463 = vmul.f32 %v3459, %v154
    %v3464 = vmul.f32 %v3462, %v154
    %v3465 = vadd.f32 %v3463, 1e-12
    %v3466 = vadd.f32 %v3464, 1e-12
    %v3467 = vrsqrt.pop %v3465
    %v3468 = vrsqrt.pop %v3466
    %v3469 = vmul.f32 %v3453, %v3467
    %v3470 = vmul.f32 %v3454, %v3468
    %v3472 = vlaneseq
    %v3473 = vshrl.u32 %v3472, 7
    %v3474 = vsub.s32 0, %v3473
    %v3475 = vrot.slane %v3442, %v3474
    %v3477 = vmul.f32 %v3469, %v3475
    %v3478 = vmul.f32 %v3470, %v3475
    %v3480 = vlaneseq
    %v3481 = vshrl.u32 %v3480, 7
    %v3482 = vsub.s32 0, %v3481
    %v3483 = vrot.slane %v3444, %v3482
    %v3485 = vadd.f32 %v3477, %v3483
    %v3486 = vadd.f32 %v3478, %v3483
    %v3487 = vpack.c.bf16 %v3486, %v3485
    %s3488 = scalar_lea.vmem %s33, 16
    %v3489 = vld [vmem:[%s3488] sm:$0xf]
    %v3490 = vld [vmem:[%s3488 + $0x4] sm:$0xf]
    %v3491 = vld [vmem:[%s3488 + $0x8] sm:$0xf]
    %v3492 = vld [vmem:[%s3488 + $0xc] sm:$0xf]
    %s3493 = scalar_lea.vmem %s35, 1
    %v3494 = vld [vmem:[%s3493] sm:$0x1]
    %v3496 = vlaneseq
    %v3497 = vshrl.u32 %v3496, 7
    %v3498 = vsub.s32 0, %v3497
    %v3499 = vrot.slane %v3494, %v3498
    %v3505 = vunpack.c.l.b16 %v3489
    %v3506 = vunpack.c.l.b16 %v3490
    %v3507 = vunpack.c.l.b16 %v3491
    %v3508 = vunpack.c.l.b16 %v3492
    %v3509 = vpack.c.b16 %v3506, %v3505
    %v3510 = vpack.c.b16 %v3508, %v3507
    %v3514 = vsel %vm147, %v3487, 0
    %3516 = vmatprep.subr.bf16.mxu0 0
    %3517 = vmatpush1.bf16.msra.mxu0 %v3509
    %3518 = vmatprep.subr.bf16.mxu0 0
    %3519 = vmatpush1.bf16.msra.mxu0 %v3510
    %3520 = vmatprep.subr.bf16.mxu0 0
    %3521 = vmatpush1.bf16.msra.mxu0 0
    %3522 = vmatprep.subr.bf16.mxu0 0
    %3523 = vmatpush1.bf16.msra.mxu0 0
    %3524 = vmatprep.subr.bf16.mxu0 0
    %3525 = vmatpush1.bf16.msra.mxu0 0
    %3526 = vmatprep.subr.bf16.mxu0 0
    %3527 = vmatpush1.bf16.msra.mxu0 0
    %3528 = vmatprep.subr.bf16.mxu0 0
    %3529 = vmatpush1.bf16.msra.mxu0 0
    %3530 = vmatprep.subr.bf16.mxu0 0
    %3531 = vmatpush1.bf16.msra.mxu0 0
    %3532 = vmatprep.subr.bf16.mxu0 0
    %3533 = vmatpush1.bf16.msra.mxu0 0
    %3534 = vmatprep.subr.bf16.mxu0 0
    %3535 = vmatpush1.bf16.msra.mxu0 0
    %3536 = vmatprep.subr.bf16.mxu0 0
    %3537 = vmatpush1.bf16.msra.mxu0 0
    %3538 = vmatprep.subr.bf16.mxu0 0
    %3539 = vmatpush1.bf16.msra.mxu0 0
    %3540 = vmatprep.subr.bf16.mxu0 0
    %3541 = vmatpush1.bf16.msra.mxu0 0
    %3542 = vmatprep.subr.bf16.mxu0 0
    %3543 = vmatpush1.bf16.msra.mxu0 0
    %3544 = vmatprep.subr.bf16.mxu0 0
    %3545 = vmatpush1.bf16.msra.mxu0 0
    %3546 = vmatprep.subr.bf16.mxu0 0
    %3547 = vmatpush1.bf16.msra.mxu0 0
    %3548 = vmatprep.mubr.bf16.mxu0 0
    %3549 = vmatmul.mubr.bf16.gmra.mrb[0].mxu0 %v3514
    %v3550 = vpop.f32.mrb[0].mxu0
    %v3551 = vadd.f32 %v3499, %v3550
    %v3552 = vpop.f32.mrb[0].mxu0
    %v3553 = vpop.f32.mrb[0].mxu0
    %v3554 = vadd.f32 %v3499, %v3553
    %v3555 = vpop.f32.mrb[0].mxu0
    %3556 = vdwg.mxu0
    %v3557 = vmul.f32 %v3551, 0.5
    %v3558 = vmul.f32 %v3554, 0.5
    %v3559 = vmul.f32 %v3551, 0.044715
    %v3560 = vmul.f32 %v3554, 0.044715
    %v3561 = vmul.f32 %v3559, %v3551
    %v3562 = vmul.f32 %v3560, %v3554
    %v3563 = vmul.f32 %v3561, %v3551
    %v3564 = vmul.f32 %v3562, %v3554
    %v3565 = vadd.f32 %v3551, %v3563
    %v3566 = vadd.f32 %v3554, %v3564
    %v3567 = vmul.f32 %v3565, 0.7978846
    %v3568 = vmul.f32 %v3566, 0.7978846
    %v3569 = vtanh.pop %v3567
    %v3570 = vtanh.pop %v3568
    %v3571 = vadd.f32 %v3569, 1.0
    %v3572 = vadd.f32 %v3570, 1.0
    %v3573 = vmul.f32 %v3557, %v3571
    %v3574 = vmul.f32 %v3558, %v3572
    %v3575 = vpack.c.bf16 %v3574, %v3573
    %s3576 = scalar_lea.vmem %s37, 32
    %v3577 = vld [vmem:[%s3576] sm:$0xf]
    %v3578 = vld [vmem:[%s3576 + $0x4] sm:$0xf]
    %v3579 = vld [vmem:[%s3576 + $0x8] sm:$0xf]
    %v3580 = vld [vmem:[%s3576 + $0xc] sm:$0xf]
    %v3581 = vld [vmem:[%s3576 + $0x10] sm:$0xf]
    %v3582 = vld [vmem:[%s3576 + $0x14] sm:$0xf]
    %v3583 = vld [vmem:[%s3576 + $0x18] sm:$0xf]
    %v3584 = vld [vmem:[%s3576 + $0x1c] sm:$0xf]
    %s3585 = scalar_lea.vmem %s39, 1
    %v3586 = vld [vmem:[%s3585] sm:$0x1]
    %v3588 = vlaneseq
    %v3589 = vshrl.u32 %v3588, 7
    %v3590 = vsub.s32 0, %v3589
    %v3591 = vrot.slane %v3586, %v3590
    %v3601 = vunpack.c.l.b16 %v3577
    %v3602 = vunpack.c.l.b16 %v3578
    %v3603 = vunpack.c.l.b16 %v3579
    %v3604 = vunpack.c.l.b16 %v3580
    %v3605 = vunpack.c.l.b16 %v3581
    %v3606 = vunpack.c.l.b16 %v3582
    %v3607 = vunpack.c.l.b16 %v3583
    %v3608 = vunpack.c.l.b16 %v3584
    %v3609 = vpack.c.b16 %v3602, %v3601
    %v3610 = vpack.c.b16 %v3604, %v3603
    %v3611 = vpack.c.b16 %v3606, %v3605
    %v3612 = vpack.c.b16 %v3608, %v3607
    %v3618 = vsel %vm1854, %v3575, 0
    %3620 = vmatprep.subr.bf16.mxu0 0
    %3621 = vmatpush1.bf16.msra.mxu0 %v3609
    %3622 = vmatprep.subr.bf16.mxu0 0
    %3623 = vmatpush1.bf16.msra.mxu0 %v3610
    %3624 = vmatprep.subr.bf16.mxu0 0
    %3625 = vmatpush1.bf16.msra.mxu0 %v3611
    %3626 = vmatprep.subr.bf16.mxu0 0
    %3627 = vmatpush1.bf16.msra.mxu0 %v3612
    %3628 = vmatprep.subr.bf16.mxu0 0
    %3629 = vmatpush1.bf16.msra.mxu0 0
    %3630 = vmatprep.subr.bf16.mxu0 0
    %3631 = vmatpush1.bf16.msra.mxu0 0
    %3632 = vmatprep.subr.bf16.mxu0 0
    %3633 = vmatpush1.bf16.msra.mxu0 0
    %3634 = vmatprep.subr.bf16.mxu0 0
    %3635 = vmatpush1.bf16.msra.mxu0 0
    %3636 = vmatprep.subr.bf16.mxu0 0
    %3637 = vmatpush1.bf16.msra.mxu0 0
    %3638 = vmatprep.subr.bf16.mxu0 0
    %3639 = vmatpush1.bf16.msra.mxu0 0
    %3640 = vmatprep.subr.bf16.mxu0 0
    %3641 = vmatpush1.bf16.msra.mxu0 0
    %3642 = vmatprep.subr.bf16.mxu0 0
    %3643 = vmatpush1.bf16.msra.mxu0 0
    %3644 = vmatprep.subr.bf16.mxu0 0
    %3645 = vmatpush1.bf16.msra.mxu0 0
    %3646 = vmatprep.subr.bf16.mxu0 0
    %3647 = vmatpush1.bf16.msra.mxu0 0
    %3648 = vmatprep.subr.bf16.mxu0 0
    %3649 = vmatpush1.bf16.msra.mxu0 0
    %3650 = vmatprep.subr.bf16.mxu0 0
    %3651 = vmatpush1.bf16.msra.mxu0 0
    %3652 = vmatprep.mubr.bf16.mxu0 0
    %3653 = vmatmul.mubr.bf16.gmra.mrb[0].mxu0 %v3618
    %v3654 = vpop.f32.mrb[0].mxu0
    %v3655 = vadd.f32 %v3591, %v3654
    %v3656 = vpop.f32.mrb[0].mxu0
    %v3657 = vpop.f32.mrb[0].mxu0
    %v3658 = vadd.f32 %v3591, %v3657
    %v3659 = vpop.f32.mrb[0].mxu0
    %3660 = vdwg.mxu0
    %v3661 = vadd.f32 %v3655, %v3485
    %v3662 = vadd.f32 %v3658, %v3486
    %s3663 = scalar_lea.vmem %s41, 1
    %v3664 = vld [vmem:[%s3663] sm:$0x1]
    %s3665 = scalar_lea.vmem %s43, 1
    %v3666 = vld [vmem:[%s3665] sm:$0x1]
    %v3667 = vsel %vm147, %v3661, 0.0
    %3668 = vadd.xlane.f32.xlu0 %v3667
    %v3669 = vpop.xlane.xlu0 %3668
    %v3670 = vsel %vm147, %v3662, 0.0
    %3671 = vadd.xlane.f32.xlu0 %v3670
    %v3672 = vpop.xlane.xlu0 %3671
    %v3673 = vmul.f32 %v3669, %v154
    %v3674 = vmul.f32 %v3672, %v154
    %v3675 = vsub.f32 %v3661, %v3673
    %v3676 = vsub.f32 %v3662, %v3674
    %v3677 = vmul.f32 %v3675, %v3675
    %v3678 = vmul.f32 %v3676, %v3676
    %v3679 = vsel %vm147, %v3677, 0.0
    %3680 = vadd.xlane.f32.xlu0 %v3679
    %v3681 = vpop.xlane.xlu0 %3680
    %v3682 = vsel %vm147, %v3678, 0.0
    %3683 = vadd.xlane.f32.xlu0 %v3682
    %v3684 = vpop.xlane.xlu0 %3683
    %v3685 = vmul.f32 %v3681, %v154
    %v3686 = vmul.f32 %v3684, %v154
    %v3687 = vadd.f32 %v3685, 1e-12
    %v3688 = vadd.f32 %v3686, 1e-12
    %v3689 = vrsqrt.pop %v3687
    %v3690 = vrsqrt.pop %v3688
    %v3691 = vmul.f32 %v3675, %v3689
    %v3692 = vmul.f32 %v3676, %v3690
    %v3694 = vlaneseq
    %v3695 = vshrl.u32 %v3694, 7
    %v3696 = vsub.s32 0, %v3695
    %v3697 = vrot.slane %v3664, %v3696
    %v3699 = vmul.f32 %v3691, %v3697
    %v3700 = vmul.f32 %v3692, %v3697
    %v3702 = vlaneseq
    %v3703 = vshrl.u32 %v3702, 7
    %v3704 = vsub.s32 0, %v3703
    %v3705 = vrot.slane %v3666, %v3704
    %v3707 = vadd.f32 %v3699, %v3705
    %v3708 = vadd.f32 %v3700, %v3705
    %v3709 = vpack.c.bf16 %v3708, %v3707
    %v3711 = vrot.slane %v3708, 7
    %vm3713 = vcmask 1040384
    %v3714 = vsel %vm3713, %v3707, %v3711
    %v3715 = vpack.c.bf16 %v3714, %v3714
    %v3716 = vld [vmem:[%s45] sm:$0xf]
    %v3717 = vld [vmem:[%s45 + $0x4] sm:$0xf]
    %v3718 = vld [vmem:[%s45 + $0x8] sm:$0xf]
    %v3719 = vld [vmem:[%s45 + $0xc] sm:$0xf]
    %v3720 = vld [vmem:[%s47] sm:$0x1]
    %v3722 = vlaneseq
    %v3723 = vshrl.u32 %v3722, 7
    %v3724 = vsub.s32 0, %v3723
    %v3725 = vrot.slane %v3720, %v3724
    %v3731 = vunpack.c.l.b16 %v3716
    %v3732 = vunpack.c.l.b16 %v3717
    %v3733 = vunpack.c.l.b16 %v3718
    %v3734 = vunpack.c.l.b16 %v3719
    %v3735 = vpack.c.b16 %v3732, %v3731
    %v3736 = vpack.c.b16 %v3734, %v3733
    %v3740 = vsel %vm147, %v3715, 0
    %3742 = vmatprep.subr.bf16.mxu0 0
    %3743 = vmatpush1.bf16.msra.mxu0 %v3735
    %3744 = vmatprep.subr.bf16.mxu0 0
    %3745 = vmatpush1.bf16.msra.mxu0 %v3736
    %3746 = vmatprep.subr.bf16.mxu0 0
    %3747 = vmatpush1.bf16.msra.mxu0 0
    %3748 = vmatprep.subr.bf16.mxu0 0
    %3749 = vmatpush1.bf16.msra.mxu0 0
    %3750 = vmatprep.subr.bf16.mxu0 0
    %3751 = vmatpush1.bf16.msra.mxu0 0
    %3752 = vmatprep.subr.bf16.mxu0 0
    %3753 = vmatpush1.bf16.msra.mxu0 0
    %3754 = vmatprep.subr.bf16.mxu0 0
    %3755 = vmatpush1.bf16.msra.mxu0 0
    %3756 = vmatprep.subr.bf16.mxu0 0
    %3757 = vmatpush1.bf16.msra.mxu0 0
    %3758 = vmatprep.subr.bf16.mxu0 0
    %3759 = vmatpush1.bf16.msra.mxu0 0
    %3760 = vmatprep.subr.bf16.mxu0 0
    %3761 = vmatpush1.bf16.msra.mxu0 0
    %3762 = vmatprep.subr.bf16.mxu0 0
    %3763 = vmatpush1.bf16.msra.mxu0 0
    %3764 = vmatprep.subr.bf16.mxu0 0
    %3765 = vmatpush1.bf16.msra.mxu0 0
    %3766 = vmatprep.subr.bf16.mxu0 0
    %3767 = vmatpush1.bf16.msra.mxu0 0
    %3768 = vmatprep.subr.bf16.mxu0 0
    %3769 = vmatpush1.bf16.msra.mxu0 0
    %3770 = vmatprep.subr.bf16.mxu0 0
    %3771 = vmatpush1.bf16.msra.mxu0 0
    %3772 = vmatprep.subr.bf16.mxu0 0
    %3773 = vmatpush1.bf16.msra.mxu0 0
    %3774 = vmatprep.mubr.bf16.mxu0 0
    %3775 = vmatmul.mubr.bf16.gmra.mrb[0].mxu0 %v3740
    %v3776 = vpop.f32.mrb[0].mxu0
    %v3777 = vadd.f32 %v3725, %v3776
    %v3778 = vpop.f32.mrb[0].mxu0
    %v3779 = vpop.f32.mrb[0].mxu0
    %v3780 = vpop.f32.mrb[0].mxu0
    %3781 = vdwg.mxu0
    %v3782 = vtanh.pop %v3777
    %v3783 = vpack.c.bf16 %v3782, %v3782
    %v3784 = vld [vmem:[%s61] sm:$0xf]
    %v3785 = vld [vmem:[%s61 + $0x4] sm:$0xf]
    %v3786 = vld [vmem:[%s61 + $0x8] sm:$0xf]
    %v3787 = vld [vmem:[%s61 + $0xc] sm:$0xf]
    %v3788 = vld [vmem:[%s63] sm:$0x1]
    %v3790 = vlaneseq
    %v3791 = vshrl.u32 %v3790, 7
    %v3792 = vsub.s32 0, %v3791
    %v3793 = vrot.slane %v3788, %v3792
    %v3799 = vunpack.c.l.b16 %v3784
    %v3800 = vunpack.c.l.b16 %v3785
    %v3801 = vunpack.c.l.b16 %v3786
    %v3802 = vunpack.c.l.b16 %v3787
    %v3803 = vpack.c.b16 %v3800, %v3799
    %v3804 = vpack.c.b16 %v3802, %v3801
    %v3808 = vsel %vm147, %v3783, 0
    %3810 = vmatprep.subr.bf16.mxu0 0
    %3811 = vmatpush1.bf16.msra.mxu0 %v3803
    %3812 = vmatprep.subr.bf16.mxu0 0
    %3813 = vmatpush1.bf16.msra.mxu0 %v3804
    %3814 = vmatprep.subr.bf16.mxu0 0
    %3815 = vmatpush1.bf16.msra.mxu0 0
    %3816 = vmatprep.subr.bf16.mxu0 0
    %3817 = vmatpush1.bf16.msra.mxu0 0
    %3818 = vmatprep.subr.bf16.mxu0 0
    %3819 = vmatpush1.bf16.msra.mxu0 0
    %3820 = vmatprep.subr.bf16.mxu0 0
    %3821 = vmatpush1.bf16.msra.mxu0 0
    %3822 = vmatprep.subr.bf16.mxu0 0
    %3823 = vmatpush1.bf16.msra.mxu0 0
    %3824 = vmatprep.subr.bf16.mxu0 0
    %3825 = vmatpush1.bf16.msra.mxu0 0
    %3826 = vmatprep.subr.bf16.mxu0 0
    %3827 = vmatpush1.bf16.msra.mxu0 0
    %3828 = vmatprep.subr.bf16.mxu0 0
    %3829 = vmatpush1.bf16.msra.mxu0 0
    %3830 = vmatprep.subr.bf16.mxu0 0
    %3831 = vmatpush1.bf16.msra.mxu0 0
    %3832 = vmatprep.subr.bf16.mxu0 0
    %3833 = vmatpush1.bf16.msra.mxu0 0
    %3834 = vmatprep.subr.bf16.mxu0 0
    %3835 = vmatpush1.bf16.msra.mxu0 0
    %3836 = vmatprep.subr.bf16.mxu0 0
    %3837 = vmatpush1.bf16.msra.mxu0 0
    %3838 = vmatprep.subr.bf16.mxu0 0
    %3839 = vmatpush1.bf16.msra.mxu0 0
    %3840 = vmatprep.subr.bf16.mxu0 0
    %3841 = vmatpush1.bf16.msra.mxu0 0
    %3842 = vmatprep.mubr.bf16.mxu0 0
    %3843 = vmatmul.mubr.bf16.gmra.mrb[0].mxu0 %v3808
    %v3844 = vpop.f32.mrb[0].mxu0
    %v3845 = vadd.f32 %v3793, %v3844
    %v3846 = vpop.f32.mrb[0].mxu0
    %v3847 = vpop.f32.mrb[0].mxu0
    %v3848 = vpop.f32.mrb[0].mxu0
    %3849 = vdwg.mxu0
    %3850 = vst [vmem:[#allocation5] sm:$0x3] %v3845
    %v3851 = vld [vmem:[%s49] sm:$0xf]
    %v3852 = vld [vmem:[%s49 + $0x4] sm:$0xf]
    %v3853 = vld [vmem:[%s49 + $0x8] sm:$0xf]
    %v3854 = vld [vmem:[%s49 + $0xc] sm:$0xf]
    %v3855 = vld [vmem:[%s51] sm:$0x1]
    %v3857 = vlaneseq
    %v3858 = vshrl.u32 %v3857, 7
    %v3859 = vsub.s32 0, %v3858
    %v3860 = vrot.slane %v3855, %v3859
    %v3866 = vunpack.c.l.b16 %v3851
    %v3867 = vunpack.c.l.b16 %v3852
    %v3868 = vunpack.c.l.b16 %v3853
    %v3869 = vunpack.c.l.b16 %v3854
    %v3870 = vpack.c.b16 %v3867, %v3866
    %v3871 = vpack.c.b16 %v3869, %v3868
    %v3875 = vsel %vm147, %v3709, 0
    %3877 = vmatprep.subr.bf16.mxu0 0
    %3878 = vmatpush1.bf16.msra.mxu0 %v3870
    %3879 = vmatprep.subr.bf16.mxu0 0
    %3880 = vmatpush1.bf16.msra.mxu0 %v3871
    %3881 = vmatprep.subr.bf16.mxu0 0
    %3882 = vmatpush1.bf16.msra.mxu0 0
    %3883 = vmatprep.subr.bf16.mxu0 0
    %3884 = vmatpush1.bf16.msra.mxu0 0
    %3885 = vmatprep.subr.bf16.mxu0 0
    %3886 = vmatpush1.bf16.msra.mxu0 0
    %3887 = vmatprep.subr.bf16.mxu0 0
    %3888 = vmatpush1.bf16.msra.mxu0 0
    %3889 = vmatprep.subr.bf16.mxu0 0
    %3890 = vmatpush1.bf16.msra.mxu0 0
    %3891 = vmatprep.subr.bf16.mxu0 0
    %3892 = vmatpush1.bf16.msra.mxu0 0
    %3893 = vmatprep.subr.bf16.mxu0 0
    %3894 = vmatpush1.bf16.msra.mxu0 0
    %3895 = vmatprep.subr.bf16.mxu0 0
    %3896 = vmatpush1.bf16.msra.mxu0 0
    %3897 = vmatprep.subr.bf16.mxu0 0
    %3898 = vmatpush1.bf16.msra.mxu0 0
    %3899 = vmatprep.subr.bf16.mxu0 0
    %3900 = vmatpush1.bf16.msra.mxu0 0
    %3901 = vmatprep.subr.bf16.mxu0 0
    %3902 = vmatpush1.bf16.msra.mxu0 0
    %3903 = vmatprep.subr.bf16.mxu0 0
    %3904 = vmatpush1.bf16.msra.mxu0 0
    %3905 = vmatprep.subr.bf16.mxu0 0
    %3906 = vmatpush1.bf16.msra.mxu0 0
    %3907 = vmatprep.subr.bf16.mxu0 0
    %3908 = vmatpush1.bf16.msra.mxu0 0
    %3909 = vmatprep.mubr.bf16.mxu0 0
    %3910 = vmatmul.mubr.bf16.gmra.mrb[0].mxu0 %v3875
    %v3911 = vpop.f32.mrb[0].mxu0
    %v3912 = vadd.f32 %v3860, %v3911
    %v3913 = vpop.f32.mrb[0].mxu0
    %v3914 = vpop.f32.mrb[0].mxu0
    %v3915 = vadd.f32 %v3860, %v3914
    %v3916 = vpop.f32.mrb[0].mxu0
    %3917 = vdwg.mxu0
    %v3918 = vmul.f32 %v3912, 0.5
    %v3919 = vmul.f32 %v3915, 0.5
    %v3920 = vmul.f32 %v3912, 0.044715
    %v3921 = vmul.f32 %v3915, 0.044715
    %v3922 = vmul.f32 %v3920, %v3912
    %v3923 = vmul.f32 %v3921, %v3915
    %v3924 = vmul.f32 %v3922, %v3912
    %v3925 = vmul.f32 %v3923, %v3915
    %v3926 = vadd.f32 %v3912, %v3924
    %v3927 = vadd.f32 %v3915, %v3925
    %v3928 = vmul.f32 %v3926, 0.7978846
    %v3929 = vmul.f32 %v3927, 0.7978846
    %v3930 = vtanh.pop %v3928
    %v3931 = vtanh.pop %v3929
    %v3932 = vadd.f32 %v3930, 1.0
    %v3933 = vadd.f32 %v3931, 1.0
    %v3934 = vmul.f32 %v3918, %v3932
    %v3935 = vmul.f32 %v3919, %v3933
    %v3936 = vld [vmem:[%s53] sm:$0x1]
    %v3937 = vld [vmem:[%s55] sm:$0x1]
    %v3938 = vsel %vm147, %v3934, 0.0
    %3939 = vadd.xlane.f32.xlu0 %v3938
    %v3940 = vpop.xlane.xlu0 %3939
    %v3941 = vsel %vm147, %v3935, 0.0
    %3942 = vadd.xlane.f32.xlu0 %v3941
    %v3943 = vpop.xlane.xlu0 %3942
    %v3944 = vmul.f32 %v3940, %v154
    %v3945 = vmul.f32 %v3943, %v154
    %v3946 = vsub.f32 %v3934, %v3944
    %v3947 = vsub.f32 %v3935, %v3945
    %v3948 = vmul.f32 %v3946, %v3946
    %v3949 = vmul.f32 %v3947, %v3947
    %v3950 = vsel %vm147, %v3948, 0.0
    %3951 = vadd.xlane.f32.xlu0 %v3950
    %v3952 = vpop.xlane.xlu0 %3951
    %v3953 = vsel %vm147, %v3949, 0.0
    %3954 = vadd.xlane.f32.xlu0 %v3953
    %v3955 = vpop.xlane.xlu0 %3954
    %v3956 = vmul.f32 %v3952, %v154
    %v3957 = vmul.f32 %v3955, %v154
    %v3958 = vadd.f32 %v3956, 1e-12
    %v3959 = vadd.f32 %v3957, 1e-12
    %v3960 = vrsqrt.pop %v3958
    %v3961 = vrsqrt.pop %v3959
    %v3962 = vmul.f32 %v3946, %v3960
    %v3963 = vmul.f32 %v3947, %v3961
    %v3965 = vlaneseq
    %v3966 = vshrl.u32 %v3965, 7
    %v3967 = vsub.s32 0, %v3966
    %v3968 = vrot.slane %v3936, %v3967
    %v3970 = vmul.f32 %v3962, %v3968
    %v3971 = vmul.f32 %v3963, %v3968
    %v3973 = vlaneseq
    %v3974 = vshrl.u32 %v3973, 7
    %v3975 = vsub.s32 0, %v3974
    %v3976 = vrot.slane %v3937, %v3975
    %v3978 = vadd.f32 %v3970, %v3976
    %v3979 = vadd.f32 %v3971, %v3976
    %v3980 = vpack.c.bf16 %v3979, %v3978
    %v3981 = vld [vmem:[%s57] sm:$0xf]
    %v3982 = vld [vmem:[%s57 + $0x4] sm:$0xf]
    %v3983 = vld [vmem:[%s57 + $0x8] sm:$0xf]
    %v3984 = vld [vmem:[%s57 + $0xc] sm:$0xf]
    %v3985 = vld [vmem:[%s57 + $0x10] sm:$0xf]
    %v3986 = vld [vmem:[%s57 + $0x14] sm:$0xf]
    %v3987 = vld [vmem:[%s57 + $0x18] sm:$0xf]
    %v3988 = vld [vmem:[%s57 + $0x1c] sm:$0xf]
    %v3989 = vld [vmem:[%s57 + $0x20] sm:$0xf]
    %v3990 = vld [vmem:[%s57 + $0x24] sm:$0xf]
    %v3991 = vld [vmem:[%s57 + $0x28] sm:$0xf]
    %v3992 = vld [vmem:[%s57 + $0x2c] sm:$0xf]
    %v3993 = vld [vmem:[%s57 + $0x30] sm:$0xf]
    %v3994 = vld [vmem:[%s57 + $0x34] sm:$0xf]
    %v3995 = vld [vmem:[%s57 + $0x38] sm:$0xf]
    %v3996 = vld [vmem:[%s57 + $0x3c] sm:$0xf]
    %v3997 = vld [vmem:[%s59] sm:$0x1]
    %v3999 = vlaneseq
    %v4000 = vshrl.u32 %v3999, 7
    %v4001 = vsub.s32 0, %v4000
    %v4002 = vrot.slane %v3997, %v4001
    %v4020 = vunpack.c.l.b16 %v3981
    %v4021 = vunpack.c.l.b16 %v3982
    %v4022 = vunpack.c.l.b16 %v3983
    %v4023 = vunpack.c.l.b16 %v3984
    %v4024 = vunpack.c.l.b16 %v3985
    %v4025 = vunpack.c.l.b16 %v3986
    %v4026 = vunpack.c.l.b16 %v3987
    %v4027 = vunpack.c.l.b16 %v3988
    %v4028 = vunpack.c.l.b16 %v3989
    %v4029 = vunpack.c.l.b16 %v3990
    %v4030 = vunpack.c.l.b16 %v3991
    %v4031 = vunpack.c.l.b16 %v3992
    %v4032 = vunpack.c.l.b16 %v3993
    %v4033 = vunpack.c.l.b16 %v3994
    %v4034 = vunpack.c.l.b16 %v3995
    %v4035 = vunpack.c.l.b16 %v3996
    %v4036 = vpack.c.b16 %v4021, %v4020
    %v4037 = vpack.c.b16 %v4023, %v4022
    %v4038 = vpack.c.b16 %v4025, %v4024
    %v4039 = vpack.c.b16 %v4027, %v4026
    %v4040 = vpack.c.b16 %v4029, %v4028
    %v4041 = vpack.c.b16 %v4031, %v4030
    %v4042 = vpack.c.b16 %v4033, %v4032
    %v4043 = vpack.c.b16 %v4035, %v4034
    %v4045 = vsel %vm147, %v3980, 0
    %v4048 = vsel %vm147, %v4036, 0
    %v4051 = vsel %vm147, %v4037, 0
    %v4054 = vsel %vm147, %v4038, 0
    %v4057 = vsel %vm147, %v4039, 0
    %v4060 = vsel %vm147, %v4040, 0
    %v4063 = vsel %vm147, %v4041, 0
    %v4066 = vsel %vm147, %v4042, 0
    %v4069 = vsel %vm147, %v4043, 0
    %4071 = vmatprep.subr.bf16.mxu0 0
    %4072 = vmatpush1.bf16.xpose.msra.mxu0 %v4048
    %4073 = vmatprep.subr.bf16.mxu0 0
    %4074 = vmatpush1.bf16.xpose.msra.mxu0 %v4051
    %4075 = vmatprep.subr.bf16.mxu0 0
    %4076 = vmatpush1.bf16.xpose.msra.mxu0 %v4054
    %4077 = vmatprep.subr.bf16.mxu0 0
    %4078 = vmatpush1.bf16.xpose.msra.mxu0 %v4057
    %4079 = vmatprep.subr.bf16.mxu0 0
    %4080 = vmatpush1.bf16.xpose.msra.mxu0 %v4060
    %4081 = vmatprep.subr.bf16.mxu0 0
    %4082 = vmatpush1.bf16.xpose.msra.mxu0 %v4063
    %4083 = vmatprep.subr.bf16.mxu0 0
    %4084 = vmatpush1.bf16.xpose.msra.mxu0 %v4066
    %4085 = vmatprep.subr.bf16.mxu0 0
    %4086 = vmatpush1.bf16.xpose.msra.mxu0 %v4069
    %4087 = vmatprep.subr.bf16.mxu0 0
    %4088 = vmatpush1.bf16.xpose.msra.mxu0 0
    %4089 = vmatprep.subr.bf16.mxu0 0
    %4090 = vmatpush1.bf16.xpose.msra.mxu0 0
    %4091 = vmatprep.subr.bf16.mxu0 0
    %4092 = vmatpush1.bf16.xpose.msra.mxu0 0
    %4093 = vmatprep.subr.bf16.mxu0 0
    %4094 = vmatpush1.bf16.xpose.msra.mxu0 0
    %4095 = vmatprep.subr.bf16.mxu0 0
    %4096 = vmatpush1.bf16.xpose.msra.mxu0 0
    %4097 = vmatprep.subr.bf16.mxu0 0
    %4098 = vmatpush1.bf16.xpose.msra.mxu0 0
    %4099 = vmatprep.subr.bf16.mxu0 0
    %4100 = vmatpush1.bf16.xpose.msra.mxu0 0
    %4101 = vmatprep.subr.bf16.mxu0 0
    %4102 = vmatpush1.bf16.xpose.msra.mxu0 0
    %4103 = vmatprep.mubr.bf16.mxu0 0
    %4104 = vmatmul.mubr.bf16.gmra.mrb[0].mxu0 %v4045
    %v4105 = vpop.f32.mrb[0].mxu0
    %v4106 = vadd.f32 %v4002, %v4105
    %v4107 = vpop.f32.mrb[0].mxu0
    %v4108 = vpop.f32.mrb[0].mxu0
    %v4109 = vadd.f32 %v4002, %v4108
    %v4110 = vpop.f32.mrb[0].mxu0
    %4111 = vdwg.mxu0
    %4112 = vst [vmem:[#allocation2] sm:$0xff] %v4106
    %4113 = vst [vmem:[#allocation2 + $0x8] sm:$0xff] %v4109
    %v4114 = vld [vmem:[%s5] sm:$0xff]
    %v4115 = vld [vmem:[%s5 + $0x8] sm:$0xff]
    %4116 = vmax.xlane.f32.xlu0 %v4106
    %v4117 = vpop.xlane.xlu0 %4116
    %4118 = vmax.xlane.f32.xlu0 %v4109
    %v4119 = vpop.xlane.xlu0 %4118
    %v4120 = vsub.f32 %v4106, %v4117
    %v4121 = vsub.f32 %v4109, %v4119
    %v4122 = vmul.f32 %v4120, 1.442695
    %v4123 = vpow.pop %v4122
    %v4124 = vmul.f32 %v4121, 1.442695
    %v4125 = vpow.pop %v4124
    %4126 = vadd.xlane.f32.xlu0 %v4123
    %v4127 = vpop.xlane.xlu0 %4126
    %4128 = vadd.xlane.f32.xlu0 %v4125
    %v4129 = vpop.xlane.xlu0 %4128
    %v4130 = vlog2.pop %v4127
    %v4131 = vmul.f32 %v4130, 0.6931472
    %v4132 = vlog2.pop %v4129
    %v4133 = vmul.f32 %v4132, 0.6931472
    %v4134 = vadd.f32 %v4131, %v4117
    %v4135 = vadd.f32 %v4133, %v4119
    %v4136 = vlaneseq
    %v4137 = vand.u32 %v4136, 127
    %4138 = vset.pattern.permute.xlu0 0
    %4139 = vperm.xlu0 %4138, %v4114
    %v4140 = vpop.permute.xlu0 %4139
    %4141 = vset.pattern.permute.xlu0 0
    %4142 = vperm.xlu0 %4141, %v4115
    %v4143 = vpop.permute.xlu0 %4142
    %vm4144 = vcmp.eq.s32.totalorder %v4137, %v4140
    %vm4145 = vcmp.eq.s32.totalorder %v4137, %v4143
    %v4146 = vsel %vm4144, %v4106, 0.0
    %v4147 = vsel %vm4145, %v4109, 0.0
    %4148 = vadd.xlane.f32.xlu0 %v4146
    %v4149 = vpop.xlane.xlu0 %4148
    %4150 = vadd.xlane.f32.xlu0 %v4147
    %v4151 = vpop.xlane.xlu0 %4150
    %vm4152 = vcmp.ne.s32.totalorder %v4114, 4294967295
    %vm4153 = vcmp.ne.s32.totalorder %v4115, 4294967295
    %v4154 = vsub.f32 %v4134, %v4149
    %v4155 = vsub.f32 %v4135, %v4151
    %v4156 = vsel %vm4152, %v4154, 0.0
    %v4157 = vsel %vm4153, %v4155, 0.0
    %vm4158 = vcmask 7168
    %v4159 = vsel %vm4158, %v4156, 0.0
    %v4160 = vsel %vm4158, %v4157, 0.0
    %v4161 = vadd.f32 %v4159, %v4160
    %4162 = vadd.xlane.f32.xlu0 %v4161
    %v4163 = vpop.xlane.xlu0 %4162
    %v4164 = vrot.slane %v4163, 4
    %v4165 = vadd.f32 %v4163, %v4164
    %v4166 = vrot.slane %v4165, 2
    %v4167 = vadd.f32 %v4165, %v4166
    %v4168 = vrot.slane %v4167, 1
    %v4169 = vadd.f32 %v4167, %v4168
    %s4170 = vtos %v4169
    %v4171 = vsel %vm4152, 1, 0
    %v4172 = vsel %vm4153, 1, 0
    %v4173 = vcvt.s32.f32 %v4171
    %v4174 = vcvt.s32.f32 %v4172
    %v4175 = vsel %vm4158, %v4173, 0.0
    %v4176 = vsel %vm4158, %v4174, 0.0
    %v4177 = vadd.f32 %v4175, %v4176
    %4178 = vadd.xlane.f32.xlu0 %v4177
    %v4179 = vpop.xlane.xlu0 %4178
    %v4180 = vrot.slane %v4179, 4
    %v4181 = vadd.f32 %v4179, %v4180
    %v4182 = vrot.slane %v4181, 2
    %v4183 = vadd.f32 %v4181, %v4182
    %v4184 = vrot.slane %v4183, 1
    %v4185 = vadd.f32 %v4183, %v4184
    %s4186 = vtos %v4185
    %v4187 = vld [vmem:[%s7] sm:$0x3]
    %vm4188 = vcmask 1041408
    %v4189 = vsel %vm4188, %v3845, -inf
    %4190 = vmax.xlane.f32.xlu0 %v4189
    %v4191 = vpop.xlane.xlu0 %4190
    %v4192 = vsub.f32 %v3845, %v4191
    %v4193 = vmul.f32 %v4192, 1.442695
    %v4194 = vpow.pop %v4193
    %v4195 = vsel %vm4188, %v4194, 0.0
    %4196 = vadd.xlane.f32.xlu0 %v4195
    %v4197 = vpop.xlane.xlu0 %4196
    %v4198 = vlog2.pop %v4197
    %v4199 = vmul.f32 %v4198, 0.6931472
    %v4200 = vadd.f32 %v4199, %v4191
    %4201 = vset.pattern.permute.xlu0 0
    %4202 = vperm.xlu0 %4201, %v4187
    %v4203 = vpop.permute.xlu0 %4202
    %vm4204 = vcmp.eq.s32.totalorder %v4137, %v4203
    %v4205 = vsel %vm4204, %v3845, 0.0
    %v4206 = vsel %vm4188, %v4205, 0.0
    %4207 = vadd.xlane.f32.xlu0 %v4206
    %v4208 = vpop.xlane.xlu0 %4207
    %vm4209 = vcmp.ne.s32.totalorder %v4187, 4294967295
    %v4210 = vsub.f32 %v4200, %v4208
    %v4211 = vsel %vm4209, %v4210, 0.0
    %vm4212 = vcmask 1024
    %v4213 = vsel %vm4212, %v4211, 0.0
    %4214 = vadd.xlane.f32.xlu0 %v4213
    %v4215 = vpop.xlane.xlu0 %4214
    %v4216 = vrot.slane %v4215, 4
    %v4217 = vadd.f32 %v4215, %v4216
    %v4218 = vrot.slane %v4217, 2
    %v4219 = vadd.f32 %v4217, %v4218
    %v4220 = vrot.slane %v4219, 1
    %v4221 = vadd.f32 %v4219, %v4220
    %s4222 = vtos %v4221
    %v4223 = vsel %vm4209, 1, 0
    %v4224 = vcvt.s32.f32 %v4223
    %v4225 = vsel %vm4212, %v4224, 0.0
    %4226 = vadd.xlane.f32.xlu0 %v4225
    %v4227 = vpop.xlane.xlu0 %4226
    %v4228 = vrot.slane %v4227, 4
    %v4229 = vadd.f32 %v4227, %v4228
    %v4230 = vrot.slane %v4229, 2
    %v4231 = vadd.f32 %v4229, %v4230
    %v4232 = vrot.slane %v4231, 1
    %v4233 = vadd.f32 %v4231, %v4232
    %s4234 = vtos %v4233
    %s4235 = scalar_lea.smem [#allocation7], 0
    %4236 = sst [smem:[%s4235]] %s4170
    %s4237 = scalar_lea.smem [#allocation7], 1
    %4238 = sst [smem:[%s4237]] %s4186
    %s4239 = scalar_lea.smem [#allocation7], 2
    %4240 = sst [smem:[%s4239]] %s4222
    %s4241 = scalar_lea.smem [#allocation7], 3
    %4242 = sst [smem:[%s4241]] %s4234
    // Predicated region
    $region130: #{tpu_custom_call.1} parent=1 // pred_check
      _
    $region131: #{tpu_custom_call.1} parent=1 // pred_check_branch
      %4244 = sbr.rel (0) target = $region133
    $region132: #{tpu_custom_call.1} parent=1 // pred_region
      %s4246 = ssub.s32 256, 256
      %4247 = vsyncadd [#allocation3], %s4246
      %s4248 = sshll.u32 [#allocation2], 4
      %s4249 = int_to_ptr.vmem [resolvable:$true] %s4248
      %4254 = dma.vmem_to_hbm [thread:$0]  %s4249, 256, %s65, [#allocation3], 128, 128, 8
    $region133: #{tpu_custom_call.1} parent=1 // pred_fallthru
      _
    // Predicated region
    $region134: #{tpu_custom_call.1} parent=1 // pred_check
      _
    $region135: #{tpu_custom_call.1} parent=1 // pred_check_branch
      %4256 = sbr.rel (0) target = $region137
    $region136: #{tpu_custom_call.1} parent=1 // pred_region
      %s4258 = ssub.s32 32, 32
      %4259 = vsyncadd [#allocation6], %s4258
      %s4261 = sshll.u32 [#allocation5], 4
      %s4262 = int_to_ptr.vmem [resolvable:$true] %s4261
      %4264 = dma.vmem_to_hbm [thread:$0]  %s4262, 32, %s67, [#allocation6]
    $region137: #{tpu_custom_call.1} parent=1 // pred_fallthru
      _
    // Predicated region
    $region138: #{tpu_custom_call.1} parent=1 // pred_check
      _
    $region139: #{tpu_custom_call.1} parent=1 // pred_check_branch
      %4266 = sbr.rel (0) target = $region141
    $region140: #{tpu_custom_call.1} parent=1 // pred_region
      %s4268 = ssub.s32 16, 16
      %4269 = vsyncadd [#allocation4], %s4268
      %4272 = dma.smem_to_hbm [#allocation7], 16, %s69, [#allocation4]
    $region141: #{tpu_custom_call.1} parent=1 // pred_fallthru
      _
    // Predicated region
    $region142: #{tpu_custom_call.1} parent=1 // pred_check
      _
    $region143: #{tpu_custom_call.1} parent=1 // pred_check_branch
      %4274 = sbr.rel (0) target = $region145
    $region144: #{tpu_custom_call.1} parent=1 // pred_region
      %4275 = dma.done [#allocation3], 256
    $region145: #{tpu_custom_call.1} parent=1 // pred_fallthru
      _
    // Predicated region
    $region146: #{tpu_custom_call.1} parent=1 // pred_check
      _
    $region147: #{tpu_custom_call.1} parent=1 // pred_check_branch
      %4277 = sbr.rel (0) target = $region149
    $region148: #{tpu_custom_call.1} parent=1 // pred_region
      %4278 = dma.done [#allocation6], 32
    $region149: #{tpu_custom_call.1} parent=1 // pred_fallthru
      _
    // Predicated region
    $region150: #{tpu_custom_call.1} parent=1 // pred_check
      _
    $region151: #{tpu_custom_call.1} parent=1 // pred_check_branch
      %4280 = sbr.rel (0) target = $region153
    $region152: #{tpu_custom_call.1} parent=1 // pred_region
      %4281 = dma.done [#allocation4], 16
    $region153: #{tpu_custom_call.1} parent=1 // pred_fallthru
      _
    %4282 = sfence
    %4283 = vsyncpa [#allocation3], 1
    %4284 = vsyncpa [#allocation6], 1
    %4285 = vsyncpa [#allocation4], 1

</llo_original>
